<compile_context>
chip_gen: v7x
topology: tpu7x:2x2x1
jax: 0.10.0
libtpu: 0.0.40
codegen_flags: <defaults>
</compile_context>

<pallas_src>
import functools

import jax
import jax.numpy as jnp
from jax.experimental import pallas as pl
from jax.experimental.pallas import tpu as pltpu

# -----------------------------------------------------------------------------
# Config (small shapes consistent with the module's forward structure)
# -----------------------------------------------------------------------------
BATCH = 2
IN_CH = 3
IN_HW = 16            # analogue of the 256x256 face input
N_STYLES = 4          # analogue of encoder.style_count (18 for 1024px StyleGAN)
STYLE_DIM = 128       # lane-dense analogue of 512-dim W latents
C = 128               # internal channel width (lane-dense analogue of 512 channels)
DEC_BASE = 4          # constant input spatial size (4x4, as in StyleGAN2)
N_LAT = N_STYLES * STYLE_DIM
LRELU = 0.2


# -----------------------------------------------------------------------------
# Constant pooling / upsampling operators (applied as MXU matmuls in-kernel)
# -----------------------------------------------------------------------------
def _pool2x2_matrix(H, W):
    """(Ho*Wo, H*W) matrix: row-flattened 2x2 average pooling."""
    Ho, Wo = H // 2, W // 2
    r = jnp.arange(Ho * Wo)
    k = jnp.arange(H * W)
    sel = (((k[None, :] // W) // 2) == (r[:, None] // Wo)) & \
          (((k[None, :] % W) // 2) == (r[:, None] % Wo))
    return sel.astype(jnp.float32) * 0.25


def _upsample2x_matrix(H, W):
    """(4*H*W, H*W) matrix: row-flattened nearest-neighbor 2x upsample."""
    Wo = 2 * W
    r = jnp.arange(4 * H * W)
    src = (r // Wo // 2) * W + (r % Wo) // 2
    k = jnp.arange(H * W)
    return (k[None, :] == src[:, None]).astype(jnp.float32)


# -----------------------------------------------------------------------------
# Shared in-kernel helper: 3x3 conv as 9 shifted bf16 MXU dots
# -----------------------------------------------------------------------------
def _conv3x3_taps(read_tap, w_tap, H, W):
    """read_tap(di, dj) -> (H*W, C) bf16 tile; w_tap(t) -> (C, C) bf16 weights."""
    acc = jnp.zeros((H * W, C), jnp.float32)
    for t in range(9):
        di, dj = divmod(t, 3)
        acc = acc + jnp.dot(read_tap(di, dj), w_tap(t),
                            preferred_element_type=jnp.float32)
    return acc


# -----------------------------------------------------------------------------
# Fused encoder kernel: conv1+PReLU+pool -> conv2+PReLU -> GAP -> style head
#                       -> + latent_avg   (per batch element)
# -----------------------------------------------------------------------------
def _encoder_kernel(x_ref, w1_ref, b1_ref, p1_ref, w2_ref, b2_ref, p2_ref,
                    pool_ref, sw_ref, sb_ref, la_ref, codes_ref, scr):
    H = W = IN_HW
    # conv1 (3x3, pad 1) + bias + PReLU; input already carries its 1-px halo.
    acc = _conv3x3_taps(
        lambda di, dj: x_ref[0, di:di + H, dj:dj + W, :]
        .reshape(H * W, C).astype(jnp.bfloat16),
        lambda t: w1_ref[t, :, :], H, W)
    acc = acc + b1_ref[...]
    act = jnp.where(acc >= 0.0, acc, p1_ref[...] * acc)

    # 2x2 average pool fused as a constant-matrix MXU dot.
    pooled = jnp.dot(pool_ref[...], act, preferred_element_type=jnp.float32)
    Hp, Wp = H // 2, W // 2

    # conv2 + bias + PReLU on the pooled map, via zero-padded VMEM scratch.
    scr[...] = jnp.zeros_like(scr)
    scr[1:Hp + 1, 1:Wp + 1, :] = pooled.reshape(Hp, Wp, C)
    acc2 = _conv3x3_taps(
        lambda di, dj: scr[di:di + Hp, dj:dj + Wp, :]
        .reshape(Hp * Wp, C).astype(jnp.bfloat16),
        lambda t: w2_ref[t, :, :], Hp, Wp)
    acc2 = acc2 + b2_ref[...]
    act2 = jnp.where(acc2 >= 0.0, acc2, p2_ref[...] * acc2)

    # Global average pool (identical to avgpool2x2 followed by GAP),
    # style head matmul, and latent_avg add -- all fused.
    feat = jnp.mean(act2, axis=0, keepdims=True)                    # (1, C)
    styles = jnp.dot(feat.astype(jnp.bfloat16), sw_ref[...],
                     preferred_element_type=jnp.float32)            # (1, N_LAT)
    codes_ref[...] = (styles + sb_ref[...] + la_ref[...]).reshape(1, 1, N_LAT)


def encode(params, x, latent_add):
    B = x.shape[0]
    xh = jnp.transpose(x.astype(jnp.float32), (0, 2, 3, 1))         # NCHW -> NHWC
    # 1-px spatial halo + zero-pad channels to the 128-lane width (layout only).
    xp = jnp.pad(xh, ((0, 0), (1, 1), (1, 1), (0, C - IN_CH)))

    def bc(shape):
        zeros = (0,) * len(shape)
        return pl.BlockSpec(shape, lambda b: zeros)

    return pl.pallas_call(
        _encoder_kernel,
        out_shape=jax.ShapeDtypeStruct((B, 1, N_LAT), jnp.float32),
        grid=(B,),
        in_specs=[
            pl.BlockSpec((1, IN_HW + 2, IN_HW + 2, C), lambda b: (b, 0, 0, 0)),
            bc((9, C, C)), bc((1, C)), bc((1, C)),
            bc((9, C, C)), bc((1, C)), bc((1, C)),
            bc((IN_HW * IN_HW // 4, IN_HW * IN_HW)),
            bc((C, N_LAT)), bc((1, N_LAT)), bc((1, N_LAT)),
        ],
        out_specs=pl.BlockSpec((1, 1, N_LAT), lambda b: (b, 0, 0)),
        scratch_shapes=[pltpu.VMEM((16, 16, C), jnp.float32)],
        compiler_params=pltpu.CompilerParams(dimension_semantics=("parallel",)),
    )(xp, params["enc_w1"], params["enc_b1"], params["enc_p1"],
      params["enc_w2"], params["enc_b2"], params["enc_p2"],
      params["pool16"], params["style_w"], params["style_b"], latent_add)


# -----------------------------------------------------------------------------
# Fused decoder kernel: 3x (modulate -> 3x3 conv -> lrelu -> upsample) -> tRGB
#                       -> face_pool   (per batch element, feat stays in VMEM)
# -----------------------------------------------------------------------------
def _decoder_kernel(codes_ref, const_ref, A_ref, Ab_ref, W_ref, bc_ref,
                    rgbw_ref, rgbb_ref, up4_ref, up8_ref, pool_ref,
                    out_ref, scr4, scr8, scr16, *, resize):
    codes = codes_ref[0]                                   # (1, N_LAT) f32
    Ab = Ab_ref[...]                                       # (N_STYLES, C)
    bconv = bc_ref[...]                                    # (3, C)

    def style(li):
        c = codes[:, li * STYLE_DIM:(li + 1) * STYLE_DIM].astype(jnp.bfloat16)
        s = jnp.dot(c, A_ref[li, :, :], preferred_element_type=jnp.float32)
        return s + Ab[li:li + 1, :]                        # (1, C)

    def mod_conv_lrelu(feat, li, Hc, scr):
        feat = feat * style(li)                            # modulation
        scr[...] = jnp.zeros_like(scr)
        scr[1:Hc + 1, 1:Hc + 1, :] = feat.reshape(Hc, Hc, C)
        acc = _conv3x3_taps(
            lambda di, dj: scr[di:di + Hc, dj:dj + Hc, :]
            .reshape(Hc * Hc, C).astype(jnp.bfloat16),
            lambda t: W_ref[li, t, :, :], Hc, Hc)
        acc = acc + bconv[li:li + 1, :]
        return jnp.where(acc >= 0.0, acc, LRELU * acc)

    feat = const_ref[...]                                               # 4x4 const input
    feat = mod_conv_lrelu(feat, 0, 4, scr4)
    feat = jnp.dot(up4_ref[...], feat, preferred_element_type=jnp.float32)   # -> 8x8
    feat = mod_conv_lrelu(feat, 1, 8, scr8)
    feat = jnp.dot(up8_ref[...], feat, preferred_element_type=jnp.float32)   # -> 16x16
    feat = mod_conv_lrelu(feat, 2, 16, scr16)

    # tRGB (1x1 conv); output slab kept 128-wide (lane-dense), real RGB = first 3 cols.
    feat = feat * style(3)
    rgb = jnp.dot(feat.astype(jnp.bfloat16), rgbw_ref[...],
                  preferred_element_type=jnp.float32) + rgbb_ref[...]
    if resize:
        # face_pool (AdaptiveAvgPool2d == even 2x2 avg pool at these shapes)
        rgb = jnp.dot(pool_ref[...], rgb, preferred_element_type=jnp.float32)
    out_ref[...] = rgb.reshape(1, rgb.shape[0], C)


def decode(params, codes3, resize=True):
    B = codes3.shape[0]
    hw_out = (IN_HW // 2) ** 2 if resize else IN_HW * IN_HW

    def bc(shape):
        zeros = (0,) * len(shape)
        return pl.BlockSpec(shape, lambda b: zeros)

    return pl.pallas_call(
        functools.partial(_decoder_kernel, resize=resize),
        out_shape=jax.ShapeDtypeStruct((B, hw_out, C), jnp.float32),
        grid=(B,),
        in_specs=[
            pl.BlockSpec((1, 1, N_LAT), lambda b: (b, 0, 0)),
            bc((DEC_BASE * DEC_BASE, C)),
            bc((N_STYLES, C, C)), bc((N_STYLES, C)),
            bc((3, 9, C, C)), bc((3, C)),
            bc((C, C)), bc((1, C)),
            bc((4 * DEC_BASE * DEC_BASE, DEC_BASE * DEC_BASE)),
            bc((4 * 64, 64)),
            bc((IN_HW * IN_HW // 4, IN_HW * IN_HW)),
        ],
        out_specs=pl.BlockSpec((1, hw_out, C), lambda b: (b, 0, 0)),
        scratch_shapes=[pltpu.VMEM((8, 8, C), jnp.float32),
                        pltpu.VMEM((16, 16, C), jnp.float32),
                        pltpu.VMEM((24, 24, C), jnp.float32)],
        compiler_params=pltpu.CompilerParams(dimension_semantics=("parallel",)),
    )(codes3, params["const"], params["dec_A"], params["dec_Ab"],
      params["dec_w"], params["dec_b"], params["rgb_w"], params["rgb_b"],
      params["up4"], params["up8"], params["pool16"])


# -----------------------------------------------------------------------------
# Deterministic parameter init (synthetic; no .pth loading)
# -----------------------------------------------------------------------------
def init_params(key):
    ks = iter(jax.random.split(key, 16))
    nrm = lambda shape, s=0.05: s * jax.random.normal(next(ks), shape, jnp.float32)
    p = {}
    # encoder (compact stand-in for GradualStyleEncoder / IR-SE-50)
    p["enc_w1"] = nrm((9, C, C)).astype(jnp.bfloat16)
    p["enc_b1"] = jnp.zeros((1, C), jnp.float32)
    p["enc_p1"] = jnp.full((1, C), 0.25, jnp.float32)        # PReLU slopes
    p["enc_w2"] = nrm((9, C, C)).astype(jnp.bfloat16)
    p["enc_b2"] = jnp.zeros((1, C), jnp.float32)
    p["enc_p2"] = jnp.full((1, C), 0.25, jnp.float32)
    p["style_w"] = nrm((C, N_LAT)).astype(jnp.bfloat16)
    p["style_b"] = jnp.zeros((1, N_LAT), jnp.float32)
    # latent average (pSp.latent_avg, repeated to style_count rows -> flat slab)
    p["latent_avg"] = nrm((1, N_LAT), 0.05)
    # decoder (simplified StyleGAN2 synthesis)
    p["const"] = nrm((DEC_BASE * DEC_BASE, C), 1.0)
    p["dec_A"] = nrm((N_STYLES, C, C)).astype(jnp.bfloat16)
    p["dec_Ab"] = jnp.ones((N_STYLES, C), jnp.float32)       # mod bias init = 1
    p["dec_w"] = nrm((3, 9, C, C)).astype(jnp.bfloat16)
    p["dec_b"] = jnp.zeros((3, C), jnp.float32)
    p["rgb_w"] = nrm((C, C)).astype(jnp.bfloat16)            # only first 3 out-cols used
    p["rgb_b"] = jnp.zeros((1, C), jnp.float32)
    # constant pool / upsample operators consumed as in-kernel MXU dots
    p["pool16"] = _pool2x2_matrix(IN_HW, IN_HW)
    p["up4"] = _upsample2x_matrix(DEC_BASE, DEC_BASE)
    p["up8"] = _upsample2x_matrix(2 * DEC_BASE, 2 * DEC_BASE)
    return p


# -----------------------------------------------------------------------------
# pSp forward
# -----------------------------------------------------------------------------
def psp_forward(params, x, resize=True, latent_mask=None, input_code=False,
                inject_latent=None, return_latents=False, alpha=None,
                start_from_latent_avg=True):
    if input_code:
        codes = x.astype(jnp.float32)                        # (B, n_styles, style_dim)
    else:
        la = params["latent_avg"] if start_from_latent_avg \
            else jnp.zeros_like(params["latent_avg"])
        enc_out = encode(params, x, la)                      # latent_avg add fused in-kernel
        codes = enc_out.reshape(x.shape[0], N_STYLES, STYLE_DIM)

    if latent_mask is not None:                              # rare host-side boundary logic
        for i in latent_mask:
            if inject_latent is not None:
                if alpha is not None:
                    codes = codes.at[:, i].set(
                        alpha * inject_latent[:, i] + (1.0 - alpha) * codes[:, i])
                else:
                    codes = codes.at[:, i].set(inject_latent[:, i])
            else:
                codes = codes.at[:, i].set(0.0)

    out = decode(params, codes.reshape(codes.shape[0], 1, N_LAT), resize=resize)
    hw = IN_HW // 2 if resize else IN_HW
    images = out.reshape(out.shape[0], hw, hw, C)[..., :IN_CH]   # drop lane padding
    images = jnp.transpose(images, (0, 3, 1, 2))                 # NHWC -> NCHW

    if return_latents:
        return images, codes
    return images


# -----------------------------------------------------------------------------
# Main
# -----------------------------------------------------------------------------
if __name__ == "__main__":
    key = jax.random.PRNGKey(0)
    x = jax.random.normal(key, (BATCH, IN_CH, IN_HW, IN_HW), jnp.float32)
    params = init_params(jax.random.PRNGKey(1))

    images, latents = psp_forward(params, x, resize=True, return_latents=True)
    images = jax.block_until_ready(images)
    latents = jax.block_until_ready(latents)

    assert images.shape == (BATCH, 3, IN_HW // 2, IN_HW // 2), images.shape
    assert latents.shape == (BATCH, N_STYLES, STYLE_DIM), latents.shape
    assert bool(jnp.all(jnp.isfinite(images))) and bool(jnp.all(jnp.isfinite(latents)))
    print("KERNEL_OK")
</pallas_src>

<mosaic_0001>
module attributes {stable_mosaic.version = 11 : i64} {
  func.func @_encoder_kernel(%arg0: i32, %arg1: memref<1x18x18x128xf32, #tpu.memory_space<vmem>>, %arg2: memref<9x128x128xbf16, #tpu.memory_space<vmem>>, %arg3: memref<1x128xf32, #tpu.memory_space<vmem>>, %arg4: memref<1x128xf32, #tpu.memory_space<vmem>>, %arg5: memref<9x128x128xbf16, #tpu.memory_space<vmem>>, %arg6: memref<1x128xf32, #tpu.memory_space<vmem>>, %arg7: memref<1x128xf32, #tpu.memory_space<vmem>>, %arg8: memref<64x256xf32, #tpu.memory_space<vmem>>, %arg9: memref<128x512xbf16, #tpu.memory_space<vmem>>, %arg10: memref<1x512xf32, #tpu.memory_space<vmem>>, %arg11: memref<1x512xf32, #tpu.memory_space<vmem>>, %arg12: memref<1x1x512xf32, #tpu.memory_space<vmem>>, %arg13: memref<16x16x128xf32, #tpu.memory_space<vmem>>) attributes {dimension_semantics = [#tpu.dimension_semantics<parallel>], iteration_bounds = array<i64: 2>, scalar_prefetch = 0 : i64, scratch_operands = 1 : i64, tpu.core_type = #tpu.core_type<tc>, window_params = [{transform_indices = @transform_0, window_bounds = array<i64: 1, 18, 18, 128>}, {pipeline_mode = #tpu.pipeline_mode<synchronous>, transform_indices = @transform_1, window_bounds = array<i64: 9, 128, 128>}, {pipeline_mode = #tpu.pipeline_mode<synchronous>, transform_indices = @transform_2, window_bounds = array<i64: 1, 128>}, {pipeline_mode = #tpu.pipeline_mode<synchronous>, transform_indices = @transform_3, window_bounds = array<i64: 1, 128>}, {pipeline_mode = #tpu.pipeline_mode<synchronous>, transform_indices = @transform_4, window_bounds = array<i64: 9, 128, 128>}, {pipeline_mode = #tpu.pipeline_mode<synchronous>, transform_indices = @transform_5, window_bounds = array<i64: 1, 128>}, {pipeline_mode = #tpu.pipeline_mode<synchronous>, transform_indices = @transform_6, window_bounds = array<i64: 1, 128>}, {pipeline_mode = #tpu.pipeline_mode<synchronous>, transform_indices = @transform_7, window_bounds = array<i64: 64, 256>}, {pipeline_mode = #tpu.pipeline_mode<synchronous>, transform_indices = @transform_8, window_bounds = array<i64: 128, 512>}, {pipeline_mode = #tpu.pipeline_mode<synchronous>, transform_indices = @transform_9, window_bounds = array<i64: 1, 512>}, {pipeline_mode = #tpu.pipeline_mode<synchronous>, transform_indices = @transform_10, window_bounds = array<i64: 1, 512>}, {transform_indices = @transform_11, window_bounds = array<i64: 1, 1, 512>}]} {
    %cst = arith.constant 0.000000e+00 : f32
    %0 = vector.broadcast %cst : f32 to vector<256x128xf32>
    %c0 = arith.constant 0 : index
    %c0_0 = arith.constant 0 : index
    %c0_1 = arith.constant 0 : index
    %c0_2 = arith.constant 0 : index
    %1 = vector.load %arg1[%c0, %c0_0, %c0_1, %c0_2] : memref<1x18x18x128xf32, #tpu.memory_space<vmem>>, vector<1x16x16x128xf32>
    %2 = vector.shape_cast %1 : vector<1x16x16x128xf32> to vector<16x16x128xf32>
    %3 = vector.shape_cast %2 : vector<16x16x128xf32> to vector<256x128xf32>
    %4 = arith.truncf %3 : vector<256x128xf32> to vector<256x128xbf16>
    %c0_3 = arith.constant 0 : index
    %c0_4 = arith.constant 0 : index
    %c0_5 = arith.constant 0 : index
    %5 = vector.load %arg2[%c0_3, %c0_4, %c0_5] : memref<9x128x128xbf16, #tpu.memory_space<vmem>>, vector<1x128x128xbf16>
    %6 = vector.shape_cast %5 : vector<1x128x128xbf16> to vector<128x128xbf16>
    %cst_6 = arith.constant dense<0.000000e+00> : vector<256x128xf32>
    %7 = tpu.matmul %4, %6, %cst_6 {dimension_numbers = #tpu.dot_dimension_numbers<[1], [0], [0], [1], [0, 0, 1, 1], [], []>} : vector<256x128xbf16>, vector<128x128xbf16>, vector<256x128xf32> -> vector<256x128xf32>
    %8 = arith.addf %0, %7 : vector<256x128xf32>
    %c0_7 = arith.constant 0 : index
    %c0_8 = arith.constant 0 : index
    %c1 = arith.constant 1 : index
    %c0_9 = arith.constant 0 : index
    %9 = vector.load %arg1[%c0_7, %c0_8, %c1, %c0_9] : memref<1x18x18x128xf32, #tpu.memory_space<vmem>>, vector<1x16x16x128xf32>
    %10 = vector.shape_cast %9 : vector<1x16x16x128xf32> to vector<16x16x128xf32>
    %11 = vector.shape_cast %10 : vector<16x16x128xf32> to vector<256x128xf32>
    %12 = arith.truncf %11 : vector<256x128xf32> to vector<256x128xbf16>
    %c1_10 = arith.constant 1 : index
    %c0_11 = arith.constant 0 : index
    %c0_12 = arith.constant 0 : index
    %13 = vector.load %arg2[%c1_10, %c0_11, %c0_12] : memref<9x128x128xbf16, #tpu.memory_space<vmem>>, vector<1x128x128xbf16>
    %14 = vector.shape_cast %13 : vector<1x128x128xbf16> to vector<128x128xbf16>
    %cst_13 = arith.constant dense<0.000000e+00> : vector<256x128xf32>
    %15 = tpu.matmul %12, %14, %cst_13 {dimension_numbers = #tpu.dot_dimension_numbers<[1], [0], [0], [1], [0, 0, 1, 1], [], []>} : vector<256x128xbf16>, vector<128x128xbf16>, vector<256x128xf32> -> vector<256x128xf32>
    %16 = arith.addf %8, %15 : vector<256x128xf32>
    %c0_14 = arith.constant 0 : index
    %c0_15 = arith.constant 0 : index
    %c2 = arith.constant 2 : index
    %c0_16 = arith.constant 0 : index
    %17 = vector.load %arg1[%c0_14, %c0_15, %c2, %c0_16] : memref<1x18x18x128xf32, #tpu.memory_space<vmem>>, vector<1x16x16x128xf32>
    %18 = vector.shape_cast %17 : vector<1x16x16x128xf32> to vector<16x16x128xf32>
    %19 = vector.shape_cast %18 : vector<16x16x128xf32> to vector<256x128xf32>
    %20 = arith.truncf %19 : vector<256x128xf32> to vector<256x128xbf16>
    %c2_17 = arith.constant 2 : index
    %c0_18 = arith.constant 0 : index
    %c0_19 = arith.constant 0 : index
    %21 = vector.load %arg2[%c2_17, %c0_18, %c0_19] : memref<9x128x128xbf16, #tpu.memory_space<vmem>>, vector<1x128x128xbf16>
    %22 = vector.shape_cast %21 : vector<1x128x128xbf16> to vector<128x128xbf16>
    %cst_20 = arith.constant dense<0.000000e+00> : vector<256x128xf32>
    %23 = tpu.matmul %20, %22, %cst_20 {dimension_numbers = #tpu.dot_dimension_numbers<[1], [0], [0], [1], [0, 0, 1, 1], [], []>} : vector<256x128xbf16>, vector<128x128xbf16>, vector<256x128xf32> -> vector<256x128xf32>
    %24 = arith.addf %16, %23 : vector<256x128xf32>
    %c0_21 = arith.constant 0 : index
    %c1_22 = arith.constant 1 : index
    %c0_23 = arith.constant 0 : index
    %c0_24 = arith.constant 0 : index
    %25 = vector.load %arg1[%c0_21, %c1_22, %c0_23, %c0_24] : memref<1x18x18x128xf32, #tpu.memory_space<vmem>>, vector<1x16x16x128xf32>
    %26 = vector.shape_cast %25 : vector<1x16x16x128xf32> to vector<16x16x128xf32>
    %27 = vector.shape_cast %26 : vector<16x16x128xf32> to vector<256x128xf32>
    %28 = arith.truncf %27 : vector<256x128xf32> to vector<256x128xbf16>
    %c3 = arith.constant 3 : index
    %c0_25 = arith.constant 0 : index
    %c0_26 = arith.constant 0 : index
    %29 = vector.load %arg2[%c3, %c0_25, %c0_26] : memref<9x128x128xbf16, #tpu.memory_space<vmem>>, vector<1x128x128xbf16>
    %30 = vector.shape_cast %29 : vector<1x128x128xbf16> to vector<128x128xbf16>
    %cst_27 = arith.constant dense<0.000000e+00> : vector<256x128xf32>
    %31 = tpu.matmul %28, %30, %cst_27 {dimension_numbers = #tpu.dot_dimension_numbers<[1], [0], [0], [1], [0, 0, 1, 1], [], []>} : vector<256x128xbf16>, vector<128x128xbf16>, vector<256x128xf32> -> vector<256x128xf32>
    %32 = arith.addf %24, %31 : vector<256x128xf32>
    %c0_28 = arith.constant 0 : index
    %c1_29 = arith.constant 1 : index
    %c1_30 = arith.constant 1 : index
    %c0_31 = arith.constant 0 : index
    %33 = vector.load %arg1[%c0_28, %c1_29, %c1_30, %c0_31] : memref<1x18x18x128xf32, #tpu.memory_space<vmem>>, vector<1x16x16x128xf32>
    %34 = vector.shape_cast %33 : vector<1x16x16x128xf32> to vector<16x16x128xf32>
    %35 = vector.shape_cast %34 : vector<16x16x128xf32> to vector<256x128xf32>
    %36 = arith.truncf %35 : vector<256x128xf32> to vector<256x128xbf16>
    %c4 = arith.constant 4 : index
    %c0_32 = arith.constant 0 : index
    %c0_33 = arith.constant 0 : index
    %37 = vector.load %arg2[%c4, %c0_32, %c0_33] : memref<9x128x128xbf16, #tpu.memory_space<vmem>>, vector<1x128x128xbf16>
    %38 = vector.shape_cast %37 : vector<1x128x128xbf16> to vector<128x128xbf16>
    %cst_34 = arith.constant dense<0.000000e+00> : vector<256x128xf32>
    %39 = tpu.matmul %36, %38, %cst_34 {dimension_numbers = #tpu.dot_dimension_numbers<[1], [0], [0], [1], [0, 0, 1, 1], [], []>} : vector<256x128xbf16>, vector<128x128xbf16>, vector<256x128xf32> -> vector<256x128xf32>
    %40 = arith.addf %32, %39 : vector<256x128xf32>
    %c0_35 = arith.constant 0 : index
    %c1_36 = arith.constant 1 : index
    %c2_37 = arith.constant 2 : index
    %c0_38 = arith.constant 0 : index
    %41 = vector.load %arg1[%c0_35, %c1_36, %c2_37, %c0_38] : memref<1x18x18x128xf32, #tpu.memory_space<vmem>>, vector<1x16x16x128xf32>
    %42 = vector.shape_cast %41 : vector<1x16x16x128xf32> to vector<16x16x128xf32>
    %43 = vector.shape_cast %42 : vector<16x16x128xf32> to vector<256x128xf32>
    %44 = arith.truncf %43 : vector<256x128xf32> to vector<256x128xbf16>
    %c5 = arith.constant 5 : index
    %c0_39 = arith.constant 0 : index
    %c0_40 = arith.constant 0 : index
    %45 = vector.load %arg2[%c5, %c0_39, %c0_40] : memref<9x128x128xbf16, #tpu.memory_space<vmem>>, vector<1x128x128xbf16>
    %46 = vector.shape_cast %45 : vector<1x128x128xbf16> to vector<128x128xbf16>
    %cst_41 = arith.constant dense<0.000000e+00> : vector<256x128xf32>
    %47 = tpu.matmul %44, %46, %cst_41 {dimension_numbers = #tpu.dot_dimension_numbers<[1], [0], [0], [1], [0, 0, 1, 1], [], []>} : vector<256x128xbf16>, vector<128x128xbf16>, vector<256x128xf32> -> vector<256x128xf32>
    %48 = arith.addf %40, %47 : vector<256x128xf32>
    %c0_42 = arith.constant 0 : index
    %c2_43 = arith.constant 2 : index
    %c0_44 = arith.constant 0 : index
    %c0_45 = arith.constant 0 : index
    %49 = vector.load %arg1[%c0_42, %c2_43, %c0_44, %c0_45] : memref<1x18x18x128xf32, #tpu.memory_space<vmem>>, vector<1x16x16x128xf32>
    %50 = vector.shape_cast %49 : vector<1x16x16x128xf32> to vector<16x16x128xf32>
    %51 = vector.shape_cast %50 : vector<16x16x128xf32> to vector<256x128xf32>
    %52 = arith.truncf %51 : vector<256x128xf32> to vector<256x128xbf16>
    %c6 = arith.constant 6 : index
    %c0_46 = arith.constant 0 : index
    %c0_47 = arith.constant 0 : index
    %53 = vector.load %arg2[%c6, %c0_46, %c0_47] : memref<9x128x128xbf16, #tpu.memory_space<vmem>>, vector<1x128x128xbf16>
    %54 = vector.shape_cast %53 : vector<1x128x128xbf16> to vector<128x128xbf16>
    %cst_48 = arith.constant dense<0.000000e+00> : vector<256x128xf32>
    %55 = tpu.matmul %52, %54, %cst_48 {dimension_numbers = #tpu.dot_dimension_numbers<[1], [0], [0], [1], [0, 0, 1, 1], [], []>} : vector<256x128xbf16>, vector<128x128xbf16>, vector<256x128xf32> -> vector<256x128xf32>
    %56 = arith.addf %48, %55 : vector<256x128xf32>
    %c0_49 = arith.constant 0 : index
    %c2_50 = arith.constant 2 : index
    %c1_51 = arith.constant 1 : index
    %c0_52 = arith.constant 0 : index
    %57 = vector.load %arg1[%c0_49, %c2_50, %c1_51, %c0_52] : memref<1x18x18x128xf32, #tpu.memory_space<vmem>>, vector<1x16x16x128xf32>
    %58 = vector.shape_cast %57 : vector<1x16x16x128xf32> to vector<16x16x128xf32>
    %59 = vector.shape_cast %58 : vector<16x16x128xf32> to vector<256x128xf32>
    %60 = arith.truncf %59 : vector<256x128xf32> to vector<256x128xbf16>
    %c7 = arith.constant 7 : index
    %c0_53 = arith.constant 0 : index
    %c0_54 = arith.constant 0 : index
    %61 = vector.load %arg2[%c7, %c0_53, %c0_54] : memref<9x128x128xbf16, #tpu.memory_space<vmem>>, vector<1x128x128xbf16>
    %62 = vector.shape_cast %61 : vector<1x128x128xbf16> to vector<128x128xbf16>
    %cst_55 = arith.constant dense<0.000000e+00> : vector<256x128xf32>
    %63 = tpu.matmul %60, %62, %cst_55 {dimension_numbers = #tpu.dot_dimension_numbers<[1], [0], [0], [1], [0, 0, 1, 1], [], []>} : vector<256x128xbf16>, vector<128x128xbf16>, vector<256x128xf32> -> vector<256x128xf32>
    %64 = arith.addf %56, %63 : vector<256x128xf32>
    %c0_56 = arith.constant 0 : index
    %c2_57 = arith.constant 2 : index
    %c2_58 = arith.constant 2 : index
    %c0_59 = arith.constant 0 : index
    %65 = vector.load %arg1[%c0_56, %c2_57, %c2_58, %c0_59] : memref<1x18x18x128xf32, #tpu.memory_space<vmem>>, vector<1x16x16x128xf32>
    %66 = vector.shape_cast %65 : vector<1x16x16x128xf32> to vector<16x16x128xf32>
    %67 = vector.shape_cast %66 : vector<16x16x128xf32> to vector<256x128xf32>
    %68 = arith.truncf %67 : vector<256x128xf32> to vector<256x128xbf16>
    %c8 = arith.constant 8 : index
    %c0_60 = arith.constant 0 : index
    %c0_61 = arith.constant 0 : index
    %69 = vector.load %arg2[%c8, %c0_60, %c0_61] : memref<9x128x128xbf16, #tpu.memory_space<vmem>>, vector<1x128x128xbf16>
    %70 = vector.shape_cast %69 : vector<1x128x128xbf16> to vector<128x128xbf16>
    %cst_62 = arith.constant dense<0.000000e+00> : vector<256x128xf32>
    %71 = tpu.matmul %68, %70, %cst_62 {dimension_numbers = #tpu.dot_dimension_numbers<[1], [0], [0], [1], [0, 0, 1, 1], [], []>} : vector<256x128xbf16>, vector<128x128xbf16>, vector<256x128xf32> -> vector<256x128xf32>
    %72 = arith.addf %64, %71 : vector<256x128xf32>
    %c0_63 = arith.constant 0 : index
    %c0_64 = arith.constant 0 : index
    %73 = vector.load %arg3[%c0_63, %c0_64] : memref<1x128xf32, #tpu.memory_space<vmem>>, vector<1x128xf32>
    %74 = vector.broadcast %73 : vector<1x128xf32> to vector<256x128xf32>
    %75 = arith.addf %72, %74 : vector<256x128xf32>
    %cst_65 = arith.constant 0.000000e+00 : f32
    %76 = vector.broadcast %cst_65 : f32 to vector<256x128xf32>
    %77 = arith.cmpf oge, %75, %76 : vector<256x128xf32>
    %c0_66 = arith.constant 0 : index
    %c0_67 = arith.constant 0 : index
    %78 = vector.load %arg4[%c0_66, %c0_67] : memref<1x128xf32, #tpu.memory_space<vmem>>, vector<1x128xf32>
    %79 = vector.broadcast %78 : vector<1x128xf32> to vector<256x128xf32>
    %80 = arith.mulf %79, %75 : vector<256x128xf32>
    %81 = arith.select %77, %75, %80 : vector<256x128xi1>, vector<256x128xf32>
    %c0_68 = arith.constant 0 : index
    %c0_69 = arith.constant 0 : index
    %82 = vector.load %arg8[%c0_68, %c0_69] : memref<64x256xf32, #tpu.memory_space<vmem>>, vector<64x256xf32>
    %cst_70 = arith.constant dense<0.000000e+00> : vector<64x128xf32>
    %83 = tpu.matmul %82, %81, %cst_70 {dimension_numbers = #tpu.dot_dimension_numbers<[1], [0], [0], [1], [0, 0, 1, 1], [], []>} : vector<64x256xf32>, vector<256x128xf32>, vector<64x128xf32> -> vector<64x128xf32>
    %cst_71 = arith.constant 0.000000e+00 : f32
    %84 = vector.broadcast %cst_71 : f32 to vector<16x16x128xf32>
    %c0_72 = arith.constant 0 : index
    %c0_73 = arith.constant 0 : index
    %c0_74 = arith.constant 0 : index
    %85 = vector.load %arg13[%c0_72, %c0_73, %c0_74] : memref<16x16x128xf32, #tpu.memory_space<vmem>>, vector<16x16x128xf32>
    tpu.vector_store %arg13[%c0_72, %c0_73, %c0_74], %84 {strides = array<i32>} : memref<16x16x128xf32, #tpu.memory_space<vmem>>, vector<16x16x128xf32>,
    %86 = vector.shape_cast %83 : vector<64x128xf32> to vector<8x8x128xf32>
    %c1_75 = arith.constant 1 : index
    %c1_76 = arith.constant 1 : index
    %c0_77 = arith.constant 0 : index
    %87 = vector.load %arg13[%c1_75, %c1_76, %c0_77] : memref<16x16x128xf32, #tpu.memory_space<vmem>>, vector<8x8x128xf32>
    tpu.vector_store %arg13[%c1_75, %c1_76, %c0_77], %86 {strides = array<i32>} : memref<16x16x128xf32, #tpu.memory_space<vmem>>, vector<8x8x128xf32>,
    %cst_78 = arith.constant 0.000000e+00 : f32
    %88 = vector.broadcast %cst_78 : f32 to vector<64x128xf32>
    %c0_79 = arith.constant 0 : index
    %c0_80 = arith.constant 0 : index
    %c0_81 = arith.constant 0 : index
    %89 = vector.load %arg13[%c0_79, %c0_80, %c0_81] : memref<16x16x128xf32, #tpu.memory_space<vmem>>, vector<8x8x128xf32>
    %90 = vector.shape_cast %89 : vector<8x8x128xf32> to vector<64x128xf32>
    %91 = arith.truncf %90 : vector<64x128xf32> to vector<64x128xbf16>
    %c0_82 = arith.constant 0 : index
    %c0_83 = arith.constant 0 : index
    %c0_84 = arith.constant 0 : index
    %92 = vector.load %arg5[%c0_82, %c0_83, %c0_84] : memref<9x128x128xbf16, #tpu.memory_space<vmem>>, vector<1x128x128xbf16>
    %93 = vector.shape_cast %92 : vector<1x128x128xbf16> to vector<128x128xbf16>
    %cst_85 = arith.constant dense<0.000000e+00> : vector<64x128xf32>
    %94 = tpu.matmul %91, %93, %cst_85 {dimension_numbers = #tpu.dot_dimension_numbers<[1], [0], [0], [1], [0, 0, 1, 1], [], []>} : vector<64x128xbf16>, vector<128x128xbf16>, vector<64x128xf32> -> vector<64x128xf32>
    %95 = arith.addf %88, %94 : vector<64x128xf32>
    %c0_86 = arith.constant 0 : index
    %c1_87 = arith.constant 1 : index
    %c0_88 = arith.constant 0 : index
    %96 = vector.load %arg13[%c0_86, %c1_87, %c0_88] : memref<16x16x128xf32, #tpu.memory_space<vmem>>, vector<8x8x128xf32>
    %97 = vector.shape_cast %96 : vector<8x8x128xf32> to vector<64x128xf32>
    %98 = arith.truncf %97 : vector<64x128xf32> to vector<64x128xbf16>
    %c1_89 = arith.constant 1 : index
    %c0_90 = arith.constant 0 : index
    %c0_91 = arith.constant 0 : index
    %99 = vector.load %arg5[%c1_89, %c0_90, %c0_91] : memref<9x128x128xbf16, #tpu.memory_space<vmem>>, vector<1x128x128xbf16>
    %100 = vector.shape_cast %99 : vector<1x128x128xbf16> to vector<128x128xbf16>
    %cst_92 = arith.constant dense<0.000000e+00> : vector<64x128xf32>
    %101 = tpu.matmul %98, %100, %cst_92 {dimension_numbers = #tpu.dot_dimension_numbers<[1], [0], [0], [1], [0, 0, 1, 1], [], []>} : vector<64x128xbf16>, vector<128x128xbf16>, vector<64x128xf32> -> vector<64x128xf32>
    %102 = arith.addf %95, %101 : vector<64x128xf32>
    %c0_93 = arith.constant 0 : index
    %c2_94 = arith.constant 2 : index
    %c0_95 = arith.constant 0 : index
    %103 = vector.load %arg13[%c0_93, %c2_94, %c0_95] : memref<16x16x128xf32, #tpu.memory_space<vmem>>, vector<8x8x128xf32>
    %104 = vector.shape_cast %103 : vector<8x8x128xf32> to vector<64x128xf32>
    %105 = arith.truncf %104 : vector<64x128xf32> to vector<64x128xbf16>
    %c2_96 = arith.constant 2 : index
    %c0_97 = arith.constant 0 : index
    %c0_98 = arith.constant 0 : index
    %106 = vector.load %arg5[%c2_96, %c0_97, %c0_98] : memref<9x128x128xbf16, #tpu.memory_space<vmem>>, vector<1x128x128xbf16>
    %107 = vector.shape_cast %106 : vector<1x128x128xbf16> to vector<128x128xbf16>
    %cst_99 = arith.constant dense<0.000000e+00> : vector<64x128xf32>
    %108 = tpu.matmul %105, %107, %cst_99 {dimension_numbers = #tpu.dot_dimension_numbers<[1], [0], [0], [1], [0, 0, 1, 1], [], []>} : vector<64x128xbf16>, vector<128x128xbf16>, vector<64x128xf32> -> vector<64x128xf32>
    %109 = arith.addf %102, %108 : vector<64x128xf32>
    %c1_100 = arith.constant 1 : index
    %c0_101 = arith.constant 0 : index
    %c0_102 = arith.constant 0 : index
    %110 = vector.load %arg13[%c1_100, %c0_101, %c0_102] : memref<16x16x128xf32, #tpu.memory_space<vmem>>, vector<8x8x128xf32>
    %111 = vector.shape_cast %110 : vector<8x8x128xf32> to vector<64x128xf32>
    %112 = arith.truncf %111 : vector<64x128xf32> to vector<64x128xbf16>
    %c3_103 = arith.constant 3 : index
    %c0_104 = arith.constant 0 : index
    %c0_105 = arith.constant 0 : index
    %113 = vector.load %arg5[%c3_103, %c0_104, %c0_105] : memref<9x128x128xbf16, #tpu.memory_space<vmem>>, vector<1x128x128xbf16>
    %114 = vector.shape_cast %113 : vector<1x128x128xbf16> to vector<128x128xbf16>
    %cst_106 = arith.constant dense<0.000000e+00> : vector<64x128xf32>
    %115 = tpu.matmul %112, %114, %cst_106 {dimension_numbers = #tpu.dot_dimension_numbers<[1], [0], [0], [1], [0, 0, 1, 1], [], []>} : vector<64x128xbf16>, vector<128x128xbf16>, vector<64x128xf32> -> vector<64x128xf32>
    %116 = arith.addf %109, %115 : vector<64x128xf32>
    %c1_107 = arith.constant 1 : index
    %c1_108 = arith.constant 1 : index
    %c0_109 = arith.constant 0 : index
    %117 = vector.load %arg13[%c1_107, %c1_108, %c0_109] : memref<16x16x128xf32, #tpu.memory_space<vmem>>, vector<8x8x128xf32>
    %118 = vector.shape_cast %117 : vector<8x8x128xf32> to vector<64x128xf32>
    %119 = arith.truncf %118 : vector<64x128xf32> to vector<64x128xbf16>
    %c4_110 = arith.constant 4 : index
    %c0_111 = arith.constant 0 : index
    %c0_112 = arith.constant 0 : index
    %120 = vector.load %arg5[%c4_110, %c0_111, %c0_112] : memref<9x128x128xbf16, #tpu.memory_space<vmem>>, vector<1x128x128xbf16>
    %121 = vector.shape_cast %120 : vector<1x128x128xbf16> to vector<128x128xbf16>
    %cst_113 = arith.constant dense<0.000000e+00> : vector<64x128xf32>
    %122 = tpu.matmul %119, %121, %cst_113 {dimension_numbers = #tpu.dot_dimension_numbers<[1], [0], [0], [1], [0, 0, 1, 1], [], []>} : vector<64x128xbf16>, vector<128x128xbf16>, vector<64x128xf32> -> vector<64x128xf32>
    %123 = arith.addf %116, %122 : vector<64x128xf32>
    %c1_114 = arith.constant 1 : index
    %c2_115 = arith.constant 2 : index
    %c0_116 = arith.constant 0 : index
    %124 = vector.load %arg13[%c1_114, %c2_115, %c0_116] : memref<16x16x128xf32, #tpu.memory_space<vmem>>, vector<8x8x128xf32>
    %125 = vector.shape_cast %124 : vector<8x8x128xf32> to vector<64x128xf32>
    %126 = arith.truncf %125 : vector<64x128xf32> to vector<64x128xbf16>
    %c5_117 = arith.constant 5 : index
    %c0_118 = arith.constant 0 : index
    %c0_119 = arith.constant 0 : index
    %127 = vector.load %arg5[%c5_117, %c0_118, %c0_119] : memref<9x128x128xbf16, #tpu.memory_space<vmem>>, vector<1x128x128xbf16>
    %128 = vector.shape_cast %127 : vector<1x128x128xbf16> to vector<128x128xbf16>
    %cst_120 = arith.constant dense<0.000000e+00> : vector<64x128xf32>
    %129 = tpu.matmul %126, %128, %cst_120 {dimension_numbers = #tpu.dot_dimension_numbers<[1], [0], [0], [1], [0, 0, 1, 1], [], []>} : vector<64x128xbf16>, vector<128x128xbf16>, vector<64x128xf32> -> vector<64x128xf32>
    %130 = arith.addf %123, %129 : vector<64x128xf32>
    %c2_121 = arith.constant 2 : index
    %c0_122 = arith.constant 0 : index
    %c0_123 = arith.constant 0 : index
    %131 = vector.load %arg13[%c2_121, %c0_122, %c0_123] : memref<16x16x128xf32, #tpu.memory_space<vmem>>, vector<8x8x128xf32>
    %132 = vector.shape_cast %131 : vector<8x8x128xf32> to vector<64x128xf32>
    %133 = arith.truncf %132 : vector<64x128xf32> to vector<64x128xbf16>
    %c6_124 = arith.constant 6 : index
    %c0_125 = arith.constant 0 : index
    %c0_126 = arith.constant 0 : index
    %134 = vector.load %arg5[%c6_124, %c0_125, %c0_126] : memref<9x128x128xbf16, #tpu.memory_space<vmem>>, vector<1x128x128xbf16>
    %135 = vector.shape_cast %134 : vector<1x128x128xbf16> to vector<128x128xbf16>
    %cst_127 = arith.constant dense<0.000000e+00> : vector<64x128xf32>
    %136 = tpu.matmul %133, %135, %cst_127 {dimension_numbers = #tpu.dot_dimension_numbers<[1], [0], [0], [1], [0, 0, 1, 1], [], []>} : vector<64x128xbf16>, vector<128x128xbf16>, vector<64x128xf32> -> vector<64x128xf32>
    %137 = arith.addf %130, %136 : vector<64x128xf32>
    %c2_128 = arith.constant 2 : index
    %c1_129 = arith.constant 1 : index
    %c0_130 = arith.constant 0 : index
    %138 = vector.load %arg13[%c2_128, %c1_129, %c0_130] : memref<16x16x128xf32, #tpu.memory_space<vmem>>, vector<8x8x128xf32>
    %139 = vector.shape_cast %138 : vector<8x8x128xf32> to vector<64x128xf32>
    %140 = arith.truncf %139 : vector<64x128xf32> to vector<64x128xbf16>
    %c7_131 = arith.constant 7 : index
    %c0_132 = arith.constant 0 : index
    %c0_133 = arith.constant 0 : index
    %141 = vector.load %arg5[%c7_131, %c0_132, %c0_133] : memref<9x128x128xbf16, #tpu.memory_space<vmem>>, vector<1x128x128xbf16>
    %142 = vector.shape_cast %141 : vector<1x128x128xbf16> to vector<128x128xbf16>
    %cst_134 = arith.constant dense<0.000000e+00> : vector<64x128xf32>
    %143 = tpu.matmul %140, %142, %cst_134 {dimension_numbers = #tpu.dot_dimension_numbers<[1], [0], [0], [1], [0, 0, 1, 1], [], []>} : vector<64x128xbf16>, vector<128x128xbf16>, vector<64x128xf32> -> vector<64x128xf32>
    %144 = arith.addf %137, %143 : vector<64x128xf32>
    %c2_135 = arith.constant 2 : index
    %c2_136 = arith.constant 2 : index
    %c0_137 = arith.constant 0 : index
    %145 = vector.load %arg13[%c2_135, %c2_136, %c0_137] : memref<16x16x128xf32, #tpu.memory_space<vmem>>, vector<8x8x128xf32>
    %146 = vector.shape_cast %145 : vector<8x8x128xf32> to vector<64x128xf32>
    %147 = arith.truncf %146 : vector<64x128xf32> to vector<64x128xbf16>
    %c8_138 = arith.constant 8 : index
    %c0_139 = arith.constant 0 : index
    %c0_140 = arith.constant 0 : index
    %148 = vector.load %arg5[%c8_138, %c0_139, %c0_140] : memref<9x128x128xbf16, #tpu.memory_space<vmem>>, vector<1x128x128xbf16>
    %149 = vector.shape_cast %148 : vector<1x128x128xbf16> to vector<128x128xbf16>
    %cst_141 = arith.constant dense<0.000000e+00> : vector<64x128xf32>
    %150 = tpu.matmul %147, %149, %cst_141 {dimension_numbers = #tpu.dot_dimension_numbers<[1], [0], [0], [1], [0, 0, 1, 1], [], []>} : vector<64x128xbf16>, vector<128x128xbf16>, vector<64x128xf32> -> vector<64x128xf32>
    %151 = arith.addf %144, %150 : vector<64x128xf32>
    %c0_142 = arith.constant 0 : index
    %c0_143 = arith.constant 0 : index
    %152 = vector.load %arg6[%c0_142, %c0_143] : memref<1x128xf32, #tpu.memory_space<vmem>>, vector<1x128xf32>
    %153 = vector.broadcast %152 : vector<1x128xf32> to vector<64x128xf32>
    %154 = arith.addf %151, %153 : vector<64x128xf32>
    %cst_144 = arith.constant 0.000000e+00 : f32
    %155 = vector.broadcast %cst_144 : f32 to vector<64x128xf32>
    %156 = arith.cmpf oge, %154, %155 : vector<64x128xf32>
    %c0_145 = arith.constant 0 : index
    %c0_146 = arith.constant 0 : index
    %157 = vector.load %arg7[%c0_145, %c0_146] : memref<1x128xf32, #tpu.memory_space<vmem>>, vector<1x128xf32>
    %158 = vector.broadcast %157 : vector<1x128xf32> to vector<64x128xf32>
    %159 = arith.mulf %158, %154 : vector<64x128xf32>
    %160 = arith.select %156, %154, %159 : vector<64x128xi1>, vector<64x128xf32>
    %cst_147 = arith.constant dense<0.000000e+00> : vector<128xf32>
    %161 = vector.multi_reduction <add>, %160, %cst_147 [0] : vector<64x128xf32> to vector<128xf32>
    %162 = vector.shape_cast %161 : vector<128xf32> to vector<1x128xf32>
    %cst_148 = arith.constant 6.400000e+01 : f32
    %163 = vector.broadcast %cst_148 : f32 to vector<1x128xf32>
    %164 = arith.divf %162, %163 : vector<1x128xf32>
    %165 = arith.truncf %164 : vector<1x128xf32> to vector<1x128xbf16>
    %c0_149 = arith.constant 0 : index
    %c0_150 = arith.constant 0 : index
    %166 = vector.load %arg9[%c0_149, %c0_150] : memref<128x512xbf16, #tpu.memory_space<vmem>>, vector<128x512xbf16>
    %cst_151 = arith.constant dense<0.000000e+00> : vector<1x512xf32>
    %167 = tpu.matmul %165, %166, %cst_151 {dimension_numbers = #tpu.dot_dimension_numbers<[1], [0], [0], [1], [0, 0, 1, 1], [], []>} : vector<1x128xbf16>, vector<128x512xbf16>, vector<1x512xf32> -> vector<1x512xf32>
    %c0_152 = arith.constant 0 : index
    %c0_153 = arith.constant 0 : index
    %168 = vector.load %arg10[%c0_152, %c0_153] : memref<1x512xf32, #tpu.memory_space<vmem>>, vector<1x512xf32>
    %169 = arith.addf %167, %168 : vector<1x512xf32>
    %c0_154 = arith.constant 0 : index
    %c0_155 = arith.constant 0 : index
    %170 = vector.load %arg11[%c0_154, %c0_155] : memref<1x512xf32, #tpu.memory_space<vmem>>, vector<1x512xf32>
    %171 = arith.addf %169, %170 : vector<1x512xf32>
    %172 = vector.shape_cast %171 : vector<1x512xf32> to vector<1x1x512xf32>
    %c0_156 = arith.constant 0 : index
    %c0_157 = arith.constant 0 : index
    %c0_158 = arith.constant 0 : index
    %173 = vector.load %arg12[%c0_156, %c0_157, %c0_158] : memref<1x1x512xf32, #tpu.memory_space<vmem>>, vector<1x1x512xf32>
    tpu.vector_store %arg12[%c0_156, %c0_157, %c0_158], %172 {strides = array<i32>} : memref<1x1x512xf32, #tpu.memory_space<vmem>>, vector<1x1x512xf32>,
    return
  }
  func.func @transform_0(%arg0: i32) -> (i32, i32, i32, i32) {
    %c0_i32 = arith.constant 0 : i32
    %c0_i32_0 = arith.constant 0 : i32
    %c0_i32_1 = arith.constant 0 : i32
    %c0_i32_2 = arith.constant 0 : i32
    return %arg0, %c0_i32, %c0_i32_0, %c0_i32_1 : i32, i32, i32, i32
  }
  func.func @transform_1(%arg0: i32) -> (i32, i32, i32) {
    %c0_i32 = arith.constant 0 : i32
    %c0_i32_0 = arith.constant 0 : i32
    %c0_i32_1 = arith.constant 0 : i32
    %c0_i32_2 = arith.constant 0 : i32
    return %c0_i32, %c0_i32_0, %c0_i32_1 : i32, i32, i32
  }
  func.func @transform_2(%arg0: i32) -> (i32, i32) {
    %c0_i32 = arith.constant 0 : i32
    %c0_i32_0 = arith.constant 0 : i32
    %c0_i32_1 = arith.constant 0 : i32
    return %c0_i32, %c0_i32_0 : i32, i32
  }
  func.func @transform_3(%arg0: i32) -> (i32, i32) {
    %c0_i32 = arith.constant 0 : i32
    %c0_i32_0 = arith.constant 0 : i32
    %c0_i32_1 = arith.constant 0 : i32
    return %c0_i32, %c0_i32_0 : i32, i32
  }
  func.func @transform_4(%arg0: i32) -> (i32, i32, i32) {
    %c0_i32 = arith.constant 0 : i32
    %c0_i32_0 = arith.constant 0 : i32
    %c0_i32_1 = arith.constant 0 : i32
    %c0_i32_2 = arith.constant 0 : i32
    return %c0_i32, %c0_i32_0, %c0_i32_1 : i32, i32, i32
  }
  func.func @transform_5(%arg0: i32) -> (i32, i32) {
    %c0_i32 = arith.constant 0 : i32
    %c0_i32_0 = arith.constant 0 : i32
    %c0_i32_1 = arith.constant 0 : i32
    return %c0_i32, %c0_i32_0 : i32, i32
  }
  func.func @transform_6(%arg0: i32) -> (i32, i32) {
    %c0_i32 = arith.constant 0 : i32
    %c0_i32_0 = arith.constant 0 : i32
    %c0_i32_1 = arith.constant 0 : i32
    return %c0_i32, %c0_i32_0 : i32, i32
  }
  func.func @transform_7(%arg0: i32) -> (i32, i32) {
    %c0_i32 = arith.constant 0 : i32
    %c0_i32_0 = arith.constant 0 : i32
    %c0_i32_1 = arith.constant 0 : i32
    return %c0_i32, %c0_i32_0 : i32, i32
  }
  func.func @transform_8(%arg0: i32) -> (i32, i32) {
    %c0_i32 = arith.constant 0 : i32
    %c0_i32_0 = arith.constant 0 : i32
    %c0_i32_1 = arith.constant 0 : i32
    return %c0_i32, %c0_i32_0 : i32, i32
  }
  func.func @transform_9(%arg0: i32) -> (i32, i32) {
    %c0_i32 = arith.constant 0 : i32
    %c0_i32_0 = arith.constant 0 : i32
    %c0_i32_1 = arith.constant 0 : i32
    return %c0_i32, %c0_i32_0 : i32, i32
  }
  func.func @transform_10(%arg0: i32) -> (i32, i32) {
    %c0_i32 = arith.constant 0 : i32
    %c0_i32_0 = arith.constant 0 : i32
    %c0_i32_1 = arith.constant 0 : i32
    return %c0_i32, %c0_i32_0 : i32, i32
  }
  func.func @transform_11(%arg0: i32) -> (i32, i32, i32) {
    %c0_i32 = arith.constant 0 : i32
    %c0_i32_0 = arith.constant 0 : i32
    %c0_i32_1 = arith.constant 0 : i32
    return %arg0, %c0_i32, %c0_i32_0 : i32, i32, i32
  }
}

</mosaic_0001>

<llo_original>
// kernel: tpu_custom_call.1
$region0: #{tpu_custom_call.1}
  #allocation0 [shape = 'u32[]', space=smem, size = 0x4, offset = 0x4, fixed_abs, tag = 'smem constant byte address 0x4 - core index']
  #allocation1 [shape = 'u32[144,128]{1,0:T(1,128)}', space=vmem, size = 0x12000, scoped, tag = 'internal scratch']
  #allocation2 [shape = 'f32[16,16,128]{2,1,0:T(8,128)}', space=vmem, size = 0x20000, scoped, tag = 'scratch operand']
  %s0 = inlined_call_operand.vmem [shape: f32[2,18,18,128], index: 0, kind: input, shape index: {}]
  %s1 = inlined_call_operand.vmem [shape: bf16[9,128,128], index: 1, kind: input, shape index: {}]
  %s2 = inlined_call_operand.vmem [shape: f32[1,128], index: 2, kind: input, shape index: {}]
  %s3 = inlined_call_operand.vmem [shape: f32[1,128], index: 3, kind: input, shape index: {}]
  %s4 = inlined_call_operand.vmem [shape: bf16[9,128,128], index: 4, kind: input, shape index: {}]
  %s5 = inlined_call_operand.vmem [shape: f32[1,128], index: 5, kind: input, shape index: {}]
  %s6 = inlined_call_operand.vmem [shape: f32[1,128], index: 6, kind: input, shape index: {}]
  %s7 = inlined_call_operand.hbm [shape: f32[64,256], index: 7, kind: input, shape index: {}]
  %s8 = inlined_call_operand.vmem [shape: bf16[128,512], index: 8, kind: input, shape index: {}]
  %s9 = inlined_call_operand.vmem [shape: f32[1,512], index: 9, kind: input, shape index: {}]
  %s10 = inlined_call_operand.vmem [shape: f32[1,512], index: 10, kind: input, shape index: {}]
  %s11 = inlined_call_operand.hbm [shape: f32[2,1,512], index: 11, kind: output, shape index: {}]
  %s12 = sld [smem:[#allocation0]]
  $region81: #{tpu_custom_call.1} parent=0
    _
  %s14 = ssub.s32 1, %s12
  %s15 = scalar_select 0, %s14, %s12
  $region1: #{tpu_custom_call.1} parent=0
    #allocation3 [shape = 'u8[65536]{0}', space=vmem, size = 0x10000, scoped, tag = 'input window, operand 7, single buffered']
    #allocation4 [shape = 's32[2]{0}', space=sflag, size = 0x8, scoped, tag = 'scoped memory for tpu_custom_call.1']
    #allocation5 [shape = 's32[2]{0}', space=sflag, size = 0x8, scoped, tag = 'scoped memory for tpu_custom_call.1']
    #allocation6 [shape = 'u8[4096]{0}', space=vmem, size = 0x1000, scoped, tag = 'output window, operand 0']
    %16 = vsyncpa [#allocation4], 0
    %17 = vsyncpa [#allocation5], 0
    %s18 = scalar_lea.sflag [#allocation5], 1
    %19 = vsyncpa %s18, 0
    loop: start=0, step=1, limit=4
    $region2: #{tpu_custom_call.1} parent=1 // loop_pre_header
      _
    $region3: #{tpu_custom_call.1} parent=1 // loop_header
      %s21 = sphi 0, %s25
      %p22 = scmp.ge.s32.totalorder %s21, 4
      %s31 = sphi 0, %s33
      %s34 = sphi 0, %s31
      %s35 = sphi 0, %s34
      %s51 = sphi 0, %s35
      %s55 = sphi 0, %s55
      %s57 = sphi 0, %s55
      %s58 = sphi 0, %s57
      %s72 = sphi 0, %s58
      %s76 = sphi 0, %s76
      %s78 = sphi 0, %s76
      %s79 = sphi 0, %s78
      %s93 = sphi 0, %s79
      %s97 = sphi 0, %s97
      %s99 = sphi 0, %s97
      %s100 = sphi 0, %s99
      %s114 = sphi 0, %s100
      %s118 = sphi 0, %s118
      %s120 = sphi 0, %s118
      %s121 = sphi 0, %s120
      %s135 = sphi 0, %s121
      %s139 = sphi 0, %s139
      %s141 = sphi 0, %s139
      %s142 = sphi 0, %s141
      %s156 = sphi 0, %s142
      %s160 = sphi 0, %s160
      %s162 = sphi 0, %s160
      %s163 = sphi 0, %s162
      %s177 = sphi 0, %s163
      %s181 = sphi 0, %s181
      %s183 = sphi 0, %s181
      %s184 = sphi 0, %s183
      %s198 = sphi 0, %s184
      %s202 = sphi 0, %s202
      %s204 = sphi 0, %s202
      %s205 = sphi 0, %s204
      %s219 = sphi 0, %s205
      %s223 = sphi 0, %s223
      %s225 = sphi 0, %s223
      %s226 = sphi 0, %s225
      %s240 = sphi 0, %s226
      %s244 = sphi 0, %s244
      %s246 = sphi 0, %s244
      %s247 = sphi 0, %s246
      %s261 = sphi 0, %s247
      %s267 = sphi 0, %s269
      %s270 = sphi 0, %s267
      %s271 = sphi 0, %s270
      %s287 = sphi 0, %s271
    $region4: #{tpu_custom_call.1} parent=1 // loop_header_branch
      %24 = sbr.rel (%p22) target = $region8
    $region5: #{tpu_custom_call.1} parent=1 // loop_body
      %s26 = ssub.s32 %s21, 1
      %s27 = ssub.s32 %s21, 2
      %s28 = sadd.s32 %s21, 1
      %s29 = ssub.s32 %s21, %s28
      %p30 = scmp.eq.s32.totalorder %s29, 0
      %s32 = sadd.s32 %s31, 1
      %s33 = scalar_select %p30, %s31, %s32
      %p36 = pneg %p30
      %p37 = scmp.eq.s32.totalorder %s21, 1
      %p38 = por %p36, %p37
      %p39 = scmp.ne.s32.totalorder %s31, %s34
      %p40 = scmp.eq.s32.totalorder %s21, 0
      %p41 = por %p39, %p40
      %p42 = scmp.ne.s32.totalorder %s31, %s34
      %p43 = scmp.eq.s32.totalorder %s26, 1
      %p44 = por %p42, %p43
      %p45 = scmp.ne.s32.totalorder %s34, %s35
      %p46 = scmp.eq.s32.totalorder %s26, 0
      %p47 = por %p45, %p46
      %p48 = scmp.ne.s32.totalorder %s34, %s35
      %p49 = scmp.eq.s32.totalorder %s27, 1
      %p50 = por %p48, %p49
      %p52 = scmp.ne.s32.totalorder %s35, %s51
      %p53 = scmp.eq.s32.totalorder %s27, 0
      %p54 = por %p52, %p53
      %s56 = sadd.s32 %s55, 1
      %p59 = scmp.eq.s32.totalorder %s21, 1
      %p60 = scmp.ne.s32.totalorder %s55, %s57
      %p61 = scmp.eq.s32.totalorder %s21, 0
      %p62 = por %p60, %p61
      %p63 = scmp.ne.s32.totalorder %s55, %s57
      %p64 = scmp.eq.s32.totalorder %s26, 1
      %p65 = por %p63, %p64
      %p66 = scmp.ne.s32.totalorder %s57, %s58
      %p67 = scmp.eq.s32.totalorder %s26, 0
      %p68 = por %p66, %p67
      %p69 = scmp.ne.s32.totalorder %s57, %s58
      %p70 = scmp.eq.s32.totalorder %s27, 1
      %p71 = por %p69, %p70
      %p73 = scmp.ne.s32.totalorder %s58, %s72
      %p74 = scmp.eq.s32.totalorder %s27, 0
      %p75 = por %p73, %p74
      %s77 = sadd.s32 %s76, 1
      %p80 = scmp.eq.s32.totalorder %s21, 1
      %p81 = scmp.ne.s32.totalorder %s76, %s78
      %p82 = scmp.eq.s32.totalorder %s21, 0
      %p83 = por %p81, %p82
      %p84 = scmp.ne.s32.totalorder %s76, %s78
      %p85 = scmp.eq.s32.totalorder %s26, 1
      %p86 = por %p84, %p85
      %p87 = scmp.ne.s32.totalorder %s78, %s79
      %p88 = scmp.eq.s32.totalorder %s26, 0
      %p89 = por %p87, %p88
      %p90 = scmp.ne.s32.totalorder %s78, %s79
      %p91 = scmp.eq.s32.totalorder %s27, 1
      %p92 = por %p90, %p91
      %p94 = scmp.ne.s32.totalorder %s79, %s93
      %p95 = scmp.eq.s32.totalorder %s27, 0
      %p96 = por %p94, %p95
      %s98 = sadd.s32 %s97, 1
      %p101 = scmp.eq.s32.totalorder %s21, 1
      %p102 = scmp.ne.s32.totalorder %s97, %s99
      %p103 = scmp.eq.s32.totalorder %s21, 0
      %p104 = por %p102, %p103
      %p105 = scmp.ne.s32.totalorder %s97, %s99
      %p106 = scmp.eq.s32.totalorder %s26, 1
      %p107 = por %p105, %p106
      %p108 = scmp.ne.s32.totalorder %s99, %s100
      %p109 = scmp.eq.s32.totalorder %s26, 0
      %p110 = por %p108, %p109
      %p111 = scmp.ne.s32.totalorder %s99, %s100
      %p112 = scmp.eq.s32.totalorder %s27, 1
      %p113 = por %p111, %p112
      %p115 = scmp.ne.s32.totalorder %s100, %s114
      %p116 = scmp.eq.s32.totalorder %s27, 0
      %p117 = por %p115, %p116
      %s119 = sadd.s32 %s118, 1
      %p122 = scmp.eq.s32.totalorder %s21, 1
      %p123 = scmp.ne.s32.totalorder %s118, %s120
      %p124 = scmp.eq.s32.totalorder %s21, 0
      %p125 = por %p123, %p124
      %p126 = scmp.ne.s32.totalorder %s118, %s120
      %p127 = scmp.eq.s32.totalorder %s26, 1
      %p128 = por %p126, %p127
      %p129 = scmp.ne.s32.totalorder %s120, %s121
      %p130 = scmp.eq.s32.totalorder %s26, 0
      %p131 = por %p129, %p130
      %p132 = scmp.ne.s32.totalorder %s120, %s121
      %p133 = scmp.eq.s32.totalorder %s27, 1
      %p134 = por %p132, %p133
      %p136 = scmp.ne.s32.totalorder %s121, %s135
      %p137 = scmp.eq.s32.totalorder %s27, 0
      %p138 = por %p136, %p137
      %s140 = sadd.s32 %s139, 1
      %p143 = scmp.eq.s32.totalorder %s21, 1
      %p144 = scmp.ne.s32.totalorder %s139, %s141
      %p145 = scmp.eq.s32.totalorder %s21, 0
      %p146 = por %p144, %p145
      %p147 = scmp.ne.s32.totalorder %s139, %s141
      %p148 = scmp.eq.s32.totalorder %s26, 1
      %p149 = por %p147, %p148
      %p150 = scmp.ne.s32.totalorder %s141, %s142
      %p151 = scmp.eq.s32.totalorder %s26, 0
      %p152 = por %p150, %p151
      %p153 = scmp.ne.s32.totalorder %s141, %s142
      %p154 = scmp.eq.s32.totalorder %s27, 1
      %p155 = por %p153, %p154
      %p157 = scmp.ne.s32.totalorder %s142, %s156
      %p158 = scmp.eq.s32.totalorder %s27, 0
      %p159 = por %p157, %p158
      %s161 = sadd.s32 %s160, 1
      %p164 = scmp.eq.s32.totalorder %s21, 1
      %p165 = scmp.ne.s32.totalorder %s160, %s162
      %p166 = scmp.eq.s32.totalorder %s21, 0
      %p167 = por %p165, %p166
      %p168 = scmp.ne.s32.totalorder %s160, %s162
      %p169 = scmp.eq.s32.totalorder %s26, 1
      %p170 = por %p168, %p169
      %p171 = scmp.ne.s32.totalorder %s162, %s163
      %p172 = scmp.eq.s32.totalorder %s26, 0
      %p173 = por %p171, %p172
      %p174 = scmp.ne.s32.totalorder %s162, %s163
      %p175 = scmp.eq.s32.totalorder %s27, 1
      %p176 = por %p174, %p175
      %p178 = scmp.ne.s32.totalorder %s163, %s177
      %p179 = scmp.eq.s32.totalorder %s27, 0
      %p180 = por %p178, %p179
      %s182 = sadd.s32 %s181, 1
      %p185 = scmp.eq.s32.totalorder %s21, 1
      %p186 = scmp.ne.s32.totalorder %s181, %s183
      %p187 = scmp.eq.s32.totalorder %s21, 0
      %p188 = por %p186, %p187
      %p189 = scmp.ne.s32.totalorder %s181, %s183
      %p190 = scmp.eq.s32.totalorder %s26, 1
      %p191 = por %p189, %p190
      %p192 = scmp.ne.s32.totalorder %s183, %s184
      %p193 = scmp.eq.s32.totalorder %s26, 0
      %p194 = por %p192, %p193
      %p195 = scmp.ne.s32.totalorder %s183, %s184
      %p196 = scmp.eq.s32.totalorder %s27, 1
      %p197 = por %p195, %p196
      %p199 = scmp.ne.s32.totalorder %s184, %s198
      %p200 = scmp.eq.s32.totalorder %s27, 0
      %p201 = por %p199, %p200
      %s203 = sadd.s32 %s202, 1
      %p206 = scmp.eq.s32.totalorder %s21, 1
      %p207 = scmp.ne.s32.totalorder %s202, %s204
      %p208 = scmp.eq.s32.totalorder %s21, 0
      %p209 = por %p207, %p208
      %p210 = scmp.ne.s32.totalorder %s202, %s204
      %p211 = scmp.eq.s32.totalorder %s26, 1
      %p212 = por %p210, %p211
      %p213 = scmp.ne.s32.totalorder %s204, %s205
      %p214 = scmp.eq.s32.totalorder %s26, 0
      %p215 = por %p213, %p214
      %p216 = scmp.ne.s32.totalorder %s204, %s205
      %p217 = scmp.eq.s32.totalorder %s27, 1
      %p218 = por %p216, %p217
      %p220 = scmp.ne.s32.totalorder %s205, %s219
      %p221 = scmp.eq.s32.totalorder %s27, 0
      %p222 = por %p220, %p221
      %s224 = sadd.s32 %s223, 1
      %p227 = scmp.eq.s32.totalorder %s21, 1
      %p228 = scmp.ne.s32.totalorder %s223, %s225
      %p229 = scmp.eq.s32.totalorder %s21, 0
      %p230 = por %p228, %p229
      %p231 = scmp.ne.s32.totalorder %s223, %s225
      %p232 = scmp.eq.s32.totalorder %s26, 1
      %p233 = por %p231, %p232
      %p234 = scmp.ne.s32.totalorder %s225, %s226
      %p235 = scmp.eq.s32.totalorder %s26, 0
      %p236 = por %p234, %p235
      %p237 = scmp.ne.s32.totalorder %s225, %s226
      %p238 = scmp.eq.s32.totalorder %s27, 1
      %p239 = por %p237, %p238
      %p241 = scmp.ne.s32.totalorder %s226, %s240
      %p242 = scmp.eq.s32.totalorder %s27, 0
      %p243 = por %p241, %p242
      %s245 = sadd.s32 %s244, 1
      %p248 = scmp.eq.s32.totalorder %s21, 1
      %p249 = scmp.ne.s32.totalorder %s244, %s246
      %p250 = scmp.eq.s32.totalorder %s21, 0
      %p251 = por %p249, %p250
      %p252 = scmp.ne.s32.totalorder %s244, %s246
      %p253 = scmp.eq.s32.totalorder %s26, 1
      %p254 = por %p252, %p253
      %p255 = scmp.ne.s32.totalorder %s246, %s247
      %p256 = scmp.eq.s32.totalorder %s26, 0
      %p257 = por %p255, %p256
      %p258 = scmp.ne.s32.totalorder %s246, %s247
      %p259 = scmp.eq.s32.totalorder %s27, 1
      %p260 = por %p258, %p259
      %p262 = scmp.ne.s32.totalorder %s247, %s261
      %p263 = scmp.eq.s32.totalorder %s27, 0
      %p264 = por %p262, %p263
      %s265 = ssub.s32 %s21, %s28
      %p266 = scmp.eq.s32.totalorder %s265, 0
      %s268 = sadd.s32 %s267, 1
      %s269 = scalar_select %p266, %s267, %s268
      %p272 = pneg %p266
      %p273 = scmp.eq.s32.totalorder %s21, 1
      %p274 = por %p272, %p273
      %p275 = scmp.ne.s32.totalorder %s267, %s270
      %p276 = scmp.eq.s32.totalorder %s21, 0
      %p277 = por %p275, %p276
      %p278 = scmp.ne.s32.totalorder %s267, %s270
      %p279 = scmp.eq.s32.totalorder %s26, 1
      %p280 = por %p278, %p279
      %p281 = scmp.ne.s32.totalorder %s270, %s271
      %p282 = scmp.eq.s32.totalorder %s26, 0
      %p283 = por %p281, %p282
      %p284 = scmp.ne.s32.totalorder %s270, %s271
      %p285 = scmp.eq.s32.totalorder %s27, 1
      %p286 = por %p284, %p285
      %p288 = scmp.ne.s32.totalorder %s271, %s287
      %p289 = scmp.eq.s32.totalorder %s27, 0
      %p290 = por %p288, %p289
      %p291 = scmp.le.s32.totalorder 1, %s21
      %p292 = scmp.lt.s32.totalorder %s21, 3
      %p293 = pnand %p291, %p292
      %p294 = pneg %p293
      // Predicated region
      $region9: #{tpu_custom_call.1} parent=5 // pred_check
        _
      $region10: #{tpu_custom_call.1} parent=5 // pred_check_branch
        %296 = sbr.rel (%p293) target = $region12
      $region11: #{tpu_custom_call.1} parent=5 // pred_region
        %s297 = ssub.s32 %s21, 1
        // Predicated region
        $region13: #{tpu_custom_call.1} parent=11 // pred_check
          %p298 = pneg %p68
        $region14: #{tpu_custom_call.1} parent=11 // pred_check_branch
          %300 = sbr.rel (%p298) target = $region16
        $region15: #{tpu_custom_call.1} parent=11 // pred_region
          _
        $region16: #{tpu_custom_call.1} parent=11 // pred_fallthru
          _
        // Predicated region
        $region17: #{tpu_custom_call.1} parent=11 // pred_check
          %p301 = pneg %p89
        $region18: #{tpu_custom_call.1} parent=11 // pred_check_branch
          %303 = sbr.rel (%p301) target = $region20
        $region19: #{tpu_custom_call.1} parent=11 // pred_region
          _
        $region20: #{tpu_custom_call.1} parent=11 // pred_fallthru
          _
        // Predicated region
        $region21: #{tpu_custom_call.1} parent=11 // pred_check
          %p304 = pneg %p110
        $region22: #{tpu_custom_call.1} parent=11 // pred_check_branch
          %306 = sbr.rel (%p304) target = $region24
        $region23: #{tpu_custom_call.1} parent=11 // pred_region
          _
        $region24: #{tpu_custom_call.1} parent=11 // pred_fallthru
          _
        // Predicated region
        $region25: #{tpu_custom_call.1} parent=11 // pred_check
          %p307 = pneg %p131
        $region26: #{tpu_custom_call.1} parent=11 // pred_check_branch
          %309 = sbr.rel (%p307) target = $region28
        $region27: #{tpu_custom_call.1} parent=11 // pred_region
          _
        $region28: #{tpu_custom_call.1} parent=11 // pred_fallthru
          _
        // Predicated region
        $region29: #{tpu_custom_call.1} parent=11 // pred_check
          %p310 = pneg %p152
        $region30: #{tpu_custom_call.1} parent=11 // pred_check_branch
          %312 = sbr.rel (%p310) target = $region32
        $region31: #{tpu_custom_call.1} parent=11 // pred_region
          _
        $region32: #{tpu_custom_call.1} parent=11 // pred_fallthru
          _
        // Predicated region
        $region33: #{tpu_custom_call.1} parent=11 // pred_check
          %p313 = pneg %p173
        $region34: #{tpu_custom_call.1} parent=11 // pred_check_branch
          %315 = sbr.rel (%p313) target = $region36
        $region35: #{tpu_custom_call.1} parent=11 // pred_region
          _
        $region36: #{tpu_custom_call.1} parent=11 // pred_fallthru
          _
        // Predicated region
        $region37: #{tpu_custom_call.1} parent=11 // pred_check
          %p316 = pneg %p194
        $region38: #{tpu_custom_call.1} parent=11 // pred_check_branch
          %318 = sbr.rel (%p316) target = $region40
        $region39: #{tpu_custom_call.1} parent=11 // pred_region
          %s320 = ssub.s32 2048, 2048
          %321 = vsyncadd [#allocation4], %s320
          %s322 = sshll.u32 [#allocation3], 4
          %s323 = int_to_ptr.vmem [resolvable:$true] %s322
          %328 = dma.hbm_to_vmem [thread:$0]  %s7, 2048, %s323, [#allocation4], 256, 256, 16
        $region40: #{tpu_custom_call.1} parent=11 // pred_fallthru
          _
        // Predicated region
        $region41: #{tpu_custom_call.1} parent=11 // pred_check
          %p329 = pneg %p215
        $region42: #{tpu_custom_call.1} parent=11 // pred_check_branch
          %331 = sbr.rel (%p329) target = $region44
        $region43: #{tpu_custom_call.1} parent=11 // pred_region
          _
        $region44: #{tpu_custom_call.1} parent=11 // pred_fallthru
          _
        // Predicated region
        $region45: #{tpu_custom_call.1} parent=11 // pred_check
          %p332 = pneg %p236
        $region46: #{tpu_custom_call.1} parent=11 // pred_check_branch
          %334 = sbr.rel (%p332) target = $region48
        $region47: #{tpu_custom_call.1} parent=11 // pred_region
          _
        $region48: #{tpu_custom_call.1} parent=11 // pred_fallthru
          _
        // Predicated region
        $region49: #{tpu_custom_call.1} parent=11 // pred_check
          %p335 = pneg %p257
        $region50: #{tpu_custom_call.1} parent=11 // pred_check_branch
          %337 = sbr.rel (%p335) target = $region52
        $region51: #{tpu_custom_call.1} parent=11 // pred_region
          _
        $region52: #{tpu_custom_call.1} parent=11 // pred_fallthru
          _
      $region12: #{tpu_custom_call.1} parent=5 // pred_fallthru
        _
      %p338 = scmp.lt.s32.totalorder %s21, 2
      // Predicated region
      $region53: #{tpu_custom_call.1} parent=5 // pred_check
        %p339 = pneg %p338
      $region54: #{tpu_custom_call.1} parent=5 // pred_check_branch
        %341 = sbr.rel (%p339) target = $region56
      $region55: #{tpu_custom_call.1} parent=5 // pred_region
        // Predicated region
        $region57: #{tpu_custom_call.1} parent=55 // pred_check
          %p342 = pneg %p41
        $region58: #{tpu_custom_call.1} parent=55 // pred_check_branch
          %344 = sbr.rel (%p342) target = $region60
        $region59: #{tpu_custom_call.1} parent=55 // pred_region
          %p345 = scmp.lt.s32.totalorder %s21, 1
          %s346 = scalar_select %p345, %s21, 1
          %s347 = smul.addr %s346, 54
          %s348 = smul.addr %s347, 8
          %s349 = scalar_lea.vmem %s0, %s348
        $region60: #{tpu_custom_call.1} parent=55 // pred_fallthru
          _
      $region56: #{tpu_custom_call.1} parent=5 // pred_fallthru
        _
      %p350 = scmp.le.s32.totalorder 1, %s21
      %p351 = scmp.lt.s32.totalorder %s21, 3
      %p352 = pnand %p350, %p351
      %p353 = pneg %p352
      // Predicated region
      $region61: #{tpu_custom_call.1} parent=5 // pred_check
        _
      $region62: #{tpu_custom_call.1} parent=5 // pred_check_branch
        %355 = sbr.rel (%p352) target = $region64
      $region63: #{tpu_custom_call.1} parent=5 // pred_region
        %s356 = ssub.s32 %s21, 1
        // Predicated region
        $region65: #{tpu_custom_call.1} parent=63 // pred_check
          %p357 = pneg %p194
        $region66: #{tpu_custom_call.1} parent=63 // pred_check_branch
          %359 = sbr.rel (%p357) target = $region68
        $region67: #{tpu_custom_call.1} parent=63 // pred_region
          %360 = dma.done [#allocation4], 2048
        $region68: #{tpu_custom_call.1} parent=63 // pred_fallthru
          _
        %p361 = scmp.lt.s32.totalorder %s26, 1
        %s362 = scalar_select %p361, %s26, 1
        %s363 = smul.addr %s362, 54
        %s364 = smul.addr %s363, 8
        %s365 = scalar_lea.vmem %s0, %s364
        %p366 = pneg %p47
        %p367 = pneg %p44
        %p368 = pneg %p68
        %p369 = pneg %p65
        %p370 = pneg %p89
        %p371 = pneg %p86
        %p372 = pneg %p110
        %p373 = pneg %p107
        %p374 = pneg %p131
        %p375 = pneg %p128
        %p376 = pneg %p152
        %p377 = pneg %p149
        %p378 = pneg %p173
        %p379 = pneg %p170
        %p380 = pneg %p194
        %p381 = pneg %p191
        %p382 = pneg %p215
        %p383 = pneg %p212
        %p384 = pneg %p236
        %p385 = pneg %p233
        %p386 = pneg %p257
        %p387 = pneg %p254
        %p388 = pneg %p283
        %p389 = pneg %p280
        %s390 = sand.u32 %s270, 1
        %s391 = scalar_lea.sflag [#allocation5], %s390
        %s392 = sand.u32 %s270, 1
        %s393 = smul.addr %s392, 4
        %s394 = scalar_lea.vmem [#allocation6], %s393
        %p395 = scmp.lt.s32.totalorder %s26, 1
        %s396 = scalar_select %p395, %s26, 1
        %s397 = smul.addr %s396, 54
        %s398 = smul.addr %s397, 8
        %s399 = scalar_lea.vmem %s0, %s398
        %v401 = vld [vmem:[%s399] sm:$0xff]
        %v402 = vld [vmem:[%s399 + $0x8] sm:$0xff]
        %v403 = vld [vmem:[%s399 + $0x18] sm:$0xff]
        %v404 = vld [vmem:[%s399 + $0x20] sm:$0xff]
        %v405 = vld [vmem:[%s399 + $0x30] sm:$0xff]
        %v406 = vld [vmem:[%s399 + $0x38] sm:$0xff]
        %v407 = vld [vmem:[%s399 + $0x48] sm:$0xff]
        %v408 = vld [vmem:[%s399 + $0x50] sm:$0xff]
        %v409 = vld [vmem:[%s399 + $0x60] sm:$0xff]
        %v410 = vld [vmem:[%s399 + $0x68] sm:$0xff]
        %v411 = vld [vmem:[%s399 + $0x78] sm:$0xff]
        %v412 = vld [vmem:[%s399 + $0x80] sm:$0xff]
        %v413 = vld [vmem:[%s399 + $0x90] sm:$0xff]
        %v414 = vld [vmem:[%s399 + $0x98] sm:$0xff]
        %v415 = vld [vmem:[%s399 + $0xa8] sm:$0xff]
        %v416 = vld [vmem:[%s399 + $0xb0] sm:$0xff]
        %v417 = vld [vmem:[%s399 + $0xc0] sm:$0xff]
        %v418 = vld [vmem:[%s399 + $0xc8] sm:$0xff]
        %v419 = vld [vmem:[%s399 + $0xd8] sm:$0xff]
        %v420 = vld [vmem:[%s399 + $0xe0] sm:$0xff]
        %v421 = vld [vmem:[%s399 + $0xf0] sm:$0xff]
        %v422 = vld [vmem:[%s399 + $0xf8] sm:$0xff]
        %v423 = vld [vmem:[%s399 + $0x108] sm:$0xff]
        %v424 = vld [vmem:[%s399 + $0x110] sm:$0xff]
        %v425 = vld [vmem:[%s399 + $0x120] sm:$0xff]
        %v426 = vld [vmem:[%s399 + $0x128] sm:$0xff]
        %v427 = vld [vmem:[%s399 + $0x138] sm:$0xff]
        %v428 = vld [vmem:[%s399 + $0x140] sm:$0xff]
        %v429 = vld [vmem:[%s399 + $0x150] sm:$0xff]
        %v430 = vld [vmem:[%s399 + $0x158] sm:$0xff]
        %v431 = vld [vmem:[%s399 + $0x168] sm:$0xff]
        %v432 = vld [vmem:[%s399 + $0x170] sm:$0xff]
        %v433 = vpack.c.bf16 %v402, %v401
        %v434 = vpack.c.bf16 %v404, %v403
        %v435 = vpack.c.bf16 %v406, %v405
        %v436 = vpack.c.bf16 %v408, %v407
        %v437 = vpack.c.bf16 %v410, %v409
        %v438 = vpack.c.bf16 %v412, %v411
        %v439 = vpack.c.bf16 %v414, %v413
        %v440 = vpack.c.bf16 %v416, %v415
        %v441 = vpack.c.bf16 %v418, %v417
        %v442 = vpack.c.bf16 %v420, %v419
        %v443 = vpack.c.bf16 %v422, %v421
        %v444 = vpack.c.bf16 %v424, %v423
        %v445 = vpack.c.bf16 %v426, %v425
        %v446 = vpack.c.bf16 %v428, %v427
        %v447 = vpack.c.bf16 %v430, %v429
        %v448 = vpack.c.bf16 %v432, %v431
        %v449 = vld [vmem:[%s1] sm:$0xf]
        %v450 = vld [vmem:[%s1 + $0x4] sm:$0xf]
        %v451 = vld [vmem:[%s1 + $0x8] sm:$0xf]
        %v452 = vld [vmem:[%s1 + $0xc] sm:$0xf]
        %v453 = vld [vmem:[%s1 + $0x10] sm:$0xf]
        %v454 = vld [vmem:[%s1 + $0x14] sm:$0xf]
        %v455 = vld [vmem:[%s1 + $0x18] sm:$0xf]
        %v456 = vld [vmem:[%s1 + $0x1c] sm:$0xf]
        %v457 = vld [vmem:[%s1 + $0x20] sm:$0xf]
        %v458 = vld [vmem:[%s1 + $0x24] sm:$0xf]
        %v459 = vld [vmem:[%s1 + $0x28] sm:$0xf]
        %v460 = vld [vmem:[%s1 + $0x2c] sm:$0xf]
        %v461 = vld [vmem:[%s1 + $0x30] sm:$0xf]
        %v462 = vld [vmem:[%s1 + $0x34] sm:$0xf]
        %v463 = vld [vmem:[%s1 + $0x38] sm:$0xf]
        %v464 = vld [vmem:[%s1 + $0x3c] sm:$0xf]
        %v465 = vld [vmem:[%s399 + $0x1] sm:$0xff]
        %v466 = vld [vmem:[%s399 + $0x9] sm:$0xff]
        %v467 = vld [vmem:[%s399 + $0x19] sm:$0xff]
        %v468 = vld [vmem:[%s399 + $0x21] sm:$0xff]
        %v469 = vld [vmem:[%s399 + $0x31] sm:$0xff]
        %v470 = vld [vmem:[%s399 + $0x39] sm:$0xff]
        %v471 = vld [vmem:[%s399 + $0x49] sm:$0xff]
        %v472 = vld [vmem:[%s399 + $0x51] sm:$0xff]
        %v473 = vld [vmem:[%s399 + $0x61] sm:$0xff]
        %v474 = vld [vmem:[%s399 + $0x69] sm:$0xff]
        %v475 = vld [vmem:[%s399 + $0x79] sm:$0xff]
        %v476 = vld [vmem:[%s399 + $0x81] sm:$0xff]
        %v477 = vld [vmem:[%s399 + $0x91] sm:$0xff]
        %v478 = vld [vmem:[%s399 + $0x99] sm:$0xff]
        %v479 = vld [vmem:[%s399 + $0xa9] sm:$0xff]
        %v480 = vld [vmem:[%s399 + $0xb1] sm:$0xff]
        %v481 = vld [vmem:[%s399 + $0xc1] sm:$0xff]
        %v482 = vld [vmem:[%s399 + $0xc9] sm:$0xff]
        %v483 = vld [vmem:[%s399 + $0xd9] sm:$0xff]
        %v484 = vld [vmem:[%s399 + $0xe1] sm:$0xff]
        %v485 = vld [vmem:[%s399 + $0xf1] sm:$0xff]
        %v486 = vld [vmem:[%s399 + $0xf9] sm:$0xff]
        %v487 = vld [vmem:[%s399 + $0x109] sm:$0xff]
        %v488 = vld [vmem:[%s399 + $0x111] sm:$0xff]
        %v489 = vld [vmem:[%s399 + $0x121] sm:$0xff]
        %v490 = vld [vmem:[%s399 + $0x129] sm:$0xff]
        %v491 = vld [vmem:[%s399 + $0x139] sm:$0xff]
        %v492 = vld [vmem:[%s399 + $0x141] sm:$0xff]
        %v493 = vld [vmem:[%s399 + $0x151] sm:$0xff]
        %v494 = vld [vmem:[%s399 + $0x159] sm:$0xff]
        %v495 = vld [vmem:[%s399 + $0x169] sm:$0xff]
        %v496 = vld [vmem:[%s399 + $0x171] sm:$0xff]
        %v497 = vpack.c.bf16 %v466, %v465
        %v498 = vpack.c.bf16 %v468, %v467
        %v499 = vpack.c.bf16 %v470, %v469
        %v500 = vpack.c.bf16 %v472, %v471
        %v501 = vpack.c.bf16 %v474, %v473
        %v502 = vpack.c.bf16 %v476, %v475
        %v503 = vpack.c.bf16 %v478, %v477
        %v504 = vpack.c.bf16 %v480, %v479
        %v505 = vpack.c.bf16 %v482, %v481
        %v506 = vpack.c.bf16 %v484, %v483
        %v507 = vpack.c.bf16 %v486, %v485
        %v508 = vpack.c.bf16 %v488, %v487
        %v509 = vpack.c.bf16 %v490, %v489
        %v510 = vpack.c.bf16 %v492, %v491
        %v511 = vpack.c.bf16 %v494, %v493
        %v512 = vpack.c.bf16 %v496, %v495
        %s513 = scalar_lea.vmem %s1, 64
        %v514 = vld [vmem:[%s513] sm:$0xf]
        %v515 = vld [vmem:[%s513 + $0x4] sm:$0xf]
        %v516 = vld [vmem:[%s513 + $0x8] sm:$0xf]
        %v517 = vld [vmem:[%s513 + $0xc] sm:$0xf]
        %v518 = vld [vmem:[%s513 + $0x10] sm:$0xf]
        %v519 = vld [vmem:[%s513 + $0x14] sm:$0xf]
        %v520 = vld [vmem:[%s513 + $0x18] sm:$0xf]
        %v521 = vld [vmem:[%s513 + $0x1c] sm:$0xf]
        %v522 = vld [vmem:[%s513 + $0x20] sm:$0xf]
        %v523 = vld [vmem:[%s513 + $0x24] sm:$0xf]
        %v524 = vld [vmem:[%s513 + $0x28] sm:$0xf]
        %v525 = vld [vmem:[%s513 + $0x2c] sm:$0xf]
        %v526 = vld [vmem:[%s513 + $0x30] sm:$0xf]
        %v527 = vld [vmem:[%s513 + $0x34] sm:$0xf]
        %v528 = vld [vmem:[%s513 + $0x38] sm:$0xf]
        %v529 = vld [vmem:[%s513 + $0x3c] sm:$0xf]
        %v546 = vunpack.c.l.b16 %v514
        %v547 = vunpack.c.l.b16 %v515
        %v548 = vunpack.c.l.b16 %v516
        %v549 = vunpack.c.l.b16 %v517
        %v550 = vunpack.c.l.b16 %v518
        %v551 = vunpack.c.l.b16 %v519
        %v552 = vunpack.c.l.b16 %v520
        %v553 = vunpack.c.l.b16 %v521
        %v554 = vunpack.c.l.b16 %v522
        %v555 = vunpack.c.l.b16 %v523
        %v556 = vunpack.c.l.b16 %v524
        %v557 = vunpack.c.l.b16 %v525
        %v558 = vunpack.c.l.b16 %v526
        %v559 = vunpack.c.l.b16 %v527
        %v560 = vunpack.c.l.b16 %v528
        %v561 = vunpack.c.l.b16 %v529
        %v562 = vpack.c.b16 %v547, %v546
        %v563 = vpack.c.b16 %v549, %v548
        %v564 = vpack.c.b16 %v551, %v550
        %v565 = vpack.c.b16 %v553, %v552
        %v566 = vpack.c.b16 %v555, %v554
        %v567 = vpack.c.b16 %v557, %v556
        %v568 = vpack.c.b16 %v559, %v558
        %v569 = vpack.c.b16 %v561, %v560
        %578 = vmatprep.subr.bf16.mxu0 0
        %579 = vmatpush1.bf16.msra.mxu0 %v562
        %580 = vmatprep.subr.bf16.mxu0 0
        %581 = vmatpush1.bf16.msra.mxu0 %v563
        %582 = vmatprep.subr.bf16.mxu0 0
        %583 = vmatpush1.bf16.msra.mxu0 %v564
        %584 = vmatprep.subr.bf16.mxu0 0
        %585 = vmatpush1.bf16.msra.mxu0 %v565
        %586 = vmatprep.subr.bf16.mxu0 0
        %587 = vmatpush1.bf16.msra.mxu0 %v566
        %588 = vmatprep.subr.bf16.mxu0 0
        %589 = vmatpush1.bf16.msra.mxu0 %v567
        %590 = vmatprep.subr.bf16.mxu0 0
        %591 = vmatpush1.bf16.msra.mxu0 %v568
        %592 = vmatprep.subr.bf16.mxu0 0
        %593 = vmatpush1.bf16.msra.mxu0 %v569
        %594 = vmatprep.subr.bf16.mxu0 0
        %595 = vmatpush1.bf16.msra.mxu0 0
        %596 = vmatprep.subr.bf16.mxu0 0
        %597 = vmatpush1.bf16.msra.mxu0 0
        %598 = vmatprep.subr.bf16.mxu0 0
        %599 = vmatpush1.bf16.msra.mxu0 0
        %600 = vmatprep.subr.bf16.mxu0 0
        %601 = vmatpush1.bf16.msra.mxu0 0
        %602 = vmatprep.subr.bf16.mxu0 0
        %603 = vmatpush1.bf16.msra.mxu0 0
        %604 = vmatprep.subr.bf16.mxu0 0
        %605 = vmatpush1.bf16.msra.mxu0 0
        %606 = vmatprep.subr.bf16.mxu0 0
        %607 = vmatpush1.bf16.msra.mxu0 0
        %608 = vmatprep.subr.bf16.mxu0 0
        %609 = vmatpush1.bf16.msra.mxu0 0
        %610 = vmatprep.mubr.bf16.mxu0 0
        %611 = vmatmul.mubr.bf16.gmra.mrb[0].mxu0 %v497
        %v612 = vpop.f32.mrb[0].mxu0
        %v613 = vadd.f32 0.0, %v612
        %v614 = vpop.f32.mrb[0].mxu0
        %v615 = vpop.f32.mrb[0].mxu0
        %v616 = vadd.f32 0.0, %v615
        %v617 = vpop.f32.mrb[0].mxu0
        %618 = vmatprep.mubr.bf16.mxu0 0
        %619 = vmatmul.mubr.bf16.gmra.mrb[0].mxu0 %v498
        %v620 = vpop.f32.mrb[0].mxu0
        %v621 = vadd.f32 0.0, %v620
        %v622 = vpop.f32.mrb[0].mxu0
        %v623 = vpop.f32.mrb[0].mxu0
        %v624 = vadd.f32 0.0, %v623
        %v625 = vpop.f32.mrb[0].mxu0
        %626 = vmatprep.mubr.bf16.mxu0 0
        %627 = vmatmul.mubr.bf16.gmra.mrb[0].mxu0 %v499
        %v628 = vpop.f32.mrb[0].mxu0
        %v629 = vadd.f32 0.0, %v628
        %v630 = vpop.f32.mrb[0].mxu0
        %v631 = vpop.f32.mrb[0].mxu0
        %v632 = vadd.f32 0.0, %v631
        %v633 = vpop.f32.mrb[0].mxu0
        %634 = vmatprep.mubr.bf16.mxu0 0
        %635 = vmatmul.mubr.bf16.gmra.mrb[0].mxu0 %v500
        %v636 = vpop.f32.mrb[0].mxu0
        %v637 = vadd.f32 0.0, %v636
        %v638 = vpop.f32.mrb[0].mxu0
        %v639 = vpop.f32.mrb[0].mxu0
        %v640 = vadd.f32 0.0, %v639
        %v641 = vpop.f32.mrb[0].mxu0
        %642 = vmatprep.mubr.bf16.mxu0 0
        %643 = vmatmul.mubr.bf16.gmra.mrb[0].mxu0 %v501
        %v644 = vpop.f32.mrb[0].mxu0
        %v645 = vadd.f32 0.0, %v644
        %v646 = vpop.f32.mrb[0].mxu0
        %v647 = vpop.f32.mrb[0].mxu0
        %v648 = vadd.f32 0.0, %v647
        %v649 = vpop.f32.mrb[0].mxu0
        %650 = vmatprep.mubr.bf16.mxu0 0
        %651 = vmatmul.mubr.bf16.gmra.mrb[0].mxu0 %v502
        %v652 = vpop.f32.mrb[0].mxu0
        %v653 = vadd.f32 0.0, %v652
        %v654 = vpop.f32.mrb[0].mxu0
        %v655 = vpop.f32.mrb[0].mxu0
        %v656 = vadd.f32 0.0, %v655
        %v657 = vpop.f32.mrb[0].mxu0
        %658 = vmatprep.mubr.bf16.mxu0 0
        %659 = vmatmul.mubr.bf16.gmra.mrb[0].mxu0 %v503
        %v660 = vpop.f32.mrb[0].mxu0
        %v661 = vadd.f32 0.0, %v660
        %v662 = vpop.f32.mrb[0].mxu0
        %v663 = vpop.f32.mrb[0].mxu0
        %v664 = vadd.f32 0.0, %v663
        %v665 = vpop.f32.mrb[0].mxu0
        %666 = vmatprep.mubr.bf16.mxu0 0
        %667 = vmatmul.mubr.bf16.gmra.mrb[0].mxu0 %v504
        %v668 = vpop.f32.mrb[0].mxu0
        %v669 = vadd.f32 0.0, %v668
        %v670 = vpop.f32.mrb[0].mxu0
        %v671 = vpop.f32.mrb[0].mxu0
        %v672 = vadd.f32 0.0, %v671
        %v673 = vpop.f32.mrb[0].mxu0
        %674 = vmatprep.mubr.bf16.mxu0 0
        %675 = vmatmul.mubr.bf16.gmra.mrb[0].mxu0 %v505
        %v676 = vpop.f32.mrb[0].mxu0
        %v677 = vadd.f32 0.0, %v676
        %v678 = vpop.f32.mrb[0].mxu0
        %v679 = vpop.f32.mrb[0].mxu0
        %v680 = vadd.f32 0.0, %v679
        %v681 = vpop.f32.mrb[0].mxu0
        %682 = vmatprep.mubr.bf16.mxu0 0
        %683 = vmatmul.mubr.bf16.gmra.mrb[0].mxu0 %v506
        %v684 = vpop.f32.mrb[0].mxu0
        %v685 = vadd.f32 0.0, %v684
        %v686 = vpop.f32.mrb[0].mxu0
        %v687 = vpop.f32.mrb[0].mxu0
        %v688 = vadd.f32 0.0, %v687
        %v689 = vpop.f32.mrb[0].mxu0
        %690 = vmatprep.mubr.bf16.mxu0 0
        %691 = vmatmul.mubr.bf16.gmra.mrb[0].mxu0 %v507
        %v692 = vpop.f32.mrb[0].mxu0
        %v693 = vadd.f32 0.0, %v692
        %v694 = vpop.f32.mrb[0].mxu0
        %v695 = vpop.f32.mrb[0].mxu0
        %v696 = vadd.f32 0.0, %v695
        %v697 = vpop.f32.mrb[0].mxu0
        %698 = vmatprep.mubr.bf16.mxu0 0
        %699 = vmatmul.mubr.bf16.gmra.mrb[0].mxu0 %v508
        %v700 = vpop.f32.mrb[0].mxu0
        %v701 = vadd.f32 0.0, %v700
        %v702 = vpop.f32.mrb[0].mxu0
        %v703 = vpop.f32.mrb[0].mxu0
        %v704 = vadd.f32 0.0, %v703
        %v705 = vpop.f32.mrb[0].mxu0
        %706 = vmatprep.mubr.bf16.mxu0 0
        %707 = vmatmul.mubr.bf16.gmra.mrb[0].mxu0 %v509
        %v708 = vpop.f32.mrb[0].mxu0
        %v709 = vadd.f32 0.0, %v708
        %v710 = vpop.f32.mrb[0].mxu0
        %v711 = vpop.f32.mrb[0].mxu0
        %v712 = vadd.f32 0.0, %v711
        %v713 = vpop.f32.mrb[0].mxu0
        %714 = vmatprep.mubr.bf16.mxu0 0
        %715 = vmatmul.mubr.bf16.gmra.mrb[0].mxu0 %v510
        %v716 = vpop.f32.mrb[0].mxu0
        %v717 = vadd.f32 0.0, %v716
        %v718 = vpop.f32.mrb[0].mxu0
        %v719 = vpop.f32.mrb[0].mxu0
        %v720 = vadd.f32 0.0, %v719
        %v721 = vpop.f32.mrb[0].mxu0
        %722 = vmatprep.mubr.bf16.mxu0 0
        %723 = vmatmul.mubr.bf16.gmra.mrb[0].mxu0 %v511
        %v724 = vpop.f32.mrb[0].mxu0
        %v725 = vadd.f32 0.0, %v724
        %v726 = vpop.f32.mrb[0].mxu0
        %v727 = vpop.f32.mrb[0].mxu0
        %v728 = vadd.f32 0.0, %v727
        %v729 = vpop.f32.mrb[0].mxu0
        %730 = vmatprep.mubr.bf16.mxu0 0
        %731 = vmatmul.mubr.bf16.gmra.mrb[0].mxu0 %v512
        %v732 = vpop.f32.mrb[0].mxu0
        %v733 = vadd.f32 0.0, %v732
        %v734 = vpop.f32.mrb[0].mxu0
        %v735 = vpop.f32.mrb[0].mxu0
        %v736 = vadd.f32 0.0, %v735
        %v737 = vpop.f32.mrb[0].mxu0
        %738 = vdwg.mxu0
        %v755 = vunpack.c.l.b16 %v449
        %v756 = vunpack.c.l.b16 %v450
        %v757 = vunpack.c.l.b16 %v451
        %v758 = vunpack.c.l.b16 %v452
        %v759 = vunpack.c.l.b16 %v453
        %v760 = vunpack.c.l.b16 %v454
        %v761 = vunpack.c.l.b16 %v455
        %v762 = vunpack.c.l.b16 %v456
        %v763 = vunpack.c.l.b16 %v457
        %v764 = vunpack.c.l.b16 %v458
        %v765 = vunpack.c.l.b16 %v459
        %v766 = vunpack.c.l.b16 %v460
        %v767 = vunpack.c.l.b16 %v461
        %v768 = vunpack.c.l.b16 %v462
        %v769 = vunpack.c.l.b16 %v463
        %v770 = vunpack.c.l.b16 %v464
        %v771 = vpack.c.b16 %v756, %v755
        %v772 = vpack.c.b16 %v758, %v757
        %v773 = vpack.c.b16 %v760, %v759
        %v774 = vpack.c.b16 %v762, %v761
        %v775 = vpack.c.b16 %v764, %v763
        %v776 = vpack.c.b16 %v766, %v765
        %v777 = vpack.c.b16 %v768, %v767
        %v778 = vpack.c.b16 %v770, %v769
        %787 = vmatprep.subr.bf16.mxu0 0
        %788 = vmatpush1.bf16.msra.mxu0 %v771
        %789 = vmatprep.subr.bf16.mxu0 0
        %790 = vmatpush1.bf16.msra.mxu0 %v772
        %791 = vmatprep.subr.bf16.mxu0 0
        %792 = vmatpush1.bf16.msra.mxu0 %v773
        %793 = vmatprep.subr.bf16.mxu0 0
        %794 = vmatpush1.bf16.msra.mxu0 %v774
        %795 = vmatprep.subr.bf16.mxu0 0
        %796 = vmatpush1.bf16.msra.mxu0 %v775
        %797 = vmatprep.subr.bf16.mxu0 0
        %798 = vmatpush1.bf16.msra.mxu0 %v776
        %799 = vmatprep.subr.bf16.mxu0 0
        %800 = vmatpush1.bf16.msra.mxu0 %v777
        %801 = vmatprep.subr.bf16.mxu0 0
        %802 = vmatpush1.bf16.msra.mxu0 %v778
        %803 = vmatprep.subr.bf16.mxu0 0
        %804 = vmatpush1.bf16.msra.mxu0 0
        %805 = vmatprep.subr.bf16.mxu0 0
        %806 = vmatpush1.bf16.msra.mxu0 0
        %807 = vmatprep.subr.bf16.mxu0 0
        %808 = vmatpush1.bf16.msra.mxu0 0
        %809 = vmatprep.subr.bf16.mxu0 0
        %810 = vmatpush1.bf16.msra.mxu0 0
        %811 = vmatprep.subr.bf16.mxu0 0
        %812 = vmatpush1.bf16.msra.mxu0 0
        %813 = vmatprep.subr.bf16.mxu0 0
        %814 = vmatpush1.bf16.msra.mxu0 0
        %815 = vmatprep.subr.bf16.mxu0 0
        %816 = vmatpush1.bf16.msra.mxu0 0
        %817 = vmatprep.subr.bf16.mxu0 0
        %818 = vmatpush1.bf16.msra.mxu0 0
        %819 = vmatprep.mubr.bf16.mxu0 0
        %820 = vmatmul.mubr.bf16.gmra.mrb[0].mxu0 %v433
        %v821 = vpop.f32.mrb[0].mxu0
        %v822 = vadd.f32 %v613, %v821
        %v823 = vpop.f32.mrb[0].mxu0
        %v824 = vpop.f32.mrb[0].mxu0
        %v825 = vadd.f32 %v616, %v824
        %v826 = vpop.f32.mrb[0].mxu0
        %827 = vmatprep.mubr.bf16.mxu0 0
        %828 = vmatmul.mubr.bf16.gmra.mrb[0].mxu0 %v434
        %v829 = vpop.f32.mrb[0].mxu0
        %v830 = vadd.f32 %v621, %v829
        %v831 = vpop.f32.mrb[0].mxu0
        %v832 = vpop.f32.mrb[0].mxu0
        %v833 = vadd.f32 %v624, %v832
        %v834 = vpop.f32.mrb[0].mxu0
        %835 = vmatprep.mubr.bf16.mxu0 0
        %836 = vmatmul.mubr.bf16.gmra.mrb[0].mxu0 %v435
        %v837 = vpop.f32.mrb[0].mxu0
        %v838 = vadd.f32 %v629, %v837
        %v839 = vpop.f32.mrb[0].mxu0
        %v840 = vpop.f32.mrb[0].mxu0
        %v841 = vadd.f32 %v632, %v840
        %v842 = vpop.f32.mrb[0].mxu0
        %843 = vmatprep.mubr.bf16.mxu0 0
        %844 = vmatmul.mubr.bf16.gmra.mrb[0].mxu0 %v436
        %v845 = vpop.f32.mrb[0].mxu0
        %v846 = vadd.f32 %v637, %v845
        %v847 = vpop.f32.mrb[0].mxu0
        %v848 = vpop.f32.mrb[0].mxu0
        %v849 = vadd.f32 %v640, %v848
        %v850 = vpop.f32.mrb[0].mxu0
        %851 = vmatprep.mubr.bf16.mxu0 0
        %852 = vmatmul.mubr.bf16.gmra.mrb[0].mxu0 %v437
        %v853 = vpop.f32.mrb[0].mxu0
        %v854 = vadd.f32 %v645, %v853
        %v855 = vpop.f32.mrb[0].mxu0
        %v856 = vpop.f32.mrb[0].mxu0
        %v857 = vadd.f32 %v648, %v856
        %v858 = vpop.f32.mrb[0].mxu0
        %859 = vmatprep.mubr.bf16.mxu0 0
        %860 = vmatmul.mubr.bf16.gmra.mrb[0].mxu0 %v438
        %v861 = vpop.f32.mrb[0].mxu0
        %v862 = vadd.f32 %v653, %v861
        %v863 = vpop.f32.mrb[0].mxu0
        %v864 = vpop.f32.mrb[0].mxu0
        %v865 = vadd.f32 %v656, %v864
        %v866 = vpop.f32.mrb[0].mxu0
        %867 = vmatprep.mubr.bf16.mxu0 0
        %868 = vmatmul.mubr.bf16.gmra.mrb[0].mxu0 %v439
        %v869 = vpop.f32.mrb[0].mxu0
        %v870 = vadd.f32 %v661, %v869
        %v871 = vpop.f32.mrb[0].mxu0
        %v872 = vpop.f32.mrb[0].mxu0
        %v873 = vadd.f32 %v664, %v872
        %v874 = vpop.f32.mrb[0].mxu0
        %875 = vmatprep.mubr.bf16.mxu0 0
        %876 = vmatmul.mubr.bf16.gmra.mrb[0].mxu0 %v440
        %v877 = vpop.f32.mrb[0].mxu0
        %v878 = vadd.f32 %v669, %v877
        %v879 = vpop.f32.mrb[0].mxu0
        %v880 = vpop.f32.mrb[0].mxu0
        %v881 = vadd.f32 %v672, %v880
        %v882 = vpop.f32.mrb[0].mxu0
        %883 = vmatprep.mubr.bf16.mxu0 0
        %884 = vmatmul.mubr.bf16.gmra.mrb[0].mxu0 %v441
        %v885 = vpop.f32.mrb[0].mxu0
        %v886 = vadd.f32 %v677, %v885
        %v887 = vpop.f32.mrb[0].mxu0
        %v888 = vpop.f32.mrb[0].mxu0
        %v889 = vadd.f32 %v680, %v888
        %v890 = vpop.f32.mrb[0].mxu0
        %891 = vmatprep.mubr.bf16.mxu0 0
        %892 = vmatmul.mubr.bf16.gmra.mrb[0].mxu0 %v442
        %v893 = vpop.f32.mrb[0].mxu0
        %v894 = vadd.f32 %v685, %v893
        %v895 = vpop.f32.mrb[0].mxu0
        %v896 = vpop.f32.mrb[0].mxu0
        %v897 = vadd.f32 %v688, %v896
        %v898 = vpop.f32.mrb[0].mxu0
        %899 = vmatprep.mubr.bf16.mxu0 0
        %900 = vmatmul.mubr.bf16.gmra.mrb[0].mxu0 %v443
        %v901 = vpop.f32.mrb[0].mxu0
        %v902 = vadd.f32 %v693, %v901
        %v903 = vpop.f32.mrb[0].mxu0
        %v904 = vpop.f32.mrb[0].mxu0
        %v905 = vadd.f32 %v696, %v904
        %v906 = vpop.f32.mrb[0].mxu0
        %907 = vmatprep.mubr.bf16.mxu0 0
        %908 = vmatmul.mubr.bf16.gmra.mrb[0].mxu0 %v444
        %v909 = vpop.f32.mrb[0].mxu0
        %v910 = vadd.f32 %v701, %v909
        %v911 = vpop.f32.mrb[0].mxu0
        %v912 = vpop.f32.mrb[0].mxu0
        %v913 = vadd.f32 %v704, %v912
        %v914 = vpop.f32.mrb[0].mxu0
        %915 = vmatprep.mubr.bf16.mxu0 0
        %916 = vmatmul.mubr.bf16.gmra.mrb[0].mxu0 %v445
        %v917 = vpop.f32.mrb[0].mxu0
        %v918 = vadd.f32 %v709, %v917
        %v919 = vpop.f32.mrb[0].mxu0
        %v920 = vpop.f32.mrb[0].mxu0
        %v921 = vadd.f32 %v712, %v920
        %v922 = vpop.f32.mrb[0].mxu0
        %923 = vmatprep.mubr.bf16.mxu0 0
        %924 = vmatmul.mubr.bf16.gmra.mrb[0].mxu0 %v446
        %v925 = vpop.f32.mrb[0].mxu0
        %v926 = vadd.f32 %v717, %v925
        %v927 = vpop.f32.mrb[0].mxu0
        %v928 = vpop.f32.mrb[0].mxu0
        %v929 = vadd.f32 %v720, %v928
        %v930 = vpop.f32.mrb[0].mxu0
        %931 = vmatprep.mubr.bf16.mxu0 0
        %932 = vmatmul.mubr.bf16.gmra.mrb[0].mxu0 %v447
        %v933 = vpop.f32.mrb[0].mxu0
        %v934 = vadd.f32 %v725, %v933
        %v935 = vpop.f32.mrb[0].mxu0
        %v936 = vpop.f32.mrb[0].mxu0
        %v937 = vadd.f32 %v728, %v936
        %v938 = vpop.f32.mrb[0].mxu0
        %939 = vmatprep.mubr.bf16.mxu0 0
        %940 = vmatmul.mubr.bf16.gmra.mrb[0].mxu0 %v448
        %v941 = vpop.f32.mrb[0].mxu0
        %v942 = vadd.f32 %v733, %v941
        %v943 = vpop.f32.mrb[0].mxu0
        %v944 = vpop.f32.mrb[0].mxu0
        %v945 = vadd.f32 %v736, %v944
        %v946 = vpop.f32.mrb[0].mxu0
        %947 = vdwg.mxu0
        %v948 = vld [vmem:[%s399 + $0x2] sm:$0xff]
        %v949 = vld [vmem:[%s399 + $0xa] sm:$0xff]
        %v950 = vld [vmem:[%s399 + $0x1a] sm:$0xff]
        %v951 = vld [vmem:[%s399 + $0x22] sm:$0xff]
        %v952 = vld [vmem:[%s399 + $0x32] sm:$0xff]
        %v953 = vld [vmem:[%s399 + $0x3a] sm:$0xff]
        %v954 = vld [vmem:[%s399 + $0x4a] sm:$0xff]
        %v955 = vld [vmem:[%s399 + $0x52] sm:$0xff]
        %v956 = vld [vmem:[%s399 + $0x62] sm:$0xff]
        %v957 = vld [vmem:[%s399 + $0x6a] sm:$0xff]
        %v958 = vld [vmem:[%s399 + $0x7a] sm:$0xff]
        %v959 = vld [vmem:[%s399 + $0x82] sm:$0xff]
        %v960 = vld [vmem:[%s399 + $0x92] sm:$0xff]
        %v961 = vld [vmem:[%s399 + $0x9a] sm:$0xff]
        %v962 = vld [vmem:[%s399 + $0xaa] sm:$0xff]
        %v963 = vld [vmem:[%s399 + $0xb2] sm:$0xff]
        %v964 = vld [vmem:[%s399 + $0xc2] sm:$0xff]
        %v965 = vld [vmem:[%s399 + $0xca] sm:$0xff]
        %v966 = vld [vmem:[%s399 + $0xda] sm:$0xff]
        %v967 = vld [vmem:[%s399 + $0xe2] sm:$0xff]
        %v968 = vld [vmem:[%s399 + $0xf2] sm:$0xff]
        %v969 = vld [vmem:[%s399 + $0xfa] sm:$0xff]
        %v970 = vld [vmem:[%s399 + $0x10a] sm:$0xff]
        %v971 = vld [vmem:[%s399 + $0x112] sm:$0xff]
        %v972 = vld [vmem:[%s399 + $0x122] sm:$0xff]
        %v973 = vld [vmem:[%s399 + $0x12a] sm:$0xff]
        %v974 = vld [vmem:[%s399 + $0x13a] sm:$0xff]
        %v975 = vld [vmem:[%s399 + $0x142] sm:$0xff]
        %v976 = vld [vmem:[%s399 + $0x152] sm:$0xff]
        %v977 = vld [vmem:[%s399 + $0x15a] sm:$0xff]
        %v978 = vld [vmem:[%s399 + $0x16a] sm:$0xff]
        %v979 = vld [vmem:[%s399 + $0x172] sm:$0xff]
        %v980 = vpack.c.bf16 %v949, %v948
        %v981 = vpack.c.bf16 %v951, %v950
        %v982 = vpack.c.bf16 %v953, %v952
        %v983 = vpack.c.bf16 %v955, %v954
        %v984 = vpack.c.bf16 %v957, %v956
        %v985 = vpack.c.bf16 %v959, %v958
        %v986 = vpack.c.bf16 %v961, %v960
        %v987 = vpack.c.bf16 %v963, %v962
        %v988 = vpack.c.bf16 %v965, %v964
        %v989 = vpack.c.bf16 %v967, %v966
        %v990 = vpack.c.bf16 %v969, %v968
        %v991 = vpack.c.bf16 %v971, %v970
        %v992 = vpack.c.bf16 %v973, %v972
        %v993 = vpack.c.bf16 %v975, %v974
        %v994 = vpack.c.bf16 %v977, %v976
        %v995 = vpack.c.bf16 %v979, %v978
        %s996 = scalar_lea.vmem %s1, 128
        %v997 = vld [vmem:[%s996] sm:$0xf]
        %v998 = vld [vmem:[%s996 + $0x4] sm:$0xf]
        %v999 = vld [vmem:[%s996 + $0x8] sm:$0xf]
        %v1000 = vld [vmem:[%s996 + $0xc] sm:$0xf]
        %v1001 = vld [vmem:[%s996 + $0x10] sm:$0xf]
        %v1002 = vld [vmem:[%s996 + $0x14] sm:$0xf]
        %v1003 = vld [vmem:[%s996 + $0x18] sm:$0xf]
        %v1004 = vld [vmem:[%s996 + $0x1c] sm:$0xf]
        %v1005 = vld [vmem:[%s996 + $0x20] sm:$0xf]
        %v1006 = vld [vmem:[%s996 + $0x24] sm:$0xf]
        %v1007 = vld [vmem:[%s996 + $0x28] sm:$0xf]
        %v1008 = vld [vmem:[%s996 + $0x2c] sm:$0xf]
        %v1009 = vld [vmem:[%s996 + $0x30] sm:$0xf]
        %v1010 = vld [vmem:[%s996 + $0x34] sm:$0xf]
        %v1011 = vld [vmem:[%s996 + $0x38] sm:$0xf]
        %v1012 = vld [vmem:[%s996 + $0x3c] sm:$0xf]
        %v1029 = vunpack.c.l.b16 %v997
        %v1030 = vunpack.c.l.b16 %v998
        %v1031 = vunpack.c.l.b16 %v999
        %v1032 = vunpack.c.l.b16 %v1000
        %v1033 = vunpack.c.l.b16 %v1001
        %v1034 = vunpack.c.l.b16 %v1002
        %v1035 = vunpack.c.l.b16 %v1003
        %v1036 = vunpack.c.l.b16 %v1004
        %v1037 = vunpack.c.l.b16 %v1005
        %v1038 = vunpack.c.l.b16 %v1006
        %v1039 = vunpack.c.l.b16 %v1007
        %v1040 = vunpack.c.l.b16 %v1008
        %v1041 = vunpack.c.l.b16 %v1009
        %v1042 = vunpack.c.l.b16 %v1010
        %v1043 = vunpack.c.l.b16 %v1011
        %v1044 = vunpack.c.l.b16 %v1012
        %v1045 = vpack.c.b16 %v1030, %v1029
        %v1046 = vpack.c.b16 %v1032, %v1031
        %v1047 = vpack.c.b16 %v1034, %v1033
        %v1048 = vpack.c.b16 %v1036, %v1035
        %v1049 = vpack.c.b16 %v1038, %v1037
        %v1050 = vpack.c.b16 %v1040, %v1039
        %v1051 = vpack.c.b16 %v1042, %v1041
        %v1052 = vpack.c.b16 %v1044, %v1043
        %1061 = vmatprep.subr.bf16.mxu0 0
        %1062 = vmatpush1.bf16.msra.mxu0 %v1045
        %1063 = vmatprep.subr.bf16.mxu0 0
        %1064 = vmatpush1.bf16.msra.mxu0 %v1046
        %1065 = vmatprep.subr.bf16.mxu0 0
        %1066 = vmatpush1.bf16.msra.mxu0 %v1047
        %1067 = vmatprep.subr.bf16.mxu0 0
        %1068 = vmatpush1.bf16.msra.mxu0 %v1048
        %1069 = vmatprep.subr.bf16.mxu0 0
        %1070 = vmatpush1.bf16.msra.mxu0 %v1049
        %1071 = vmatprep.subr.bf16.mxu0 0
        %1072 = vmatpush1.bf16.msra.mxu0 %v1050
        %1073 = vmatprep.subr.bf16.mxu0 0
        %1074 = vmatpush1.bf16.msra.mxu0 %v1051
        %1075 = vmatprep.subr.bf16.mxu0 0
        %1076 = vmatpush1.bf16.msra.mxu0 %v1052
        %1077 = vmatprep.subr.bf16.mxu0 0
        %1078 = vmatpush1.bf16.msra.mxu0 0
        %1079 = vmatprep.subr.bf16.mxu0 0
        %1080 = vmatpush1.bf16.msra.mxu0 0
        %1081 = vmatprep.subr.bf16.mxu0 0
        %1082 = vmatpush1.bf16.msra.mxu0 0
        %1083 = vmatprep.subr.bf16.mxu0 0
        %1084 = vmatpush1.bf16.msra.mxu0 0
        %1085 = vmatprep.subr.bf16.mxu0 0
        %1086 = vmatpush1.bf16.msra.mxu0 0
        %1087 = vmatprep.subr.bf16.mxu0 0
        %1088 = vmatpush1.bf16.msra.mxu0 0
        %1089 = vmatprep.subr.bf16.mxu0 0
        %1090 = vmatpush1.bf16.msra.mxu0 0
        %1091 = vmatprep.subr.bf16.mxu0 0
        %1092 = vmatpush1.bf16.msra.mxu0 0
        %1093 = vmatprep.mubr.bf16.mxu0 0
        %1094 = vmatmul.mubr.bf16.gmra.mrb[0].mxu0 %v980
        %v1095 = vpop.f32.mrb[0].mxu0
        %v1096 = vadd.f32 0.0, %v1095
        %v1097 = vpop.f32.mrb[0].mxu0
        %v1098 = vpop.f32.mrb[0].mxu0
        %v1099 = vadd.f32 0.0, %v1098
        %v1100 = vpop.f32.mrb[0].mxu0
        %1101 = vmatprep.mubr.bf16.mxu0 0
        %1102 = vmatmul.mubr.bf16.gmra.mrb[0].mxu0 %v981
        %v1103 = vpop.f32.mrb[0].mxu0
        %v1104 = vadd.f32 0.0, %v1103
        %v1105 = vpop.f32.mrb[0].mxu0
        %v1106 = vpop.f32.mrb[0].mxu0
        %v1107 = vadd.f32 0.0, %v1106
        %v1108 = vpop.f32.mrb[0].mxu0
        %1109 = vmatprep.mubr.bf16.mxu0 0
        %1110 = vmatmul.mubr.bf16.gmra.mrb[0].mxu0 %v982
        %v1111 = vpop.f32.mrb[0].mxu0
        %v1112 = vadd.f32 0.0, %v1111
        %v1113 = vpop.f32.mrb[0].mxu0
        %v1114 = vpop.f32.mrb[0].mxu0
        %v1115 = vadd.f32 0.0, %v1114
        %v1116 = vpop.f32.mrb[0].mxu0
        %1117 = vmatprep.mubr.bf16.mxu0 0
        %1118 = vmatmul.mubr.bf16.gmra.mrb[0].mxu0 %v983
        %v1119 = vpop.f32.mrb[0].mxu0
        %v1120 = vadd.f32 0.0, %v1119
        %v1121 = vpop.f32.mrb[0].mxu0
        %v1122 = vpop.f32.mrb[0].mxu0
        %v1123 = vadd.f32 0.0, %v1122
        %v1124 = vpop.f32.mrb[0].mxu0
        %1125 = vmatprep.mubr.bf16.mxu0 0
        %1126 = vmatmul.mubr.bf16.gmra.mrb[0].mxu0 %v984
        %v1127 = vpop.f32.mrb[0].mxu0
        %v1128 = vadd.f32 0.0, %v1127
        %v1129 = vpop.f32.mrb[0].mxu0
        %v1130 = vpop.f32.mrb[0].mxu0
        %v1131 = vadd.f32 0.0, %v1130
        %v1132 = vpop.f32.mrb[0].mxu0
        %1133 = vmatprep.mubr.bf16.mxu0 0
        %1134 = vmatmul.mubr.bf16.gmra.mrb[0].mxu0 %v985
        %v1135 = vpop.f32.mrb[0].mxu0
        %v1136 = vadd.f32 0.0, %v1135
        %v1137 = vpop.f32.mrb[0].mxu0
        %v1138 = vpop.f32.mrb[0].mxu0
        %v1139 = vadd.f32 0.0, %v1138
        %v1140 = vpop.f32.mrb[0].mxu0
        %1141 = vmatprep.mubr.bf16.mxu0 0
        %1142 = vmatmul.mubr.bf16.gmra.mrb[0].mxu0 %v986
        %v1143 = vpop.f32.mrb[0].mxu0
        %v1144 = vadd.f32 0.0, %v1143
        %v1145 = vpop.f32.mrb[0].mxu0
        %v1146 = vpop.f32.mrb[0].mxu0
        %v1147 = vadd.f32 0.0, %v1146
        %v1148 = vpop.f32.mrb[0].mxu0
        %1149 = vmatprep.mubr.bf16.mxu0 0
        %1150 = vmatmul.mubr.bf16.gmra.mrb[0].mxu0 %v987
        %v1151 = vpop.f32.mrb[0].mxu0
        %v1152 = vadd.f32 0.0, %v1151
        %v1153 = vpop.f32.mrb[0].mxu0
        %v1154 = vpop.f32.mrb[0].mxu0
        %v1155 = vadd.f32 0.0, %v1154
        %v1156 = vpop.f32.mrb[0].mxu0
        %1157 = vmatprep.mubr.bf16.mxu0 0
        %1158 = vmatmul.mubr.bf16.gmra.mrb[0].mxu0 %v988
        %v1159 = vpop.f32.mrb[0].mxu0
        %v1160 = vadd.f32 0.0, %v1159
        %v1161 = vpop.f32.mrb[0].mxu0
        %v1162 = vpop.f32.mrb[0].mxu0
        %v1163 = vadd.f32 0.0, %v1162
        %v1164 = vpop.f32.mrb[0].mxu0
        %1165 = vmatprep.mubr.bf16.mxu0 0
        %1166 = vmatmul.mubr.bf16.gmra.mrb[0].mxu0 %v989
        %v1167 = vpop.f32.mrb[0].mxu0
        %v1168 = vadd.f32 0.0, %v1167
        %v1169 = vpop.f32.mrb[0].mxu0
        %v1170 = vpop.f32.mrb[0].mxu0
        %v1171 = vadd.f32 0.0, %v1170
        %v1172 = vpop.f32.mrb[0].mxu0
        %1173 = vmatprep.mubr.bf16.mxu0 0
        %1174 = vmatmul.mubr.bf16.gmra.mrb[0].mxu0 %v990
        %v1175 = vpop.f32.mrb[0].mxu0
        %v1176 = vadd.f32 0.0, %v1175
        %v1177 = vpop.f32.mrb[0].mxu0
        %v1178 = vpop.f32.mrb[0].mxu0
        %v1179 = vadd.f32 0.0, %v1178
        %v1180 = vpop.f32.mrb[0].mxu0
        %1181 = vmatprep.mubr.bf16.mxu0 0
        %1182 = vmatmul.mubr.bf16.gmra.mrb[0].mxu0 %v991
        %v1183 = vpop.f32.mrb[0].mxu0
        %v1184 = vadd.f32 0.0, %v1183
        %v1185 = vpop.f32.mrb[0].mxu0
        %v1186 = vpop.f32.mrb[0].mxu0
        %v1187 = vadd.f32 0.0, %v1186
        %v1188 = vpop.f32.mrb[0].mxu0
        %1189 = vmatprep.mubr.bf16.mxu0 0
        %1190 = vmatmul.mubr.bf16.gmra.mrb[0].mxu0 %v992
        %v1191 = vpop.f32.mrb[0].mxu0
        %v1192 = vadd.f32 0.0, %v1191
        %v1193 = vpop.f32.mrb[0].mxu0
        %v1194 = vpop.f32.mrb[0].mxu0
        %v1195 = vadd.f32 0.0, %v1194
        %v1196 = vpop.f32.mrb[0].mxu0
        %1197 = vmatprep.mubr.bf16.mxu0 0
        %1198 = vmatmul.mubr.bf16.gmra.mrb[0].mxu0 %v993
        %v1199 = vpop.f32.mrb[0].mxu0
        %v1200 = vadd.f32 0.0, %v1199
        %v1201 = vpop.f32.mrb[0].mxu0
        %v1202 = vpop.f32.mrb[0].mxu0
        %v1203 = vadd.f32 0.0, %v1202
        %v1204 = vpop.f32.mrb[0].mxu0
        %1205 = vmatprep.mubr.bf16.mxu0 0
        %1206 = vmatmul.mubr.bf16.gmra.mrb[0].mxu0 %v994
        %v1207 = vpop.f32.mrb[0].mxu0
        %v1208 = vadd.f32 0.0, %v1207
        %v1209 = vpop.f32.mrb[0].mxu0
        %v1210 = vpop.f32.mrb[0].mxu0
        %v1211 = vadd.f32 0.0, %v1210
        %v1212 = vpop.f32.mrb[0].mxu0
        %1213 = vmatprep.mubr.bf16.mxu0 0
        %1214 = vmatmul.mubr.bf16.gmra.mrb[0].mxu0 %v995
        %v1215 = vpop.f32.mrb[0].mxu0
        %v1216 = vadd.f32 0.0, %v1215
        %v1217 = vpop.f32.mrb[0].mxu0
        %v1218 = vpop.f32.mrb[0].mxu0
        %v1219 = vadd.f32 0.0, %v1218
        %v1220 = vpop.f32.mrb[0].mxu0
        %1221 = vdwg.mxu0
        %v1222 = vadd.f32 %v822, %v1096
        %v1223 = vadd.f32 %v825, %v1099
        %v1224 = vadd.f32 %v830, %v1104
        %v1225 = vadd.f32 %v833, %v1107
        %v1226 = vadd.f32 %v838, %v1112
        %v1227 = vadd.f32 %v841, %v1115
        %v1228 = vadd.f32 %v846, %v1120
        %v1229 = vadd.f32 %v849, %v1123
        %v1230 = vadd.f32 %v854, %v1128
        %v1231 = vadd.f32 %v857, %v1131
        %v1232 = vadd.f32 %v862, %v1136
        %v1233 = vadd.f32 %v865, %v1139
        %v1234 = vadd.f32 %v870, %v1144
        %v1235 = vadd.f32 %v873, %v1147
        %v1236 = vadd.f32 %v878, %v1152
        %v1237 = vadd.f32 %v881, %v1155
        %v1238 = vadd.f32 %v886, %v1160
        %v1239 = vadd.f32 %v889, %v1163
        %v1240 = vadd.f32 %v894, %v1168
        %v1241 = vadd.f32 %v897, %v1171
        %v1242 = vadd.f32 %v902, %v1176
        %v1243 = vadd.f32 %v905, %v1179
        %v1244 = vadd.f32 %v910, %v1184
        %v1245 = vadd.f32 %v913, %v1187
        %v1246 = vadd.f32 %v918, %v1192
        %v1247 = vadd.f32 %v921, %v1195
        %v1248 = vadd.f32 %v926, %v1200
        %v1249 = vadd.f32 %v929, %v1203
        %v1250 = vadd.f32 %v934, %v1208
        %v1251 = vadd.f32 %v937, %v1211
        %v1252 = vadd.f32 %v942, %v1216
        %v1253 = vadd.f32 %v945, %v1219
        %s1254 = scalar_lea.vmem %s399, 24
        %v1255 = vld [vmem:[%s1254] sm:$0xff]
        %v1256 = vld [vmem:[%s1254 + $0x8] sm:$0xff]
        %v1257 = vld [vmem:[%s1254 + $0x18] sm:$0xff]
        %v1258 = vld [vmem:[%s1254 + $0x20] sm:$0xff]
        %v1259 = vld [vmem:[%s1254 + $0x30] sm:$0xff]
        %v1260 = vld [vmem:[%s1254 + $0x38] sm:$0xff]
        %v1261 = vld [vmem:[%s1254 + $0x48] sm:$0xff]
        %v1262 = vld [vmem:[%s1254 + $0x50] sm:$0xff]
        %v1263 = vld [vmem:[%s1254 + $0x60] sm:$0xff]
        %v1264 = vld [vmem:[%s1254 + $0x68] sm:$0xff]
        %v1265 = vld [vmem:[%s1254 + $0x78] sm:$0xff]
        %v1266 = vld [vmem:[%s1254 + $0x80] sm:$0xff]
        %v1267 = vld [vmem:[%s1254 + $0x90] sm:$0xff]
        %v1268 = vld [vmem:[%s1254 + $0x98] sm:$0xff]
        %v1269 = vld [vmem:[%s1254 + $0xa8] sm:$0xff]
        %v1270 = vld [vmem:[%s1254 + $0xb0] sm:$0xff]
        %v1271 = vld [vmem:[%s1254 + $0xc0] sm:$0xff]
        %v1272 = vld [vmem:[%s1254 + $0xc8] sm:$0xff]
        %v1273 = vld [vmem:[%s1254 + $0xd8] sm:$0xff]
        %v1274 = vld [vmem:[%s1254 + $0xe0] sm:$0xff]
        %v1275 = vld [vmem:[%s1254 + $0xf0] sm:$0xff]
        %v1276 = vld [vmem:[%s1254 + $0xf8] sm:$0xff]
        %v1277 = vld [vmem:[%s1254 + $0x108] sm:$0xff]
        %v1278 = vld [vmem:[%s1254 + $0x110] sm:$0xff]
        %v1279 = vld [vmem:[%s1254 + $0x120] sm:$0xff]
        %v1280 = vld [vmem:[%s1254 + $0x128] sm:$0xff]
        %v1281 = vld [vmem:[%s1254 + $0x138] sm:$0xff]
        %v1282 = vld [vmem:[%s1254 + $0x140] sm:$0xff]
        %v1283 = vld [vmem:[%s1254 + $0x150] sm:$0xff]
        %v1284 = vld [vmem:[%s1254 + $0x158] sm:$0xff]
        %v1285 = vld [vmem:[%s1254 + $0x168] sm:$0xff]
        %v1286 = vld [vmem:[%s1254 + $0x170] sm:$0xff]
        %v1287 = vpack.c.bf16 %v1256, %v1255
        %v1288 = vpack.c.bf16 %v1258, %v1257
        %v1289 = vpack.c.bf16 %v1260, %v1259
        %v1290 = vpack.c.bf16 %v1262, %v1261
        %v1291 = vpack.c.bf16 %v1264, %v1263
        %v1292 = vpack.c.bf16 %v1266, %v1265
        %v1293 = vpack.c.bf16 %v1268, %v1267
        %v1294 = vpack.c.bf16 %v1270, %v1269
        %v1295 = vpack.c.bf16 %v1272, %v1271
        %v1296 = vpack.c.bf16 %v1274, %v1273
        %v1297 = vpack.c.bf16 %v1276, %v1275
        %v1298 = vpack.c.bf16 %v1278, %v1277
        %v1299 = vpack.c.bf16 %v1280, %v1279
        %v1300 = vpack.c.bf16 %v1282, %v1281
        %v1301 = vpack.c.bf16 %v1284, %v1283
        %v1302 = vpack.c.bf16 %v1286, %v1285
        %s1303 = scalar_lea.vmem %s1, 192
        %v1304 = vld [vmem:[%s1303] sm:$0xf]
        %v1305 = vld [vmem:[%s1303 + $0x4] sm:$0xf]
        %v1306 = vld [vmem:[%s1303 + $0x8] sm:$0xf]
        %v1307 = vld [vmem:[%s1303 + $0xc] sm:$0xf]
        %v1308 = vld [vmem:[%s1303 + $0x10] sm:$0xf]
        %v1309 = vld [vmem:[%s1303 + $0x14] sm:$0xf]
        %v1310 = vld [vmem:[%s1303 + $0x18] sm:$0xf]
        %v1311 = vld [vmem:[%s1303 + $0x1c] sm:$0xf]
        %v1312 = vld [vmem:[%s1303 + $0x20] sm:$0xf]
        %v1313 = vld [vmem:[%s1303 + $0x24] sm:$0xf]
        %v1314 = vld [vmem:[%s1303 + $0x28] sm:$0xf]
        %v1315 = vld [vmem:[%s1303 + $0x2c] sm:$0xf]
        %v1316 = vld [vmem:[%s1303 + $0x30] sm:$0xf]
        %v1317 = vld [vmem:[%s1303 + $0x34] sm:$0xf]
        %v1318 = vld [vmem:[%s1303 + $0x38] sm:$0xf]
        %v1319 = vld [vmem:[%s1303 + $0x3c] sm:$0xf]
        %v1336 = vunpack.c.l.b16 %v1304
        %v1337 = vunpack.c.l.b16 %v1305
        %v1338 = vunpack.c.l.b16 %v1306
        %v1339 = vunpack.c.l.b16 %v1307
        %v1340 = vunpack.c.l.b16 %v1308
        %v1341 = vunpack.c.l.b16 %v1309
        %v1342 = vunpack.c.l.b16 %v1310
        %v1343 = vunpack.c.l.b16 %v1311
        %v1344 = vunpack.c.l.b16 %v1312
        %v1345 = vunpack.c.l.b16 %v1313
        %v1346 = vunpack.c.l.b16 %v1314
        %v1347 = vunpack.c.l.b16 %v1315
        %v1348 = vunpack.c.l.b16 %v1316
        %v1349 = vunpack.c.l.b16 %v1317
        %v1350 = vunpack.c.l.b16 %v1318
        %v1351 = vunpack.c.l.b16 %v1319
        %v1352 = vpack.c.b16 %v1337, %v1336
        %v1353 = vpack.c.b16 %v1339, %v1338
        %v1354 = vpack.c.b16 %v1341, %v1340
        %v1355 = vpack.c.b16 %v1343, %v1342
        %v1356 = vpack.c.b16 %v1345, %v1344
        %v1357 = vpack.c.b16 %v1347, %v1346
        %v1358 = vpack.c.b16 %v1349, %v1348
        %v1359 = vpack.c.b16 %v1351, %v1350
        %1368 = vmatprep.subr.bf16.mxu0 0
        %1369 = vmatpush1.bf16.msra.mxu0 %v1352
        %1370 = vmatprep.subr.bf16.mxu0 0
        %1371 = vmatpush1.bf16.msra.mxu0 %v1353
        %1372 = vmatprep.subr.bf16.mxu0 0
        %1373 = vmatpush1.bf16.msra.mxu0 %v1354
        %1374 = vmatprep.subr.bf16.mxu0 0
        %1375 = vmatpush1.bf16.msra.mxu0 %v1355
        %1376 = vmatprep.subr.bf16.mxu0 0
        %1377 = vmatpush1.bf16.msra.mxu0 %v1356
        %1378 = vmatprep.subr.bf16.mxu0 0
        %1379 = vmatpush1.bf16.msra.mxu0 %v1357
        %1380 = vmatprep.subr.bf16.mxu0 0
        %1381 = vmatpush1.bf16.msra.mxu0 %v1358
        %1382 = vmatprep.subr.bf16.mxu0 0
        %1383 = vmatpush1.bf16.msra.mxu0 %v1359
        %1384 = vmatprep.subr.bf16.mxu0 0
        %1385 = vmatpush1.bf16.msra.mxu0 0
        %1386 = vmatprep.subr.bf16.mxu0 0
        %1387 = vmatpush1.bf16.msra.mxu0 0
        %1388 = vmatprep.subr.bf16.mxu0 0
        %1389 = vmatpush1.bf16.msra.mxu0 0
        %1390 = vmatprep.subr.bf16.mxu0 0
        %1391 = vmatpush1.bf16.msra.mxu0 0
        %1392 = vmatprep.subr.bf16.mxu0 0
        %1393 = vmatpush1.bf16.msra.mxu0 0
        %1394 = vmatprep.subr.bf16.mxu0 0
        %1395 = vmatpush1.bf16.msra.mxu0 0
        %1396 = vmatprep.subr.bf16.mxu0 0
        %1397 = vmatpush1.bf16.msra.mxu0 0
        %1398 = vmatprep.subr.bf16.mxu0 0
        %1399 = vmatpush1.bf16.msra.mxu0 0
        %1400 = vmatprep.mubr.bf16.mxu0 0
        %1401 = vmatmul.mubr.bf16.gmra.mrb[0].mxu0 %v1287
        %v1402 = vpop.f32.mrb[0].mxu0
        %v1403 = vadd.f32 0.0, %v1402
        %v1404 = vpop.f32.mrb[0].mxu0
        %v1405 = vpop.f32.mrb[0].mxu0
        %v1406 = vadd.f32 0.0, %v1405
        %v1407 = vpop.f32.mrb[0].mxu0
        %1408 = vmatprep.mubr.bf16.mxu0 0
        %1409 = vmatmul.mubr.bf16.gmra.mrb[0].mxu0 %v1288
        %v1410 = vpop.f32.mrb[0].mxu0
        %v1411 = vadd.f32 0.0, %v1410
        %v1412 = vpop.f32.mrb[0].mxu0
        %v1413 = vpop.f32.mrb[0].mxu0
        %v1414 = vadd.f32 0.0, %v1413
        %v1415 = vpop.f32.mrb[0].mxu0
        %1416 = vmatprep.mubr.bf16.mxu0 0
        %1417 = vmatmul.mubr.bf16.gmra.mrb[0].mxu0 %v1289
        %v1418 = vpop.f32.mrb[0].mxu0
        %v1419 = vadd.f32 0.0, %v1418
        %v1420 = vpop.f32.mrb[0].mxu0
        %v1421 = vpop.f32.mrb[0].mxu0
        %v1422 = vadd.f32 0.0, %v1421
        %v1423 = vpop.f32.mrb[0].mxu0
        %1424 = vmatprep.mubr.bf16.mxu0 0
        %1425 = vmatmul.mubr.bf16.gmra.mrb[0].mxu0 %v1290
        %v1426 = vpop.f32.mrb[0].mxu0
        %v1427 = vadd.f32 0.0, %v1426
        %v1428 = vpop.f32.mrb[0].mxu0
        %v1429 = vpop.f32.mrb[0].mxu0
        %v1430 = vadd.f32 0.0, %v1429
        %v1431 = vpop.f32.mrb[0].mxu0
        %1432 = vmatprep.mubr.bf16.mxu0 0
        %1433 = vmatmul.mubr.bf16.gmra.mrb[0].mxu0 %v1291
        %v1434 = vpop.f32.mrb[0].mxu0
        %v1435 = vadd.f32 0.0, %v1434
        %v1436 = vpop.f32.mrb[0].mxu0
        %v1437 = vpop.f32.mrb[0].mxu0
        %v1438 = vadd.f32 0.0, %v1437
        %v1439 = vpop.f32.mrb[0].mxu0
        %1440 = vmatprep.mubr.bf16.mxu0 0
        %1441 = vmatmul.mubr.bf16.gmra.mrb[0].mxu0 %v1292
        %v1442 = vpop.f32.mrb[0].mxu0
        %v1443 = vadd.f32 0.0, %v1442
        %v1444 = vpop.f32.mrb[0].mxu0
        %v1445 = vpop.f32.mrb[0].mxu0
        %v1446 = vadd.f32 0.0, %v1445
        %v1447 = vpop.f32.mrb[0].mxu0
        %1448 = vmatprep.mubr.bf16.mxu0 0
        %1449 = vmatmul.mubr.bf16.gmra.mrb[0].mxu0 %v1293
        %v1450 = vpop.f32.mrb[0].mxu0
        %v1451 = vadd.f32 0.0, %v1450
        %v1452 = vpop.f32.mrb[0].mxu0
        %v1453 = vpop.f32.mrb[0].mxu0
        %v1454 = vadd.f32 0.0, %v1453
        %v1455 = vpop.f32.mrb[0].mxu0
        %1456 = vmatprep.mubr.bf16.mxu0 0
        %1457 = vmatmul.mubr.bf16.gmra.mrb[0].mxu0 %v1294
        %v1458 = vpop.f32.mrb[0].mxu0
        %v1459 = vadd.f32 0.0, %v1458
        %v1460 = vpop.f32.mrb[0].mxu0
        %v1461 = vpop.f32.mrb[0].mxu0
        %v1462 = vadd.f32 0.0, %v1461
        %v1463 = vpop.f32.mrb[0].mxu0
        %1464 = vmatprep.mubr.bf16.mxu0 0
        %1465 = vmatmul.mubr.bf16.gmra.mrb[0].mxu0 %v1295
        %v1466 = vpop.f32.mrb[0].mxu0
        %v1467 = vadd.f32 0.0, %v1466
        %v1468 = vpop.f32.mrb[0].mxu0
        %v1469 = vpop.f32.mrb[0].mxu0
        %v1470 = vadd.f32 0.0, %v1469
        %v1471 = vpop.f32.mrb[0].mxu0
        %1472 = vmatprep.mubr.bf16.mxu0 0
        %1473 = vmatmul.mubr.bf16.gmra.mrb[0].mxu0 %v1296
        %v1474 = vpop.f32.mrb[0].mxu0
        %v1475 = vadd.f32 0.0, %v1474
        %v1476 = vpop.f32.mrb[0].mxu0
        %v1477 = vpop.f32.mrb[0].mxu0
        %v1478 = vadd.f32 0.0, %v1477
        %v1479 = vpop.f32.mrb[0].mxu0
        %1480 = vmatprep.mubr.bf16.mxu0 0
        %1481 = vmatmul.mubr.bf16.gmra.mrb[0].mxu0 %v1297
        %v1482 = vpop.f32.mrb[0].mxu0
        %v1483 = vadd.f32 0.0, %v1482
        %v1484 = vpop.f32.mrb[0].mxu0
        %v1485 = vpop.f32.mrb[0].mxu0
        %v1486 = vadd.f32 0.0, %v1485
        %v1487 = vpop.f32.mrb[0].mxu0
        %1488 = vmatprep.mubr.bf16.mxu0 0
        %1489 = vmatmul.mubr.bf16.gmra.mrb[0].mxu0 %v1298
        %v1490 = vpop.f32.mrb[0].mxu0
        %v1491 = vadd.f32 0.0, %v1490
        %v1492 = vpop.f32.mrb[0].mxu0
        %v1493 = vpop.f32.mrb[0].mxu0
        %v1494 = vadd.f32 0.0, %v1493
        %v1495 = vpop.f32.mrb[0].mxu0
        %1496 = vmatprep.mubr.bf16.mxu0 0
        %1497 = vmatmul.mubr.bf16.gmra.mrb[0].mxu0 %v1299
        %v1498 = vpop.f32.mrb[0].mxu0
        %v1499 = vadd.f32 0.0, %v1498
        %v1500 = vpop.f32.mrb[0].mxu0
        %v1501 = vpop.f32.mrb[0].mxu0
        %v1502 = vadd.f32 0.0, %v1501
        %v1503 = vpop.f32.mrb[0].mxu0
        %1504 = vmatprep.mubr.bf16.mxu0 0
        %1505 = vmatmul.mubr.bf16.gmra.mrb[0].mxu0 %v1300
        %v1506 = vpop.f32.mrb[0].mxu0
        %v1507 = vadd.f32 0.0, %v1506
        %v1508 = vpop.f32.mrb[0].mxu0
        %v1509 = vpop.f32.mrb[0].mxu0
        %v1510 = vadd.f32 0.0, %v1509
        %v1511 = vpop.f32.mrb[0].mxu0
        %1512 = vmatprep.mubr.bf16.mxu0 0
        %1513 = vmatmul.mubr.bf16.gmra.mrb[0].mxu0 %v1301
        %v1514 = vpop.f32.mrb[0].mxu0
        %v1515 = vadd.f32 0.0, %v1514
        %v1516 = vpop.f32.mrb[0].mxu0
        %v1517 = vpop.f32.mrb[0].mxu0
        %v1518 = vadd.f32 0.0, %v1517
        %v1519 = vpop.f32.mrb[0].mxu0
        %1520 = vmatprep.mubr.bf16.mxu0 0
        %1521 = vmatmul.mubr.bf16.gmra.mrb[0].mxu0 %v1302
        %v1522 = vpop.f32.mrb[0].mxu0
        %v1523 = vadd.f32 0.0, %v1522
        %v1524 = vpop.f32.mrb[0].mxu0
        %v1525 = vpop.f32.mrb[0].mxu0
        %v1526 = vadd.f32 0.0, %v1525
        %v1527 = vpop.f32.mrb[0].mxu0
        %1528 = vdwg.mxu0
        %v1529 = vadd.f32 %v1222, %v1403
        %v1530 = vadd.f32 %v1223, %v1406
        %v1531 = vadd.f32 %v1224, %v1411
        %v1532 = vadd.f32 %v1225, %v1414
        %v1533 = vadd.f32 %v1226, %v1419
        %v1534 = vadd.f32 %v1227, %v1422
        %v1535 = vadd.f32 %v1228, %v1427
        %v1536 = vadd.f32 %v1229, %v1430
        %v1537 = vadd.f32 %v1230, %v1435
        %v1538 = vadd.f32 %v1231, %v1438
        %v1539 = vadd.f32 %v1232, %v1443
        %v1540 = vadd.f32 %v1233, %v1446
        %v1541 = vadd.f32 %v1234, %v1451
        %v1542 = vadd.f32 %v1235, %v1454
        %v1543 = vadd.f32 %v1236, %v1459
        %v1544 = vadd.f32 %v1237, %v1462
        %v1545 = vadd.f32 %v1238, %v1467
        %v1546 = vadd.f32 %v1239, %v1470
        %v1547 = vadd.f32 %v1240, %v1475
        %v1548 = vadd.f32 %v1241, %v1478
        %v1549 = vadd.f32 %v1242, %v1483
        %v1550 = vadd.f32 %v1243, %v1486
        %v1551 = vadd.f32 %v1244, %v1491
        %v1552 = vadd.f32 %v1245, %v1494
        %v1553 = vadd.f32 %v1246, %v1499
        %v1554 = vadd.f32 %v1247, %v1502
        %v1555 = vadd.f32 %v1248, %v1507
        %v1556 = vadd.f32 %v1249, %v1510
        %v1557 = vadd.f32 %v1250, %v1515
        %v1558 = vadd.f32 %v1251, %v1518
        %v1559 = vadd.f32 %v1252, %v1523
        %v1560 = vadd.f32 %v1253, %v1526
        %v1561 = vld [vmem:[%s1254 + $0x1] sm:$0xff]
        %v1562 = vld [vmem:[%s1254 + $0x9] sm:$0xff]
        %v1563 = vld [vmem:[%s1254 + $0x19] sm:$0xff]
        %v1564 = vld [vmem:[%s1254 + $0x21] sm:$0xff]
        %v1565 = vld [vmem:[%s1254 + $0x31] sm:$0xff]
        %v1566 = vld [vmem:[%s1254 + $0x39] sm:$0xff]
        %v1567 = vld [vmem:[%s1254 + $0x49] sm:$0xff]
        %v1568 = vld [vmem:[%s1254 + $0x51] sm:$0xff]
        %v1569 = vld [vmem:[%s1254 + $0x61] sm:$0xff]
        %v1570 = vld [vmem:[%s1254 + $0x69] sm:$0xff]
        %v1571 = vld [vmem:[%s1254 + $0x79] sm:$0xff]
        %v1572 = vld [vmem:[%s1254 + $0x81] sm:$0xff]
        %v1573 = vld [vmem:[%s1254 + $0x91] sm:$0xff]
        %v1574 = vld [vmem:[%s1254 + $0x99] sm:$0xff]
        %v1575 = vld [vmem:[%s1254 + $0xa9] sm:$0xff]
        %v1576 = vld [vmem:[%s1254 + $0xb1] sm:$0xff]
        %v1577 = vld [vmem:[%s1254 + $0xc1] sm:$0xff]
        %v1578 = vld [vmem:[%s1254 + $0xc9] sm:$0xff]
        %v1579 = vld [vmem:[%s1254 + $0xd9] sm:$0xff]
        %v1580 = vld [vmem:[%s1254 + $0xe1] sm:$0xff]
        %v1581 = vld [vmem:[%s1254 + $0xf1] sm:$0xff]
        %v1582 = vld [vmem:[%s1254 + $0xf9] sm:$0xff]
        %v1583 = vld [vmem:[%s1254 + $0x109] sm:$0xff]
        %v1584 = vld [vmem:[%s1254 + $0x111] sm:$0xff]
        %v1585 = vld [vmem:[%s1254 + $0x121] sm:$0xff]
        %v1586 = vld [vmem:[%s1254 + $0x129] sm:$0xff]
        %v1587 = vld [vmem:[%s1254 + $0x139] sm:$0xff]
        %v1588 = vld [vmem:[%s1254 + $0x141] sm:$0xff]
        %v1589 = vld [vmem:[%s1254 + $0x151] sm:$0xff]
        %v1590 = vld [vmem:[%s1254 + $0x159] sm:$0xff]
        %v1591 = vld [vmem:[%s1254 + $0x169] sm:$0xff]
        %v1592 = vld [vmem:[%s1254 + $0x171] sm:$0xff]
        %v1593 = vpack.c.bf16 %v1562, %v1561
        %v1594 = vpack.c.bf16 %v1564, %v1563
        %v1595 = vpack.c.bf16 %v1566, %v1565
        %v1596 = vpack.c.bf16 %v1568, %v1567
        %v1597 = vpack.c.bf16 %v1570, %v1569
        %v1598 = vpack.c.bf16 %v1572, %v1571
        %v1599 = vpack.c.bf16 %v1574, %v1573
        %v1600 = vpack.c.bf16 %v1576, %v1575
        %v1601 = vpack.c.bf16 %v1578, %v1577
        %v1602 = vpack.c.bf16 %v1580, %v1579
        %v1603 = vpack.c.bf16 %v1582, %v1581
        %v1604 = vpack.c.bf16 %v1584, %v1583
        %v1605 = vpack.c.bf16 %v1586, %v1585
        %v1606 = vpack.c.bf16 %v1588, %v1587
        %v1607 = vpack.c.bf16 %v1590, %v1589
        %v1608 = vpack.c.bf16 %v1592, %v1591
        %s1609 = scalar_lea.vmem %s1, 256
        %v1610 = vld [vmem:[%s1609] sm:$0xf]
        %v1611 = vld [vmem:[%s1609 + $0x4] sm:$0xf]
        %v1612 = vld [vmem:[%s1609 + $0x8] sm:$0xf]
        %v1613 = vld [vmem:[%s1609 + $0xc] sm:$0xf]
        %v1614 = vld [vmem:[%s1609 + $0x10] sm:$0xf]
        %v1615 = vld [vmem:[%s1609 + $0x14] sm:$0xf]
        %v1616 = vld [vmem:[%s1609 + $0x18] sm:$0xf]
        %v1617 = vld [vmem:[%s1609 + $0x1c] sm:$0xf]
        %v1618 = vld [vmem:[%s1609 + $0x20] sm:$0xf]
        %v1619 = vld [vmem:[%s1609 + $0x24] sm:$0xf]
        %v1620 = vld [vmem:[%s1609 + $0x28] sm:$0xf]
        %v1621 = vld [vmem:[%s1609 + $0x2c] sm:$0xf]
        %v1622 = vld [vmem:[%s1609 + $0x30] sm:$0xf]
        %v1623 = vld [vmem:[%s1609 + $0x34] sm:$0xf]
        %v1624 = vld [vmem:[%s1609 + $0x38] sm:$0xf]
        %v1625 = vld [vmem:[%s1609 + $0x3c] sm:$0xf]
        %v1642 = vunpack.c.l.b16 %v1610
        %v1643 = vunpack.c.l.b16 %v1611
        %v1644 = vunpack.c.l.b16 %v1612
        %v1645 = vunpack.c.l.b16 %v1613
        %v1646 = vunpack.c.l.b16 %v1614
        %v1647 = vunpack.c.l.b16 %v1615
        %v1648 = vunpack.c.l.b16 %v1616
        %v1649 = vunpack.c.l.b16 %v1617
        %v1650 = vunpack.c.l.b16 %v1618
        %v1651 = vunpack.c.l.b16 %v1619
        %v1652 = vunpack.c.l.b16 %v1620
        %v1653 = vunpack.c.l.b16 %v1621
        %v1654 = vunpack.c.l.b16 %v1622
        %v1655 = vunpack.c.l.b16 %v1623
        %v1656 = vunpack.c.l.b16 %v1624
        %v1657 = vunpack.c.l.b16 %v1625
        %v1658 = vpack.c.b16 %v1643, %v1642
        %v1659 = vpack.c.b16 %v1645, %v1644
        %v1660 = vpack.c.b16 %v1647, %v1646
        %v1661 = vpack.c.b16 %v1649, %v1648
        %v1662 = vpack.c.b16 %v1651, %v1650
        %v1663 = vpack.c.b16 %v1653, %v1652
        %v1664 = vpack.c.b16 %v1655, %v1654
        %v1665 = vpack.c.b16 %v1657, %v1656
        %1674 = vmatprep.subr.bf16.mxu0 0
        %1675 = vmatpush1.bf16.msra.mxu0 %v1658
        %1676 = vmatprep.subr.bf16.mxu0 0
        %1677 = vmatpush1.bf16.msra.mxu0 %v1659
        %1678 = vmatprep.subr.bf16.mxu0 0
        %1679 = vmatpush1.bf16.msra.mxu0 %v1660
        %1680 = vmatprep.subr.bf16.mxu0 0
        %1681 = vmatpush1.bf16.msra.mxu0 %v1661
        %1682 = vmatprep.subr.bf16.mxu0 0
        %1683 = vmatpush1.bf16.msra.mxu0 %v1662
        %1684 = vmatprep.subr.bf16.mxu0 0
        %1685 = vmatpush1.bf16.msra.mxu0 %v1663
        %1686 = vmatprep.subr.bf16.mxu0 0
        %1687 = vmatpush1.bf16.msra.mxu0 %v1664
        %1688 = vmatprep.subr.bf16.mxu0 0
        %1689 = vmatpush1.bf16.msra.mxu0 %v1665
        %1690 = vmatprep.subr.bf16.mxu0 0
        %1691 = vmatpush1.bf16.msra.mxu0 0
        %1692 = vmatprep.subr.bf16.mxu0 0
        %1693 = vmatpush1.bf16.msra.mxu0 0
        %1694 = vmatprep.subr.bf16.mxu0 0
        %1695 = vmatpush1.bf16.msra.mxu0 0
        %1696 = vmatprep.subr.bf16.mxu0 0
        %1697 = vmatpush1.bf16.msra.mxu0 0
        %1698 = vmatprep.subr.bf16.mxu0 0
        %1699 = vmatpush1.bf16.msra.mxu0 0
        %1700 = vmatprep.subr.bf16.mxu0 0
        %1701 = vmatpush1.bf16.msra.mxu0 0
        %1702 = vmatprep.subr.bf16.mxu0 0
        %1703 = vmatpush1.bf16.msra.mxu0 0
        %1704 = vmatprep.subr.bf16.mxu0 0
        %1705 = vmatpush1.bf16.msra.mxu0 0
        %1706 = vmatprep.mubr.bf16.mxu0 0
        %1707 = vmatmul.mubr.bf16.gmra.mrb[0].mxu0 %v1593
        %v1708 = vpop.f32.mrb[0].mxu0
        %v1709 = vadd.f32 0.0, %v1708
        %v1710 = vpop.f32.mrb[0].mxu0
        %v1711 = vpop.f32.mrb[0].mxu0
        %v1712 = vadd.f32 0.0, %v1711
        %v1713 = vpop.f32.mrb[0].mxu0
        %1714 = vmatprep.mubr.bf16.mxu0 0
        %1715 = vmatmul.mubr.bf16.gmra.mrb[0].mxu0 %v1594
        %v1716 = vpop.f32.mrb[0].mxu0
        %v1717 = vadd.f32 0.0, %v1716
        %v1718 = vpop.f32.mrb[0].mxu0
        %v1719 = vpop.f32.mrb[0].mxu0
        %v1720 = vadd.f32 0.0, %v1719
        %v1721 = vpop.f32.mrb[0].mxu0
        %1722 = vmatprep.mubr.bf16.mxu0 0
        %1723 = vmatmul.mubr.bf16.gmra.mrb[0].mxu0 %v1595
        %v1724 = vpop.f32.mrb[0].mxu0
        %v1725 = vadd.f32 0.0, %v1724
        %v1726 = vpop.f32.mrb[0].mxu0
        %v1727 = vpop.f32.mrb[0].mxu0
        %v1728 = vadd.f32 0.0, %v1727
        %v1729 = vpop.f32.mrb[0].mxu0
        %1730 = vmatprep.mubr.bf16.mxu0 0
        %1731 = vmatmul.mubr.bf16.gmra.mrb[0].mxu0 %v1596
        %v1732 = vpop.f32.mrb[0].mxu0
        %v1733 = vadd.f32 0.0, %v1732
        %v1734 = vpop.f32.mrb[0].mxu0
        %v1735 = vpop.f32.mrb[0].mxu0
        %v1736 = vadd.f32 0.0, %v1735
        %v1737 = vpop.f32.mrb[0].mxu0
        %1738 = vmatprep.mubr.bf16.mxu0 0
        %1739 = vmatmul.mubr.bf16.gmra.mrb[0].mxu0 %v1597
        %v1740 = vpop.f32.mrb[0].mxu0
        %v1741 = vadd.f32 0.0, %v1740
        %v1742 = vpop.f32.mrb[0].mxu0
        %v1743 = vpop.f32.mrb[0].mxu0
        %v1744 = vadd.f32 0.0, %v1743
        %v1745 = vpop.f32.mrb[0].mxu0
        %1746 = vmatprep.mubr.bf16.mxu0 0
        %1747 = vmatmul.mubr.bf16.gmra.mrb[0].mxu0 %v1598
        %v1748 = vpop.f32.mrb[0].mxu0
        %v1749 = vadd.f32 0.0, %v1748
        %v1750 = vpop.f32.mrb[0].mxu0
        %v1751 = vpop.f32.mrb[0].mxu0
        %v1752 = vadd.f32 0.0, %v1751
        %v1753 = vpop.f32.mrb[0].mxu0
        %1754 = vmatprep.mubr.bf16.mxu0 0
        %1755 = vmatmul.mubr.bf16.gmra.mrb[0].mxu0 %v1599
        %v1756 = vpop.f32.mrb[0].mxu0
        %v1757 = vadd.f32 0.0, %v1756
        %v1758 = vpop.f32.mrb[0].mxu0
        %v1759 = vpop.f32.mrb[0].mxu0
        %v1760 = vadd.f32 0.0, %v1759
        %v1761 = vpop.f32.mrb[0].mxu0
        %1762 = vmatprep.mubr.bf16.mxu0 0
        %1763 = vmatmul.mubr.bf16.gmra.mrb[0].mxu0 %v1600
        %v1764 = vpop.f32.mrb[0].mxu0
        %v1765 = vadd.f32 0.0, %v1764
        %v1766 = vpop.f32.mrb[0].mxu0
        %v1767 = vpop.f32.mrb[0].mxu0
        %v1768 = vadd.f32 0.0, %v1767
        %v1769 = vpop.f32.mrb[0].mxu0
        %1770 = vmatprep.mubr.bf16.mxu0 0
        %1771 = vmatmul.mubr.bf16.gmra.mrb[0].mxu0 %v1601
        %v1772 = vpop.f32.mrb[0].mxu0
        %v1773 = vadd.f32 0.0, %v1772
        %v1774 = vpop.f32.mrb[0].mxu0
        %v1775 = vpop.f32.mrb[0].mxu0
        %v1776 = vadd.f32 0.0, %v1775
        %v1777 = vpop.f32.mrb[0].mxu0
        %1778 = vmatprep.mubr.bf16.mxu0 0
        %1779 = vmatmul.mubr.bf16.gmra.mrb[0].mxu0 %v1602
        %v1780 = vpop.f32.mrb[0].mxu0
        %v1781 = vadd.f32 0.0, %v1780
        %v1782 = vpop.f32.mrb[0].mxu0
        %v1783 = vpop.f32.mrb[0].mxu0
        %v1784 = vadd.f32 0.0, %v1783
        %v1785 = vpop.f32.mrb[0].mxu0
        %1786 = vmatprep.mubr.bf16.mxu0 0
        %1787 = vmatmul.mubr.bf16.gmra.mrb[0].mxu0 %v1603
        %v1788 = vpop.f32.mrb[0].mxu0
        %v1789 = vadd.f32 0.0, %v1788
        %v1790 = vpop.f32.mrb[0].mxu0
        %v1791 = vpop.f32.mrb[0].mxu0
        %v1792 = vadd.f32 0.0, %v1791
        %v1793 = vpop.f32.mrb[0].mxu0
        %1794 = vmatprep.mubr.bf16.mxu0 0
        %1795 = vmatmul.mubr.bf16.gmra.mrb[0].mxu0 %v1604
        %v1796 = vpop.f32.mrb[0].mxu0
        %v1797 = vadd.f32 0.0, %v1796
        %v1798 = vpop.f32.mrb[0].mxu0
        %v1799 = vpop.f32.mrb[0].mxu0
        %v1800 = vadd.f32 0.0, %v1799
        %v1801 = vpop.f32.mrb[0].mxu0
        %1802 = vmatprep.mubr.bf16.mxu0 0
        %1803 = vmatmul.mubr.bf16.gmra.mrb[0].mxu0 %v1605
        %v1804 = vpop.f32.mrb[0].mxu0
        %v1805 = vadd.f32 0.0, %v1804
        %v1806 = vpop.f32.mrb[0].mxu0
        %v1807 = vpop.f32.mrb[0].mxu0
        %v1808 = vadd.f32 0.0, %v1807
        %v1809 = vpop.f32.mrb[0].mxu0
        %1810 = vmatprep.mubr.bf16.mxu0 0
        %1811 = vmatmul.mubr.bf16.gmra.mrb[0].mxu0 %v1606
        %v1812 = vpop.f32.mrb[0].mxu0
        %v1813 = vadd.f32 0.0, %v1812
        %v1814 = vpop.f32.mrb[0].mxu0
        %v1815 = vpop.f32.mrb[0].mxu0
        %v1816 = vadd.f32 0.0, %v1815
        %v1817 = vpop.f32.mrb[0].mxu0
        %1818 = vmatprep.mubr.bf16.mxu0 0
        %1819 = vmatmul.mubr.bf16.gmra.mrb[0].mxu0 %v1607
        %v1820 = vpop.f32.mrb[0].mxu0
        %v1821 = vadd.f32 0.0, %v1820
        %v1822 = vpop.f32.mrb[0].mxu0
        %v1823 = vpop.f32.mrb[0].mxu0
        %v1824 = vadd.f32 0.0, %v1823
        %v1825 = vpop.f32.mrb[0].mxu0
        %1826 = vmatprep.mubr.bf16.mxu0 0
        %1827 = vmatmul.mubr.bf16.gmra.mrb[0].mxu0 %v1608
        %v1828 = vpop.f32.mrb[0].mxu0
        %v1829 = vadd.f32 0.0, %v1828
        %v1830 = vpop.f32.mrb[0].mxu0
        %v1831 = vpop.f32.mrb[0].mxu0
        %v1832 = vadd.f32 0.0, %v1831
        %v1833 = vpop.f32.mrb[0].mxu0
        %1834 = vdwg.mxu0
        %v1835 = vadd.f32 %v1529, %v1709
        %v1836 = vadd.f32 %v1530, %v1712
        %v1837 = vadd.f32 %v1531, %v1717
        %v1838 = vadd.f32 %v1532, %v1720
        %v1839 = vadd.f32 %v1533, %v1725
        %v1840 = vadd.f32 %v1534, %v1728
        %v1841 = vadd.f32 %v1535, %v1733
        %v1842 = vadd.f32 %v1536, %v1736
        %v1843 = vadd.f32 %v1537, %v1741
        %v1844 = vadd.f32 %v1538, %v1744
        %v1845 = vadd.f32 %v1539, %v1749
        %v1846 = vadd.f32 %v1540, %v1752
        %v1847 = vadd.f32 %v1541, %v1757
        %v1848 = vadd.f32 %v1542, %v1760
        %v1849 = vadd.f32 %v1543, %v1765
        %v1850 = vadd.f32 %v1544, %v1768
        %v1851 = vadd.f32 %v1545, %v1773
        %v1852 = vadd.f32 %v1546, %v1776
        %v1853 = vadd.f32 %v1547, %v1781
        %v1854 = vadd.f32 %v1548, %v1784
        %v1855 = vadd.f32 %v1549, %v1789
        %v1856 = vadd.f32 %v1550, %v1792
        %v1857 = vadd.f32 %v1551, %v1797
        %v1858 = vadd.f32 %v1552, %v1800
        %v1859 = vadd.f32 %v1553, %v1805
        %v1860 = vadd.f32 %v1554, %v1808
        %v1861 = vadd.f32 %v1555, %v1813
        %v1862 = vadd.f32 %v1556, %v1816
        %v1863 = vadd.f32 %v1557, %v1821
        %v1864 = vadd.f32 %v1558, %v1824
        %v1865 = vadd.f32 %v1559, %v1829
        %v1866 = vadd.f32 %v1560, %v1832
        %v1867 = vld [vmem:[%s1254 + $0x2] sm:$0xff]
        %v1868 = vld [vmem:[%s1254 + $0xa] sm:$0xff]
        %v1869 = vld [vmem:[%s1254 + $0x1a] sm:$0xff]
        %v1870 = vld [vmem:[%s1254 + $0x22] sm:$0xff]
        %v1871 = vld [vmem:[%s1254 + $0x32] sm:$0xff]
        %v1872 = vld [vmem:[%s1254 + $0x3a] sm:$0xff]
        %v1873 = vld [vmem:[%s1254 + $0x4a] sm:$0xff]
        %v1874 = vld [vmem:[%s1254 + $0x52] sm:$0xff]
        %v1875 = vld [vmem:[%s1254 + $0x62] sm:$0xff]
        %v1876 = vld [vmem:[%s1254 + $0x6a] sm:$0xff]
        %v1877 = vld [vmem:[%s1254 + $0x7a] sm:$0xff]
        %v1878 = vld [vmem:[%s1254 + $0x82] sm:$0xff]
        %v1879 = vld [vmem:[%s1254 + $0x92] sm:$0xff]
        %v1880 = vld [vmem:[%s1254 + $0x9a] sm:$0xff]
        %v1881 = vld [vmem:[%s1254 + $0xaa] sm:$0xff]
        %v1882 = vld [vmem:[%s1254 + $0xb2] sm:$0xff]
        %v1883 = vld [vmem:[%s1254 + $0xc2] sm:$0xff]
        %v1884 = vld [vmem:[%s1254 + $0xca] sm:$0xff]
        %v1885 = vld [vmem:[%s1254 + $0xda] sm:$0xff]
        %v1886 = vld [vmem:[%s1254 + $0xe2] sm:$0xff]
        %v1887 = vld [vmem:[%s1254 + $0xf2] sm:$0xff]
        %v1888 = vld [vmem:[%s1254 + $0xfa] sm:$0xff]
        %v1889 = vld [vmem:[%s1254 + $0x10a] sm:$0xff]
        %v1890 = vld [vmem:[%s1254 + $0x112] sm:$0xff]
        %v1891 = vld [vmem:[%s1254 + $0x122] sm:$0xff]
        %v1892 = vld [vmem:[%s1254 + $0x12a] sm:$0xff]
        %v1893 = vld [vmem:[%s1254 + $0x13a] sm:$0xff]
        %v1894 = vld [vmem:[%s1254 + $0x142] sm:$0xff]
        %v1895 = vld [vmem:[%s1254 + $0x152] sm:$0xff]
        %v1896 = vld [vmem:[%s1254 + $0x15a] sm:$0xff]
        %v1897 = vld [vmem:[%s1254 + $0x16a] sm:$0xff]
        %v1898 = vld [vmem:[%s1254 + $0x172] sm:$0xff]
        %v1899 = vpack.c.bf16 %v1868, %v1867
        %v1900 = vpack.c.bf16 %v1870, %v1869
        %v1901 = vpack.c.bf16 %v1872, %v1871
        %v1902 = vpack.c.bf16 %v1874, %v1873
        %v1903 = vpack.c.bf16 %v1876, %v1875
        %v1904 = vpack.c.bf16 %v1878, %v1877
        %v1905 = vpack.c.bf16 %v1880, %v1879
        %v1906 = vpack.c.bf16 %v1882, %v1881
        %v1907 = vpack.c.bf16 %v1884, %v1883
        %v1908 = vpack.c.bf16 %v1886, %v1885
        %v1909 = vpack.c.bf16 %v1888, %v1887
        %v1910 = vpack.c.bf16 %v1890, %v1889
        %v1911 = vpack.c.bf16 %v1892, %v1891
        %v1912 = vpack.c.bf16 %v1894, %v1893
        %v1913 = vpack.c.bf16 %v1896, %v1895
        %v1914 = vpack.c.bf16 %v1898, %v1897
        %s1915 = scalar_lea.vmem %s1, 320
        %v1916 = vld [vmem:[%s1915] sm:$0xf]
        %v1917 = vld [vmem:[%s1915 + $0x4] sm:$0xf]
        %v1918 = vld [vmem:[%s1915 + $0x8] sm:$0xf]
        %v1919 = vld [vmem:[%s1915 + $0xc] sm:$0xf]
        %v1920 = vld [vmem:[%s1915 + $0x10] sm:$0xf]
        %v1921 = vld [vmem:[%s1915 + $0x14] sm:$0xf]
        %v1922 = vld [vmem:[%s1915 + $0x18] sm:$0xf]
        %v1923 = vld [vmem:[%s1915 + $0x1c] sm:$0xf]
        %v1924 = vld [vmem:[%s1915 + $0x20] sm:$0xf]
        %v1925 = vld [vmem:[%s1915 + $0x24] sm:$0xf]
        %v1926 = vld [vmem:[%s1915 + $0x28] sm:$0xf]
        %v1927 = vld [vmem:[%s1915 + $0x2c] sm:$0xf]
        %v1928 = vld [vmem:[%s1915 + $0x30] sm:$0xf]
        %v1929 = vld [vmem:[%s1915 + $0x34] sm:$0xf]
        %v1930 = vld [vmem:[%s1915 + $0x38] sm:$0xf]
        %v1931 = vld [vmem:[%s1915 + $0x3c] sm:$0xf]
        %v1948 = vunpack.c.l.b16 %v1916
        %v1949 = vunpack.c.l.b16 %v1917
        %v1950 = vunpack.c.l.b16 %v1918
        %v1951 = vunpack.c.l.b16 %v1919
        %v1952 = vunpack.c.l.b16 %v1920
        %v1953 = vunpack.c.l.b16 %v1921
        %v1954 = vunpack.c.l.b16 %v1922
        %v1955 = vunpack.c.l.b16 %v1923
        %v1956 = vunpack.c.l.b16 %v1924
        %v1957 = vunpack.c.l.b16 %v1925
        %v1958 = vunpack.c.l.b16 %v1926
        %v1959 = vunpack.c.l.b16 %v1927
        %v1960 = vunpack.c.l.b16 %v1928
        %v1961 = vunpack.c.l.b16 %v1929
        %v1962 = vunpack.c.l.b16 %v1930
        %v1963 = vunpack.c.l.b16 %v1931
        %v1964 = vpack.c.b16 %v1949, %v1948
        %v1965 = vpack.c.b16 %v1951, %v1950
        %v1966 = vpack.c.b16 %v1953, %v1952
        %v1967 = vpack.c.b16 %v1955, %v1954
        %v1968 = vpack.c.b16 %v1957, %v1956
        %v1969 = vpack.c.b16 %v1959, %v1958
        %v1970 = vpack.c.b16 %v1961, %v1960
        %v1971 = vpack.c.b16 %v1963, %v1962
        %1980 = vmatprep.subr.bf16.mxu0 0
        %1981 = vmatpush1.bf16.msra.mxu0 %v1964
        %1982 = vmatprep.subr.bf16.mxu0 0
        %1983 = vmatpush1.bf16.msra.mxu0 %v1965
        %1984 = vmatprep.subr.bf16.mxu0 0
        %1985 = vmatpush1.bf16.msra.mxu0 %v1966
        %1986 = vmatprep.subr.bf16.mxu0 0
        %1987 = vmatpush1.bf16.msra.mxu0 %v1967
        %1988 = vmatprep.subr.bf16.mxu0 0
        %1989 = vmatpush1.bf16.msra.mxu0 %v1968
        %1990 = vmatprep.subr.bf16.mxu0 0
        %1991 = vmatpush1.bf16.msra.mxu0 %v1969
        %1992 = vmatprep.subr.bf16.mxu0 0
        %1993 = vmatpush1.bf16.msra.mxu0 %v1970
        %1994 = vmatprep.subr.bf16.mxu0 0
        %1995 = vmatpush1.bf16.msra.mxu0 %v1971
        %1996 = vmatprep.subr.bf16.mxu0 0
        %1997 = vmatpush1.bf16.msra.mxu0 0
        %1998 = vmatprep.subr.bf16.mxu0 0
        %1999 = vmatpush1.bf16.msra.mxu0 0
        %2000 = vmatprep.subr.bf16.mxu0 0
        %2001 = vmatpush1.bf16.msra.mxu0 0
        %2002 = vmatprep.subr.bf16.mxu0 0
        %2003 = vmatpush1.bf16.msra.mxu0 0
        %2004 = vmatprep.subr.bf16.mxu0 0
        %2005 = vmatpush1.bf16.msra.mxu0 0
        %2006 = vmatprep.subr.bf16.mxu0 0
        %2007 = vmatpush1.bf16.msra.mxu0 0
        %2008 = vmatprep.subr.bf16.mxu0 0
        %2009 = vmatpush1.bf16.msra.mxu0 0
        %2010 = vmatprep.subr.bf16.mxu0 0
        %2011 = vmatpush1.bf16.msra.mxu0 0
        %2012 = vmatprep.mubr.bf16.mxu0 0
        %2013 = vmatmul.mubr.bf16.gmra.mrb[0].mxu0 %v1899
        %v2014 = vpop.f32.mrb[0].mxu0
        %v2015 = vadd.f32 0.0, %v2014
        %v2016 = vpop.f32.mrb[0].mxu0
        %v2017 = vpop.f32.mrb[0].mxu0
        %v2018 = vadd.f32 0.0, %v2017
        %v2019 = vpop.f32.mrb[0].mxu0
        %2020 = vmatprep.mubr.bf16.mxu0 0
        %2021 = vmatmul.mubr.bf16.gmra.mrb[0].mxu0 %v1900
        %v2022 = vpop.f32.mrb[0].mxu0
        %v2023 = vadd.f32 0.0, %v2022
        %v2024 = vpop.f32.mrb[0].mxu0
        %v2025 = vpop.f32.mrb[0].mxu0
        %v2026 = vadd.f32 0.0, %v2025
        %v2027 = vpop.f32.mrb[0].mxu0
        %2028 = vmatprep.mubr.bf16.mxu0 0
        %2029 = vmatmul.mubr.bf16.gmra.mrb[0].mxu0 %v1901
        %v2030 = vpop.f32.mrb[0].mxu0
        %v2031 = vadd.f32 0.0, %v2030
        %v2032 = vpop.f32.mrb[0].mxu0
        %v2033 = vpop.f32.mrb[0].mxu0
        %v2034 = vadd.f32 0.0, %v2033
        %v2035 = vpop.f32.mrb[0].mxu0
        %2036 = vmatprep.mubr.bf16.mxu0 0
        %2037 = vmatmul.mubr.bf16.gmra.mrb[0].mxu0 %v1902
        %v2038 = vpop.f32.mrb[0].mxu0
        %v2039 = vadd.f32 0.0, %v2038
        %v2040 = vpop.f32.mrb[0].mxu0
        %v2041 = vpop.f32.mrb[0].mxu0
        %v2042 = vadd.f32 0.0, %v2041
        %v2043 = vpop.f32.mrb[0].mxu0
        %2044 = vmatprep.mubr.bf16.mxu0 0
        %2045 = vmatmul.mubr.bf16.gmra.mrb[0].mxu0 %v1903
        %v2046 = vpop.f32.mrb[0].mxu0
        %v2047 = vadd.f32 0.0, %v2046
        %v2048 = vpop.f32.mrb[0].mxu0
        %v2049 = vpop.f32.mrb[0].mxu0
        %v2050 = vadd.f32 0.0, %v2049
        %v2051 = vpop.f32.mrb[0].mxu0
        %2052 = vmatprep.mubr.bf16.mxu0 0
        %2053 = vmatmul.mubr.bf16.gmra.mrb[0].mxu0 %v1904
        %v2054 = vpop.f32.mrb[0].mxu0
        %v2055 = vadd.f32 0.0, %v2054
        %v2056 = vpop.f32.mrb[0].mxu0
        %v2057 = vpop.f32.mrb[0].mxu0
        %v2058 = vadd.f32 0.0, %v2057
        %v2059 = vpop.f32.mrb[0].mxu0
        %2060 = vmatprep.mubr.bf16.mxu0 0
        %2061 = vmatmul.mubr.bf16.gmra.mrb[0].mxu0 %v1905
        %v2062 = vpop.f32.mrb[0].mxu0
        %v2063 = vadd.f32 0.0, %v2062
        %v2064 = vpop.f32.mrb[0].mxu0
        %v2065 = vpop.f32.mrb[0].mxu0
        %v2066 = vadd.f32 0.0, %v2065
        %v2067 = vpop.f32.mrb[0].mxu0
        %2068 = vmatprep.mubr.bf16.mxu0 0
        %2069 = vmatmul.mubr.bf16.gmra.mrb[0].mxu0 %v1906
        %v2070 = vpop.f32.mrb[0].mxu0
        %v2071 = vadd.f32 0.0, %v2070
        %v2072 = vpop.f32.mrb[0].mxu0
        %v2073 = vpop.f32.mrb[0].mxu0
        %v2074 = vadd.f32 0.0, %v2073
        %v2075 = vpop.f32.mrb[0].mxu0
        %2076 = vmatprep.mubr.bf16.mxu0 0
        %2077 = vmatmul.mubr.bf16.gmra.mrb[0].mxu0 %v1907
        %v2078 = vpop.f32.mrb[0].mxu0
        %v2079 = vadd.f32 0.0, %v2078
        %v2080 = vpop.f32.mrb[0].mxu0
        %v2081 = vpop.f32.mrb[0].mxu0
        %v2082 = vadd.f32 0.0, %v2081
        %v2083 = vpop.f32.mrb[0].mxu0
        %2084 = vmatprep.mubr.bf16.mxu0 0
        %2085 = vmatmul.mubr.bf16.gmra.mrb[0].mxu0 %v1908
        %v2086 = vpop.f32.mrb[0].mxu0
        %v2087 = vadd.f32 0.0, %v2086
        %v2088 = vpop.f32.mrb[0].mxu0
        %v2089 = vpop.f32.mrb[0].mxu0
        %v2090 = vadd.f32 0.0, %v2089
        %v2091 = vpop.f32.mrb[0].mxu0
        %2092 = vmatprep.mubr.bf16.mxu0 0
        %2093 = vmatmul.mubr.bf16.gmra.mrb[0].mxu0 %v1909
        %v2094 = vpop.f32.mrb[0].mxu0
        %v2095 = vadd.f32 0.0, %v2094
        %v2096 = vpop.f32.mrb[0].mxu0
        %v2097 = vpop.f32.mrb[0].mxu0
        %v2098 = vadd.f32 0.0, %v2097
        %v2099 = vpop.f32.mrb[0].mxu0
        %2100 = vmatprep.mubr.bf16.mxu0 0
        %2101 = vmatmul.mubr.bf16.gmra.mrb[0].mxu0 %v1910
        %v2102 = vpop.f32.mrb[0].mxu0
        %v2103 = vadd.f32 0.0, %v2102
        %v2104 = vpop.f32.mrb[0].mxu0
        %v2105 = vpop.f32.mrb[0].mxu0
        %v2106 = vadd.f32 0.0, %v2105
        %v2107 = vpop.f32.mrb[0].mxu0
        %2108 = vmatprep.mubr.bf16.mxu0 0
        %2109 = vmatmul.mubr.bf16.gmra.mrb[0].mxu0 %v1911
        %v2110 = vpop.f32.mrb[0].mxu0
        %v2111 = vadd.f32 0.0, %v2110
        %v2112 = vpop.f32.mrb[0].mxu0
        %v2113 = vpop.f32.mrb[0].mxu0
        %v2114 = vadd.f32 0.0, %v2113
        %v2115 = vpop.f32.mrb[0].mxu0
        %2116 = vmatprep.mubr.bf16.mxu0 0
        %2117 = vmatmul.mubr.bf16.gmra.mrb[0].mxu0 %v1912
        %v2118 = vpop.f32.mrb[0].mxu0
        %v2119 = vadd.f32 0.0, %v2118
        %v2120 = vpop.f32.mrb[0].mxu0
        %v2121 = vpop.f32.mrb[0].mxu0
        %v2122 = vadd.f32 0.0, %v2121
        %v2123 = vpop.f32.mrb[0].mxu0
        %2124 = vmatprep.mubr.bf16.mxu0 0
        %2125 = vmatmul.mubr.bf16.gmra.mrb[0].mxu0 %v1913
        %v2126 = vpop.f32.mrb[0].mxu0
        %v2127 = vadd.f32 0.0, %v2126
        %v2128 = vpop.f32.mrb[0].mxu0
        %v2129 = vpop.f32.mrb[0].mxu0
        %v2130 = vadd.f32 0.0, %v2129
        %v2131 = vpop.f32.mrb[0].mxu0
        %2132 = vmatprep.mubr.bf16.mxu0 0
        %2133 = vmatmul.mubr.bf16.gmra.mrb[0].mxu0 %v1914
        %v2134 = vpop.f32.mrb[0].mxu0
        %v2135 = vadd.f32 0.0, %v2134
        %v2136 = vpop.f32.mrb[0].mxu0
        %v2137 = vpop.f32.mrb[0].mxu0
        %v2138 = vadd.f32 0.0, %v2137
        %v2139 = vpop.f32.mrb[0].mxu0
        %2140 = vdwg.mxu0
        %v2141 = vadd.f32 %v1835, %v2015
        %v2142 = vadd.f32 %v1836, %v2018
        %v2143 = vadd.f32 %v1837, %v2023
        %v2144 = vadd.f32 %v1838, %v2026
        %v2145 = vadd.f32 %v1839, %v2031
        %v2146 = vadd.f32 %v1840, %v2034
        %v2147 = vadd.f32 %v1841, %v2039
        %v2148 = vadd.f32 %v1842, %v2042
        %v2149 = vadd.f32 %v1843, %v2047
        %v2150 = vadd.f32 %v1844, %v2050
        %v2151 = vadd.f32 %v1845, %v2055
        %v2152 = vadd.f32 %v1846, %v2058
        %v2153 = vadd.f32 %v1847, %v2063
        %v2154 = vadd.f32 %v1848, %v2066
        %v2155 = vadd.f32 %v1849, %v2071
        %v2156 = vadd.f32 %v1850, %v2074
        %v2157 = vadd.f32 %v1851, %v2079
        %v2158 = vadd.f32 %v1852, %v2082
        %v2159 = vadd.f32 %v1853, %v2087
        %v2160 = vadd.f32 %v1854, %v2090
        %v2161 = vadd.f32 %v1855, %v2095
        %v2162 = vadd.f32 %v1856, %v2098
        %v2163 = vadd.f32 %v1857, %v2103
        %v2164 = vadd.f32 %v1858, %v2106
        %v2165 = vadd.f32 %v1859, %v2111
        %v2166 = vadd.f32 %v1860, %v2114
        %v2167 = vadd.f32 %v1861, %v2119
        %v2168 = vadd.f32 %v1862, %v2122
        %v2169 = vadd.f32 %v1863, %v2127
        %v2170 = vadd.f32 %v1864, %v2130
        %v2171 = vadd.f32 %v1865, %v2135
        %v2172 = vadd.f32 %v1866, %v2138
        %s2173 = scalar_lea.vmem %s399, 48
        %v2174 = vld [vmem:[%s2173] sm:$0xff]
        %v2175 = vld [vmem:[%s2173 + $0x8] sm:$0xff]
        %v2176 = vld [vmem:[%s2173 + $0x18] sm:$0xff]
        %v2177 = vld [vmem:[%s2173 + $0x20] sm:$0xff]
        %v2178 = vld [vmem:[%s2173 + $0x30] sm:$0xff]
        %v2179 = vld [vmem:[%s2173 + $0x38] sm:$0xff]
        %v2180 = vld [vmem:[%s2173 + $0x48] sm:$0xff]
        %v2181 = vld [vmem:[%s2173 + $0x50] sm:$0xff]
        %v2182 = vld [vmem:[%s2173 + $0x60] sm:$0xff]
        %v2183 = vld [vmem:[%s2173 + $0x68] sm:$0xff]
        %v2184 = vld [vmem:[%s2173 + $0x78] sm:$0xff]
        %v2185 = vld [vmem:[%s2173 + $0x80] sm:$0xff]
        %v2186 = vld [vmem:[%s2173 + $0x90] sm:$0xff]
        %v2187 = vld [vmem:[%s2173 + $0x98] sm:$0xff]
        %v2188 = vld [vmem:[%s2173 + $0xa8] sm:$0xff]
        %v2189 = vld [vmem:[%s2173 + $0xb0] sm:$0xff]
        %v2190 = vld [vmem:[%s2173 + $0xc0] sm:$0xff]
        %v2191 = vld [vmem:[%s2173 + $0xc8] sm:$0xff]
        %v2192 = vld [vmem:[%s2173 + $0xd8] sm:$0xff]
        %v2193 = vld [vmem:[%s2173 + $0xe0] sm:$0xff]
        %v2194 = vld [vmem:[%s2173 + $0xf0] sm:$0xff]
        %v2195 = vld [vmem:[%s2173 + $0xf8] sm:$0xff]
        %v2196 = vld [vmem:[%s2173 + $0x108] sm:$0xff]
        %v2197 = vld [vmem:[%s2173 + $0x110] sm:$0xff]
        %v2198 = vld [vmem:[%s2173 + $0x120] sm:$0xff]
        %v2199 = vld [vmem:[%s2173 + $0x128] sm:$0xff]
        %v2200 = vld [vmem:[%s2173 + $0x138] sm:$0xff]
        %v2201 = vld [vmem:[%s2173 + $0x140] sm:$0xff]
        %v2202 = vld [vmem:[%s2173 + $0x150] sm:$0xff]
        %v2203 = vld [vmem:[%s2173 + $0x158] sm:$0xff]
        %v2204 = vld [vmem:[%s2173 + $0x168] sm:$0xff]
        %v2205 = vld [vmem:[%s2173 + $0x170] sm:$0xff]
        %v2206 = vpack.c.bf16 %v2175, %v2174
        %v2207 = vpack.c.bf16 %v2177, %v2176
        %v2208 = vpack.c.bf16 %v2179, %v2178
        %v2209 = vpack.c.bf16 %v2181, %v2180
        %v2210 = vpack.c.bf16 %v2183, %v2182
        %v2211 = vpack.c.bf16 %v2185, %v2184
        %v2212 = vpack.c.bf16 %v2187, %v2186
        %v2213 = vpack.c.bf16 %v2189, %v2188
        %v2214 = vpack.c.bf16 %v2191, %v2190
        %v2215 = vpack.c.bf16 %v2193, %v2192
        %v2216 = vpack.c.bf16 %v2195, %v2194
        %v2217 = vpack.c.bf16 %v2197, %v2196
        %v2218 = vpack.c.bf16 %v2199, %v2198
        %v2219 = vpack.c.bf16 %v2201, %v2200
        %v2220 = vpack.c.bf16 %v2203, %v2202
        %v2221 = vpack.c.bf16 %v2205, %v2204
        %s2222 = scalar_lea.vmem %s1, 384
        %v2223 = vld [vmem:[%s2222] sm:$0xf]
        %v2224 = vld [vmem:[%s2222 + $0x4] sm:$0xf]
        %v2225 = vld [vmem:[%s2222 + $0x8] sm:$0xf]
        %v2226 = vld [vmem:[%s2222 + $0xc] sm:$0xf]
        %v2227 = vld [vmem:[%s2222 + $0x10] sm:$0xf]
        %v2228 = vld [vmem:[%s2222 + $0x14] sm:$0xf]
        %v2229 = vld [vmem:[%s2222 + $0x18] sm:$0xf]
        %v2230 = vld [vmem:[%s2222 + $0x1c] sm:$0xf]
        %v2231 = vld [vmem:[%s2222 + $0x20] sm:$0xf]
        %v2232 = vld [vmem:[%s2222 + $0x24] sm:$0xf]
        %v2233 = vld [vmem:[%s2222 + $0x28] sm:$0xf]
        %v2234 = vld [vmem:[%s2222 + $0x2c] sm:$0xf]
        %v2235 = vld [vmem:[%s2222 + $0x30] sm:$0xf]
        %v2236 = vld [vmem:[%s2222 + $0x34] sm:$0xf]
        %v2237 = vld [vmem:[%s2222 + $0x38] sm:$0xf]
        %v2238 = vld [vmem:[%s2222 + $0x3c] sm:$0xf]
        %v2255 = vunpack.c.l.b16 %v2223
        %v2256 = vunpack.c.l.b16 %v2224
        %v2257 = vunpack.c.l.b16 %v2225
        %v2258 = vunpack.c.l.b16 %v2226
        %v2259 = vunpack.c.l.b16 %v2227
        %v2260 = vunpack.c.l.b16 %v2228
        %v2261 = vunpack.c.l.b16 %v2229
        %v2262 = vunpack.c.l.b16 %v2230
        %v2263 = vunpack.c.l.b16 %v2231
        %v2264 = vunpack.c.l.b16 %v2232
        %v2265 = vunpack.c.l.b16 %v2233
        %v2266 = vunpack.c.l.b16 %v2234
        %v2267 = vunpack.c.l.b16 %v2235
        %v2268 = vunpack.c.l.b16 %v2236
        %v2269 = vunpack.c.l.b16 %v2237
        %v2270 = vunpack.c.l.b16 %v2238
        %v2271 = vpack.c.b16 %v2256, %v2255
        %v2272 = vpack.c.b16 %v2258, %v2257
        %v2273 = vpack.c.b16 %v2260, %v2259
        %v2274 = vpack.c.b16 %v2262, %v2261
        %v2275 = vpack.c.b16 %v2264, %v2263
        %v2276 = vpack.c.b16 %v2266, %v2265
        %v2277 = vpack.c.b16 %v2268, %v2267
        %v2278 = vpack.c.b16 %v2270, %v2269
        %2287 = vmatprep.subr.bf16.mxu0 0
        %2288 = vmatpush1.bf16.msra.mxu0 %v2271
        %2289 = vmatprep.subr.bf16.mxu0 0
        %2290 = vmatpush1.bf16.msra.mxu0 %v2272
        %2291 = vmatprep.subr.bf16.mxu0 0
        %2292 = vmatpush1.bf16.msra.mxu0 %v2273
        %2293 = vmatprep.subr.bf16.mxu0 0
        %2294 = vmatpush1.bf16.msra.mxu0 %v2274
        %2295 = vmatprep.subr.bf16.mxu0 0
        %2296 = vmatpush1.bf16.msra.mxu0 %v2275
        %2297 = vmatprep.subr.bf16.mxu0 0
        %2298 = vmatpush1.bf16.msra.mxu0 %v2276
        %2299 = vmatprep.subr.bf16.mxu0 0
        %2300 = vmatpush1.bf16.msra.mxu0 %v2277
        %2301 = vmatprep.subr.bf16.mxu0 0
        %2302 = vmatpush1.bf16.msra.mxu0 %v2278
        %2303 = vmatprep.subr.bf16.mxu0 0
        %2304 = vmatpush1.bf16.msra.mxu0 0
        %2305 = vmatprep.subr.bf16.mxu0 0
        %2306 = vmatpush1.bf16.msra.mxu0 0
        %2307 = vmatprep.subr.bf16.mxu0 0
        %2308 = vmatpush1.bf16.msra.mxu0 0
        %2309 = vmatprep.subr.bf16.mxu0 0
        %2310 = vmatpush1.bf16.msra.mxu0 0
        %2311 = vmatprep.subr.bf16.mxu0 0
        %2312 = vmatpush1.bf16.msra.mxu0 0
        %2313 = vmatprep.subr.bf16.mxu0 0
        %2314 = vmatpush1.bf16.msra.mxu0 0
        %2315 = vmatprep.subr.bf16.mxu0 0
        %2316 = vmatpush1.bf16.msra.mxu0 0
        %2317 = vmatprep.subr.bf16.mxu0 0
        %2318 = vmatpush1.bf16.msra.mxu0 0
        %2319 = vmatprep.mubr.bf16.mxu0 0
        %2320 = vmatmul.mubr.bf16.gmra.mrb[0].mxu0 %v2206
        %v2321 = vpop.f32.mrb[0].mxu0
        %v2322 = vadd.f32 0.0, %v2321
        %v2323 = vpop.f32.mrb[0].mxu0
        %v2324 = vpop.f32.mrb[0].mxu0
        %v2325 = vadd.f32 0.0, %v2324
        %v2326 = vpop.f32.mrb[0].mxu0
        %2327 = vmatprep.mubr.bf16.mxu0 0
        %2328 = vmatmul.mubr.bf16.gmra.mrb[0].mxu0 %v2207
        %v2329 = vpop.f32.mrb[0].mxu0
        %v2330 = vadd.f32 0.0, %v2329
        %v2331 = vpop.f32.mrb[0].mxu0
        %v2332 = vpop.f32.mrb[0].mxu0
        %v2333 = vadd.f32 0.0, %v2332
        %v2334 = vpop.f32.mrb[0].mxu0
        %2335 = vmatprep.mubr.bf16.mxu0 0
        %2336 = vmatmul.mubr.bf16.gmra.mrb[0].mxu0 %v2208
        %v2337 = vpop.f32.mrb[0].mxu0
        %v2338 = vadd.f32 0.0, %v2337
        %v2339 = vpop.f32.mrb[0].mxu0
        %v2340 = vpop.f32.mrb[0].mxu0
        %v2341 = vadd.f32 0.0, %v2340
        %v2342 = vpop.f32.mrb[0].mxu0
        %2343 = vmatprep.mubr.bf16.mxu0 0
        %2344 = vmatmul.mubr.bf16.gmra.mrb[0].mxu0 %v2209
        %v2345 = vpop.f32.mrb[0].mxu0
        %v2346 = vadd.f32 0.0, %v2345
        %v2347 = vpop.f32.mrb[0].mxu0
        %v2348 = vpop.f32.mrb[0].mxu0
        %v2349 = vadd.f32 0.0, %v2348
        %v2350 = vpop.f32.mrb[0].mxu0
        %2351 = vmatprep.mubr.bf16.mxu0 0
        %2352 = vmatmul.mubr.bf16.gmra.mrb[0].mxu0 %v2210
        %v2353 = vpop.f32.mrb[0].mxu0
        %v2354 = vadd.f32 0.0, %v2353
        %v2355 = vpop.f32.mrb[0].mxu0
        %v2356 = vpop.f32.mrb[0].mxu0
        %v2357 = vadd.f32 0.0, %v2356
        %v2358 = vpop.f32.mrb[0].mxu0
        %2359 = vmatprep.mubr.bf16.mxu0 0
        %2360 = vmatmul.mubr.bf16.gmra.mrb[0].mxu0 %v2211
        %v2361 = vpop.f32.mrb[0].mxu0
        %v2362 = vadd.f32 0.0, %v2361
        %v2363 = vpop.f32.mrb[0].mxu0
        %v2364 = vpop.f32.mrb[0].mxu0
        %v2365 = vadd.f32 0.0, %v2364
        %v2366 = vpop.f32.mrb[0].mxu0
        %2367 = vmatprep.mubr.bf16.mxu0 0
        %2368 = vmatmul.mubr.bf16.gmra.mrb[0].mxu0 %v2212
        %v2369 = vpop.f32.mrb[0].mxu0
        %v2370 = vadd.f32 0.0, %v2369
        %v2371 = vpop.f32.mrb[0].mxu0
        %v2372 = vpop.f32.mrb[0].mxu0
        %v2373 = vadd.f32 0.0, %v2372
        %v2374 = vpop.f32.mrb[0].mxu0
        %2375 = vmatprep.mubr.bf16.mxu0 0
        %2376 = vmatmul.mubr.bf16.gmra.mrb[0].mxu0 %v2213
        %v2377 = vpop.f32.mrb[0].mxu0
        %v2378 = vadd.f32 0.0, %v2377
        %v2379 = vpop.f32.mrb[0].mxu0
        %v2380 = vpop.f32.mrb[0].mxu0
        %v2381 = vadd.f32 0.0, %v2380
        %v2382 = vpop.f32.mrb[0].mxu0
        %2383 = vmatprep.mubr.bf16.mxu0 0
        %2384 = vmatmul.mubr.bf16.gmra.mrb[0].mxu0 %v2214
        %v2385 = vpop.f32.mrb[0].mxu0
        %v2386 = vadd.f32 0.0, %v2385
        %v2387 = vpop.f32.mrb[0].mxu0
        %v2388 = vpop.f32.mrb[0].mxu0
        %v2389 = vadd.f32 0.0, %v2388
        %v2390 = vpop.f32.mrb[0].mxu0
        %2391 = vmatprep.mubr.bf16.mxu0 0
        %2392 = vmatmul.mubr.bf16.gmra.mrb[0].mxu0 %v2215
        %v2393 = vpop.f32.mrb[0].mxu0
        %v2394 = vadd.f32 0.0, %v2393
        %v2395 = vpop.f32.mrb[0].mxu0
        %v2396 = vpop.f32.mrb[0].mxu0
        %v2397 = vadd.f32 0.0, %v2396
        %v2398 = vpop.f32.mrb[0].mxu0
        %2399 = vmatprep.mubr.bf16.mxu0 0
        %2400 = vmatmul.mubr.bf16.gmra.mrb[0].mxu0 %v2216
        %v2401 = vpop.f32.mrb[0].mxu0
        %v2402 = vadd.f32 0.0, %v2401
        %v2403 = vpop.f32.mrb[0].mxu0
        %v2404 = vpop.f32.mrb[0].mxu0
        %v2405 = vadd.f32 0.0, %v2404
        %v2406 = vpop.f32.mrb[0].mxu0
        %2407 = vmatprep.mubr.bf16.mxu0 0
        %2408 = vmatmul.mubr.bf16.gmra.mrb[0].mxu0 %v2217
        %v2409 = vpop.f32.mrb[0].mxu0
        %v2410 = vadd.f32 0.0, %v2409
        %v2411 = vpop.f32.mrb[0].mxu0
        %v2412 = vpop.f32.mrb[0].mxu0
        %v2413 = vadd.f32 0.0, %v2412
        %v2414 = vpop.f32.mrb[0].mxu0
        %2415 = vmatprep.mubr.bf16.mxu0 0
        %2416 = vmatmul.mubr.bf16.gmra.mrb[0].mxu0 %v2218
        %v2417 = vpop.f32.mrb[0].mxu0
        %v2418 = vadd.f32 0.0, %v2417
        %v2419 = vpop.f32.mrb[0].mxu0
        %v2420 = vpop.f32.mrb[0].mxu0
        %v2421 = vadd.f32 0.0, %v2420
        %v2422 = vpop.f32.mrb[0].mxu0
        %2423 = vmatprep.mubr.bf16.mxu0 0
        %2424 = vmatmul.mubr.bf16.gmra.mrb[0].mxu0 %v2219
        %v2425 = vpop.f32.mrb[0].mxu0
        %v2426 = vadd.f32 0.0, %v2425
        %v2427 = vpop.f32.mrb[0].mxu0
        %v2428 = vpop.f32.mrb[0].mxu0
        %v2429 = vadd.f32 0.0, %v2428
        %v2430 = vpop.f32.mrb[0].mxu0
        %2431 = vmatprep.mubr.bf16.mxu0 0
        %2432 = vmatmul.mubr.bf16.gmra.mrb[0].mxu0 %v2220
        %v2433 = vpop.f32.mrb[0].mxu0
        %v2434 = vadd.f32 0.0, %v2433
        %v2435 = vpop.f32.mrb[0].mxu0
        %v2436 = vpop.f32.mrb[0].mxu0
        %v2437 = vadd.f32 0.0, %v2436
        %v2438 = vpop.f32.mrb[0].mxu0
        %2439 = vmatprep.mubr.bf16.mxu0 0
        %2440 = vmatmul.mubr.bf16.gmra.mrb[0].mxu0 %v2221
        %v2441 = vpop.f32.mrb[0].mxu0
        %v2442 = vadd.f32 0.0, %v2441
        %v2443 = vpop.f32.mrb[0].mxu0
        %v2444 = vpop.f32.mrb[0].mxu0
        %v2445 = vadd.f32 0.0, %v2444
        %v2446 = vpop.f32.mrb[0].mxu0
        %2447 = vdwg.mxu0
        %v2448 = vadd.f32 %v2141, %v2322
        %v2449 = vadd.f32 %v2142, %v2325
        %v2450 = vadd.f32 %v2143, %v2330
        %v2451 = vadd.f32 %v2144, %v2333
        %v2452 = vadd.f32 %v2145, %v2338
        %v2453 = vadd.f32 %v2146, %v2341
        %v2454 = vadd.f32 %v2147, %v2346
        %v2455 = vadd.f32 %v2148, %v2349
        %v2456 = vadd.f32 %v2149, %v2354
        %v2457 = vadd.f32 %v2150, %v2357
        %v2458 = vadd.f32 %v2151, %v2362
        %v2459 = vadd.f32 %v2152, %v2365
        %v2460 = vadd.f32 %v2153, %v2370
        %v2461 = vadd.f32 %v2154, %v2373
        %v2462 = vadd.f32 %v2155, %v2378
        %v2463 = vadd.f32 %v2156, %v2381
        %v2464 = vadd.f32 %v2157, %v2386
        %v2465 = vadd.f32 %v2158, %v2389
        %v2466 = vadd.f32 %v2159, %v2394
        %v2467 = vadd.f32 %v2160, %v2397
        %v2468 = vadd.f32 %v2161, %v2402
        %v2469 = vadd.f32 %v2162, %v2405
        %v2470 = vadd.f32 %v2163, %v2410
        %v2471 = vadd.f32 %v2164, %v2413
        %v2472 = vadd.f32 %v2165, %v2418
        %v2473 = vadd.f32 %v2166, %v2421
        %v2474 = vadd.f32 %v2167, %v2426
        %v2475 = vadd.f32 %v2168, %v2429
        %v2476 = vadd.f32 %v2169, %v2434
        %v2477 = vadd.f32 %v2170, %v2437
        %v2478 = vadd.f32 %v2171, %v2442
        %v2479 = vadd.f32 %v2172, %v2445
        %v2480 = vld [vmem:[%s2173 + $0x1] sm:$0xff]
        %v2481 = vld [vmem:[%s2173 + $0x9] sm:$0xff]
        %v2482 = vld [vmem:[%s2173 + $0x19] sm:$0xff]
        %v2483 = vld [vmem:[%s2173 + $0x21] sm:$0xff]
        %v2484 = vld [vmem:[%s2173 + $0x31] sm:$0xff]
        %v2485 = vld [vmem:[%s2173 + $0x39] sm:$0xff]
        %v2486 = vld [vmem:[%s2173 + $0x49] sm:$0xff]
        %v2487 = vld [vmem:[%s2173 + $0x51] sm:$0xff]
        %v2488 = vld [vmem:[%s2173 + $0x61] sm:$0xff]
        %v2489 = vld [vmem:[%s2173 + $0x69] sm:$0xff]
        %v2490 = vld [vmem:[%s2173 + $0x79] sm:$0xff]
        %v2491 = vld [vmem:[%s2173 + $0x81] sm:$0xff]
        %v2492 = vld [vmem:[%s2173 + $0x91] sm:$0xff]
        %v2493 = vld [vmem:[%s2173 + $0x99] sm:$0xff]
        %v2494 = vld [vmem:[%s2173 + $0xa9] sm:$0xff]
        %v2495 = vld [vmem:[%s2173 + $0xb1] sm:$0xff]
        %v2496 = vld [vmem:[%s2173 + $0xc1] sm:$0xff]
        %v2497 = vld [vmem:[%s2173 + $0xc9] sm:$0xff]
        %v2498 = vld [vmem:[%s2173 + $0xd9] sm:$0xff]
        %v2499 = vld [vmem:[%s2173 + $0xe1] sm:$0xff]
        %v2500 = vld [vmem:[%s2173 + $0xf1] sm:$0xff]
        %v2501 = vld [vmem:[%s2173 + $0xf9] sm:$0xff]
        %v2502 = vld [vmem:[%s2173 + $0x109] sm:$0xff]
        %v2503 = vld [vmem:[%s2173 + $0x111] sm:$0xff]
        %v2504 = vld [vmem:[%s2173 + $0x121] sm:$0xff]
        %v2505 = vld [vmem:[%s2173 + $0x129] sm:$0xff]
        %v2506 = vld [vmem:[%s2173 + $0x139] sm:$0xff]
        %v2507 = vld [vmem:[%s2173 + $0x141] sm:$0xff]
        %v2508 = vld [vmem:[%s2173 + $0x151] sm:$0xff]
        %v2509 = vld [vmem:[%s2173 + $0x159] sm:$0xff]
        %v2510 = vld [vmem:[%s2173 + $0x169] sm:$0xff]
        %v2511 = vld [vmem:[%s2173 + $0x171] sm:$0xff]
        %v2512 = vpack.c.bf16 %v2481, %v2480
        %v2513 = vpack.c.bf16 %v2483, %v2482
        %v2514 = vpack.c.bf16 %v2485, %v2484
        %v2515 = vpack.c.bf16 %v2487, %v2486
        %v2516 = vpack.c.bf16 %v2489, %v2488
        %v2517 = vpack.c.bf16 %v2491, %v2490
        %v2518 = vpack.c.bf16 %v2493, %v2492
        %v2519 = vpack.c.bf16 %v2495, %v2494
        %v2520 = vpack.c.bf16 %v2497, %v2496
        %v2521 = vpack.c.bf16 %v2499, %v2498
        %v2522 = vpack.c.bf16 %v2501, %v2500
        %v2523 = vpack.c.bf16 %v2503, %v2502
        %v2524 = vpack.c.bf16 %v2505, %v2504
        %v2525 = vpack.c.bf16 %v2507, %v2506
        %v2526 = vpack.c.bf16 %v2509, %v2508
        %v2527 = vpack.c.bf16 %v2511, %v2510
        %s2528 = scalar_lea.vmem %s1, 448
        %v2529 = vld [vmem:[%s2528] sm:$0xf]
        %v2530 = vld [vmem:[%s2528 + $0x4] sm:$0xf]
        %v2531 = vld [vmem:[%s2528 + $0x8] sm:$0xf]
        %v2532 = vld [vmem:[%s2528 + $0xc] sm:$0xf]
        %v2533 = vld [vmem:[%s2528 + $0x10] sm:$0xf]
        %v2534 = vld [vmem:[%s2528 + $0x14] sm:$0xf]
        %v2535 = vld [vmem:[%s2528 + $0x18] sm:$0xf]
        %v2536 = vld [vmem:[%s2528 + $0x1c] sm:$0xf]
        %v2537 = vld [vmem:[%s2528 + $0x20] sm:$0xf]
        %v2538 = vld [vmem:[%s2528 + $0x24] sm:$0xf]
        %v2539 = vld [vmem:[%s2528 + $0x28] sm:$0xf]
        %v2540 = vld [vmem:[%s2528 + $0x2c] sm:$0xf]
        %v2541 = vld [vmem:[%s2528 + $0x30] sm:$0xf]
        %v2542 = vld [vmem:[%s2528 + $0x34] sm:$0xf]
        %v2543 = vld [vmem:[%s2528 + $0x38] sm:$0xf]
        %v2544 = vld [vmem:[%s2528 + $0x3c] sm:$0xf]
        %v2561 = vunpack.c.l.b16 %v2529
        %v2562 = vunpack.c.l.b16 %v2530
        %v2563 = vunpack.c.l.b16 %v2531
        %v2564 = vunpack.c.l.b16 %v2532
        %v2565 = vunpack.c.l.b16 %v2533
        %v2566 = vunpack.c.l.b16 %v2534
        %v2567 = vunpack.c.l.b16 %v2535
        %v2568 = vunpack.c.l.b16 %v2536
        %v2569 = vunpack.c.l.b16 %v2537
        %v2570 = vunpack.c.l.b16 %v2538
        %v2571 = vunpack.c.l.b16 %v2539
        %v2572 = vunpack.c.l.b16 %v2540
        %v2573 = vunpack.c.l.b16 %v2541
        %v2574 = vunpack.c.l.b16 %v2542
        %v2575 = vunpack.c.l.b16 %v2543
        %v2576 = vunpack.c.l.b16 %v2544
        %v2577 = vpack.c.b16 %v2562, %v2561
        %v2578 = vpack.c.b16 %v2564, %v2563
        %v2579 = vpack.c.b16 %v2566, %v2565
        %v2580 = vpack.c.b16 %v2568, %v2567
        %v2581 = vpack.c.b16 %v2570, %v2569
        %v2582 = vpack.c.b16 %v2572, %v2571
        %v2583 = vpack.c.b16 %v2574, %v2573
        %v2584 = vpack.c.b16 %v2576, %v2575
        %2593 = vmatprep.subr.bf16.mxu0 0
        %2594 = vmatpush1.bf16.msra.mxu0 %v2577
        %2595 = vmatprep.subr.bf16.mxu0 0
        %2596 = vmatpush1.bf16.msra.mxu0 %v2578
        %2597 = vmatprep.subr.bf16.mxu0 0
        %2598 = vmatpush1.bf16.msra.mxu0 %v2579
        %2599 = vmatprep.subr.bf16.mxu0 0
        %2600 = vmatpush1.bf16.msra.mxu0 %v2580
        %2601 = vmatprep.subr.bf16.mxu0 0
        %2602 = vmatpush1.bf16.msra.mxu0 %v2581
        %2603 = vmatprep.subr.bf16.mxu0 0
        %2604 = vmatpush1.bf16.msra.mxu0 %v2582
        %2605 = vmatprep.subr.bf16.mxu0 0
        %2606 = vmatpush1.bf16.msra.mxu0 %v2583
        %2607 = vmatprep.subr.bf16.mxu0 0
        %2608 = vmatpush1.bf16.msra.mxu0 %v2584
        %2609 = vmatprep.subr.bf16.mxu0 0
        %2610 = vmatpush1.bf16.msra.mxu0 0
        %2611 = vmatprep.subr.bf16.mxu0 0
        %2612 = vmatpush1.bf16.msra.mxu0 0
        %2613 = vmatprep.subr.bf16.mxu0 0
        %2614 = vmatpush1.bf16.msra.mxu0 0
        %2615 = vmatprep.subr.bf16.mxu0 0
        %2616 = vmatpush1.bf16.msra.mxu0 0
        %2617 = vmatprep.subr.bf16.mxu0 0
        %2618 = vmatpush1.bf16.msra.mxu0 0
        %2619 = vmatprep.subr.bf16.mxu0 0
        %2620 = vmatpush1.bf16.msra.mxu0 0
        %2621 = vmatprep.subr.bf16.mxu0 0
        %2622 = vmatpush1.bf16.msra.mxu0 0
        %2623 = vmatprep.subr.bf16.mxu0 0
        %2624 = vmatpush1.bf16.msra.mxu0 0
        %2625 = vmatprep.mubr.bf16.mxu0 0
        %2626 = vmatmul.mubr.bf16.gmra.mrb[0].mxu0 %v2512
        %v2627 = vpop.f32.mrb[0].mxu0
        %v2628 = vadd.f32 0.0, %v2627
        %v2629 = vpop.f32.mrb[0].mxu0
        %v2630 = vpop.f32.mrb[0].mxu0
        %v2631 = vadd.f32 0.0, %v2630
        %v2632 = vpop.f32.mrb[0].mxu0
        %2633 = vmatprep.mubr.bf16.mxu0 0
        %2634 = vmatmul.mubr.bf16.gmra.mrb[0].mxu0 %v2513
        %v2635 = vpop.f32.mrb[0].mxu0
        %v2636 = vadd.f32 0.0, %v2635
        %v2637 = vpop.f32.mrb[0].mxu0
        %v2638 = vpop.f32.mrb[0].mxu0
        %v2639 = vadd.f32 0.0, %v2638
        %v2640 = vpop.f32.mrb[0].mxu0
        %2641 = vmatprep.mubr.bf16.mxu0 0
        %2642 = vmatmul.mubr.bf16.gmra.mrb[0].mxu0 %v2514
        %v2643 = vpop.f32.mrb[0].mxu0
        %v2644 = vadd.f32 0.0, %v2643
        %v2645 = vpop.f32.mrb[0].mxu0
        %v2646 = vpop.f32.mrb[0].mxu0
        %v2647 = vadd.f32 0.0, %v2646
        %v2648 = vpop.f32.mrb[0].mxu0
        %2649 = vmatprep.mubr.bf16.mxu0 0
        %2650 = vmatmul.mubr.bf16.gmra.mrb[0].mxu0 %v2515
        %v2651 = vpop.f32.mrb[0].mxu0
        %v2652 = vadd.f32 0.0, %v2651
        %v2653 = vpop.f32.mrb[0].mxu0
        %v2654 = vpop.f32.mrb[0].mxu0
        %v2655 = vadd.f32 0.0, %v2654
        %v2656 = vpop.f32.mrb[0].mxu0
        %2657 = vmatprep.mubr.bf16.mxu0 0
        %2658 = vmatmul.mubr.bf16.gmra.mrb[0].mxu0 %v2516
        %v2659 = vpop.f32.mrb[0].mxu0
        %v2660 = vadd.f32 0.0, %v2659
        %v2661 = vpop.f32.mrb[0].mxu0
        %v2662 = vpop.f32.mrb[0].mxu0
        %v2663 = vadd.f32 0.0, %v2662
        %v2664 = vpop.f32.mrb[0].mxu0
        %2665 = vmatprep.mubr.bf16.mxu0 0
        %2666 = vmatmul.mubr.bf16.gmra.mrb[0].mxu0 %v2517
        %v2667 = vpop.f32.mrb[0].mxu0
        %v2668 = vadd.f32 0.0, %v2667
        %v2669 = vpop.f32.mrb[0].mxu0
        %v2670 = vpop.f32.mrb[0].mxu0
        %v2671 = vadd.f32 0.0, %v2670
        %v2672 = vpop.f32.mrb[0].mxu0
        %2673 = vmatprep.mubr.bf16.mxu0 0
        %2674 = vmatmul.mubr.bf16.gmra.mrb[0].mxu0 %v2518
        %v2675 = vpop.f32.mrb[0].mxu0
        %v2676 = vadd.f32 0.0, %v2675
        %v2677 = vpop.f32.mrb[0].mxu0
        %v2678 = vpop.f32.mrb[0].mxu0
        %v2679 = vadd.f32 0.0, %v2678
        %v2680 = vpop.f32.mrb[0].mxu0
        %2681 = vmatprep.mubr.bf16.mxu0 0
        %2682 = vmatmul.mubr.bf16.gmra.mrb[0].mxu0 %v2519
        %v2683 = vpop.f32.mrb[0].mxu0
        %v2684 = vadd.f32 0.0, %v2683
        %v2685 = vpop.f32.mrb[0].mxu0
        %v2686 = vpop.f32.mrb[0].mxu0
        %v2687 = vadd.f32 0.0, %v2686
        %v2688 = vpop.f32.mrb[0].mxu0
        %2689 = vmatprep.mubr.bf16.mxu0 0
        %2690 = vmatmul.mubr.bf16.gmra.mrb[0].mxu0 %v2520
        %v2691 = vpop.f32.mrb[0].mxu0
        %v2692 = vadd.f32 0.0, %v2691
        %v2693 = vpop.f32.mrb[0].mxu0
        %v2694 = vpop.f32.mrb[0].mxu0
        %v2695 = vadd.f32 0.0, %v2694
        %v2696 = vpop.f32.mrb[0].mxu0
        %2697 = vmatprep.mubr.bf16.mxu0 0
        %2698 = vmatmul.mubr.bf16.gmra.mrb[0].mxu0 %v2521
        %v2699 = vpop.f32.mrb[0].mxu0
        %v2700 = vadd.f32 0.0, %v2699
        %v2701 = vpop.f32.mrb[0].mxu0
        %v2702 = vpop.f32.mrb[0].mxu0
        %v2703 = vadd.f32 0.0, %v2702
        %v2704 = vpop.f32.mrb[0].mxu0
        %2705 = vmatprep.mubr.bf16.mxu0 0
        %2706 = vmatmul.mubr.bf16.gmra.mrb[0].mxu0 %v2522
        %v2707 = vpop.f32.mrb[0].mxu0
        %v2708 = vadd.f32 0.0, %v2707
        %v2709 = vpop.f32.mrb[0].mxu0
        %v2710 = vpop.f32.mrb[0].mxu0
        %v2711 = vadd.f32 0.0, %v2710
        %v2712 = vpop.f32.mrb[0].mxu0
        %2713 = vmatprep.mubr.bf16.mxu0 0
        %2714 = vmatmul.mubr.bf16.gmra.mrb[0].mxu0 %v2523
        %v2715 = vpop.f32.mrb[0].mxu0
        %v2716 = vadd.f32 0.0, %v2715
        %v2717 = vpop.f32.mrb[0].mxu0
        %v2718 = vpop.f32.mrb[0].mxu0
        %v2719 = vadd.f32 0.0, %v2718
        %v2720 = vpop.f32.mrb[0].mxu0
        %2721 = vmatprep.mubr.bf16.mxu0 0
        %2722 = vmatmul.mubr.bf16.gmra.mrb[0].mxu0 %v2524
        %v2723 = vpop.f32.mrb[0].mxu0
        %v2724 = vadd.f32 0.0, %v2723
        %v2725 = vpop.f32.mrb[0].mxu0
        %v2726 = vpop.f32.mrb[0].mxu0
        %v2727 = vadd.f32 0.0, %v2726
        %v2728 = vpop.f32.mrb[0].mxu0
        %2729 = vmatprep.mubr.bf16.mxu0 0
        %2730 = vmatmul.mubr.bf16.gmra.mrb[0].mxu0 %v2525
        %v2731 = vpop.f32.mrb[0].mxu0
        %v2732 = vadd.f32 0.0, %v2731
        %v2733 = vpop.f32.mrb[0].mxu0
        %v2734 = vpop.f32.mrb[0].mxu0
        %v2735 = vadd.f32 0.0, %v2734
        %v2736 = vpop.f32.mrb[0].mxu0
        %2737 = vmatprep.mubr.bf16.mxu0 0
        %2738 = vmatmul.mubr.bf16.gmra.mrb[0].mxu0 %v2526
        %v2739 = vpop.f32.mrb[0].mxu0
        %v2740 = vadd.f32 0.0, %v2739
        %v2741 = vpop.f32.mrb[0].mxu0
        %v2742 = vpop.f32.mrb[0].mxu0
        %v2743 = vadd.f32 0.0, %v2742
        %v2744 = vpop.f32.mrb[0].mxu0
        %2745 = vmatprep.mubr.bf16.mxu0 0
        %2746 = vmatmul.mubr.bf16.gmra.mrb[0].mxu0 %v2527
        %v2747 = vpop.f32.mrb[0].mxu0
        %v2748 = vadd.f32 0.0, %v2747
        %v2749 = vpop.f32.mrb[0].mxu0
        %v2750 = vpop.f32.mrb[0].mxu0
        %v2751 = vadd.f32 0.0, %v2750
        %v2752 = vpop.f32.mrb[0].mxu0
        %2753 = vdwg.mxu0
        %v2754 = vadd.f32 %v2448, %v2628
        %v2755 = vadd.f32 %v2449, %v2631
        %v2756 = vadd.f32 %v2450, %v2636
        %v2757 = vadd.f32 %v2451, %v2639
        %v2758 = vadd.f32 %v2452, %v2644
        %v2759 = vadd.f32 %v2453, %v2647
        %v2760 = vadd.f32 %v2454, %v2652
        %v2761 = vadd.f32 %v2455, %v2655
        %v2762 = vadd.f32 %v2456, %v2660
        %v2763 = vadd.f32 %v2457, %v2663
        %v2764 = vadd.f32 %v2458, %v2668
        %v2765 = vadd.f32 %v2459, %v2671
        %v2766 = vadd.f32 %v2460, %v2676
        %v2767 = vadd.f32 %v2461, %v2679
        %v2768 = vadd.f32 %v2462, %v2684
        %v2769 = vadd.f32 %v2463, %v2687
        %v2770 = vadd.f32 %v2464, %v2692
        %v2771 = vadd.f32 %v2465, %v2695
        %v2772 = vadd.f32 %v2466, %v2700
        %v2773 = vadd.f32 %v2467, %v2703
        %v2774 = vadd.f32 %v2468, %v2708
        %v2775 = vadd.f32 %v2469, %v2711
        %v2776 = vadd.f32 %v2470, %v2716
        %v2777 = vadd.f32 %v2471, %v2719
        %v2778 = vadd.f32 %v2472, %v2724
        %v2779 = vadd.f32 %v2473, %v2727
        %v2780 = vadd.f32 %v2474, %v2732
        %v2781 = vadd.f32 %v2475, %v2735
        %v2782 = vadd.f32 %v2476, %v2740
        %v2783 = vadd.f32 %v2477, %v2743
        %v2784 = vadd.f32 %v2478, %v2748
        %v2785 = vadd.f32 %v2479, %v2751
        %v2786 = vld [vmem:[%s2173 + $0x2] sm:$0xff]
        %v2787 = vld [vmem:[%s2173 + $0xa] sm:$0xff]
        %v2788 = vld [vmem:[%s2173 + $0x1a] sm:$0xff]
        %v2789 = vld [vmem:[%s2173 + $0x22] sm:$0xff]
        %v2790 = vld [vmem:[%s2173 + $0x32] sm:$0xff]
        %v2791 = vld [vmem:[%s2173 + $0x3a] sm:$0xff]
        %v2792 = vld [vmem:[%s2173 + $0x4a] sm:$0xff]
        %v2793 = vld [vmem:[%s2173 + $0x52] sm:$0xff]
        %v2794 = vld [vmem:[%s2173 + $0x62] sm:$0xff]
        %v2795 = vld [vmem:[%s2173 + $0x6a] sm:$0xff]
        %v2796 = vld [vmem:[%s2173 + $0x7a] sm:$0xff]
        %v2797 = vld [vmem:[%s2173 + $0x82] sm:$0xff]
        %v2798 = vld [vmem:[%s2173 + $0x92] sm:$0xff]
        %v2799 = vld [vmem:[%s2173 + $0x9a] sm:$0xff]
        %v2800 = vld [vmem:[%s2173 + $0xaa] sm:$0xff]
        %v2801 = vld [vmem:[%s2173 + $0xb2] sm:$0xff]
        %v2802 = vld [vmem:[%s2173 + $0xc2] sm:$0xff]
        %v2803 = vld [vmem:[%s2173 + $0xca] sm:$0xff]
        %v2804 = vld [vmem:[%s2173 + $0xda] sm:$0xff]
        %v2805 = vld [vmem:[%s2173 + $0xe2] sm:$0xff]
        %v2806 = vld [vmem:[%s2173 + $0xf2] sm:$0xff]
        %v2807 = vld [vmem:[%s2173 + $0xfa] sm:$0xff]
        %v2808 = vld [vmem:[%s2173 + $0x10a] sm:$0xff]
        %v2809 = vld [vmem:[%s2173 + $0x112] sm:$0xff]
        %v2810 = vld [vmem:[%s2173 + $0x122] sm:$0xff]
        %v2811 = vld [vmem:[%s2173 + $0x12a] sm:$0xff]
        %v2812 = vld [vmem:[%s2173 + $0x13a] sm:$0xff]
        %v2813 = vld [vmem:[%s2173 + $0x142] sm:$0xff]
        %v2814 = vld [vmem:[%s2173 + $0x152] sm:$0xff]
        %v2815 = vld [vmem:[%s2173 + $0x15a] sm:$0xff]
        %v2816 = vld [vmem:[%s2173 + $0x16a] sm:$0xff]
        %v2817 = vld [vmem:[%s2173 + $0x172] sm:$0xff]
        %v2818 = vpack.c.bf16 %v2787, %v2786
        %v2819 = vpack.c.bf16 %v2789, %v2788
        %v2820 = vpack.c.bf16 %v2791, %v2790
        %v2821 = vpack.c.bf16 %v2793, %v2792
        %v2822 = vpack.c.bf16 %v2795, %v2794
        %v2823 = vpack.c.bf16 %v2797, %v2796
        %v2824 = vpack.c.bf16 %v2799, %v2798
        %v2825 = vpack.c.bf16 %v2801, %v2800
        %v2826 = vpack.c.bf16 %v2803, %v2802
        %v2827 = vpack.c.bf16 %v2805, %v2804
        %v2828 = vpack.c.bf16 %v2807, %v2806
        %v2829 = vpack.c.bf16 %v2809, %v2808
        %v2830 = vpack.c.bf16 %v2811, %v2810
        %v2831 = vpack.c.bf16 %v2813, %v2812
        %v2832 = vpack.c.bf16 %v2815, %v2814
        %v2833 = vpack.c.bf16 %v2817, %v2816
        %s2834 = scalar_lea.vmem %s1, 512
        %v2835 = vld [vmem:[%s2834] sm:$0xf]
        %v2836 = vld [vmem:[%s2834 + $0x4] sm:$0xf]
        %v2837 = vld [vmem:[%s2834 + $0x8] sm:$0xf]
        %v2838 = vld [vmem:[%s2834 + $0xc] sm:$0xf]
        %v2839 = vld [vmem:[%s2834 + $0x10] sm:$0xf]
        %v2840 = vld [vmem:[%s2834 + $0x14] sm:$0xf]
        %v2841 = vld [vmem:[%s2834 + $0x18] sm:$0xf]
        %v2842 = vld [vmem:[%s2834 + $0x1c] sm:$0xf]
        %v2843 = vld [vmem:[%s2834 + $0x20] sm:$0xf]
        %v2844 = vld [vmem:[%s2834 + $0x24] sm:$0xf]
        %v2845 = vld [vmem:[%s2834 + $0x28] sm:$0xf]
        %v2846 = vld [vmem:[%s2834 + $0x2c] sm:$0xf]
        %v2847 = vld [vmem:[%s2834 + $0x30] sm:$0xf]
        %v2848 = vld [vmem:[%s2834 + $0x34] sm:$0xf]
        %v2849 = vld [vmem:[%s2834 + $0x38] sm:$0xf]
        %v2850 = vld [vmem:[%s2834 + $0x3c] sm:$0xf]
        %v2867 = vunpack.c.l.b16 %v2835
        %v2868 = vunpack.c.l.b16 %v2836
        %v2869 = vunpack.c.l.b16 %v2837
        %v2870 = vunpack.c.l.b16 %v2838
        %v2871 = vunpack.c.l.b16 %v2839
        %v2872 = vunpack.c.l.b16 %v2840
        %v2873 = vunpack.c.l.b16 %v2841
        %v2874 = vunpack.c.l.b16 %v2842
        %v2875 = vunpack.c.l.b16 %v2843
        %v2876 = vunpack.c.l.b16 %v2844
        %v2877 = vunpack.c.l.b16 %v2845
        %v2878 = vunpack.c.l.b16 %v2846
        %v2879 = vunpack.c.l.b16 %v2847
        %v2880 = vunpack.c.l.b16 %v2848
        %v2881 = vunpack.c.l.b16 %v2849
        %v2882 = vunpack.c.l.b16 %v2850
        %v2883 = vpack.c.b16 %v2868, %v2867
        %v2884 = vpack.c.b16 %v2870, %v2869
        %v2885 = vpack.c.b16 %v2872, %v2871
        %v2886 = vpack.c.b16 %v2874, %v2873
        %v2887 = vpack.c.b16 %v2876, %v2875
        %v2888 = vpack.c.b16 %v2878, %v2877
        %v2889 = vpack.c.b16 %v2880, %v2879
        %v2890 = vpack.c.b16 %v2882, %v2881
        %2899 = vmatprep.subr.bf16.mxu0 0
        %2900 = vmatpush1.bf16.msra.mxu0 %v2883
        %2901 = vmatprep.subr.bf16.mxu0 0
        %2902 = vmatpush1.bf16.msra.mxu0 %v2884
        %2903 = vmatprep.subr.bf16.mxu0 0
        %2904 = vmatpush1.bf16.msra.mxu0 %v2885
        %2905 = vmatprep.subr.bf16.mxu0 0
        %2906 = vmatpush1.bf16.msra.mxu0 %v2886
        %2907 = vmatprep.subr.bf16.mxu0 0
        %2908 = vmatpush1.bf16.msra.mxu0 %v2887
        %2909 = vmatprep.subr.bf16.mxu0 0
        %2910 = vmatpush1.bf16.msra.mxu0 %v2888
        %2911 = vmatprep.subr.bf16.mxu0 0
        %2912 = vmatpush1.bf16.msra.mxu0 %v2889
        %2913 = vmatprep.subr.bf16.mxu0 0
        %2914 = vmatpush1.bf16.msra.mxu0 %v2890
        %2915 = vmatprep.subr.bf16.mxu0 0
        %2916 = vmatpush1.bf16.msra.mxu0 0
        %2917 = vmatprep.subr.bf16.mxu0 0
        %2918 = vmatpush1.bf16.msra.mxu0 0
        %2919 = vmatprep.subr.bf16.mxu0 0
        %2920 = vmatpush1.bf16.msra.mxu0 0
        %2921 = vmatprep.subr.bf16.mxu0 0
        %2922 = vmatpush1.bf16.msra.mxu0 0
        %2923 = vmatprep.subr.bf16.mxu0 0
        %2924 = vmatpush1.bf16.msra.mxu0 0
        %2925 = vmatprep.subr.bf16.mxu0 0
        %2926 = vmatpush1.bf16.msra.mxu0 0
        %2927 = vmatprep.subr.bf16.mxu0 0
        %2928 = vmatpush1.bf16.msra.mxu0 0
        %2929 = vmatprep.subr.bf16.mxu0 0
        %2930 = vmatpush1.bf16.msra.mxu0 0
        %2931 = vmatprep.mubr.bf16.mxu0 0
        %2932 = vmatmul.mubr.bf16.gmra.mrb[0].mxu0 %v2818
        %v2933 = vpop.f32.mrb[0].mxu0
        %v2934 = vadd.f32 0.0, %v2933
        %v2935 = vpop.f32.mrb[0].mxu0
        %v2936 = vpop.f32.mrb[0].mxu0
        %v2937 = vadd.f32 0.0, %v2936
        %v2938 = vpop.f32.mrb[0].mxu0
        %2939 = vmatprep.mubr.bf16.mxu0 0
        %2940 = vmatmul.mubr.bf16.gmra.mrb[0].mxu0 %v2819
        %v2941 = vpop.f32.mrb[0].mxu0
        %v2942 = vadd.f32 0.0, %v2941
        %v2943 = vpop.f32.mrb[0].mxu0
        %v2944 = vpop.f32.mrb[0].mxu0
        %v2945 = vadd.f32 0.0, %v2944
        %v2946 = vpop.f32.mrb[0].mxu0
        %2947 = vmatprep.mubr.bf16.mxu0 0
        %2948 = vmatmul.mubr.bf16.gmra.mrb[0].mxu0 %v2820
        %v2949 = vpop.f32.mrb[0].mxu0
        %v2950 = vadd.f32 0.0, %v2949
        %v2951 = vpop.f32.mrb[0].mxu0
        %v2952 = vpop.f32.mrb[0].mxu0
        %v2953 = vadd.f32 0.0, %v2952
        %v2954 = vpop.f32.mrb[0].mxu0
        %2955 = vmatprep.mubr.bf16.mxu0 0
        %2956 = vmatmul.mubr.bf16.gmra.mrb[0].mxu0 %v2821
        %v2957 = vpop.f32.mrb[0].mxu0
        %v2958 = vadd.f32 0.0, %v2957
        %v2959 = vpop.f32.mrb[0].mxu0
        %v2960 = vpop.f32.mrb[0].mxu0
        %v2961 = vadd.f32 0.0, %v2960
        %v2962 = vpop.f32.mrb[0].mxu0
        %2963 = vmatprep.mubr.bf16.mxu0 0
        %2964 = vmatmul.mubr.bf16.gmra.mrb[0].mxu0 %v2822
        %v2965 = vpop.f32.mrb[0].mxu0
        %v2966 = vadd.f32 0.0, %v2965
        %v2967 = vpop.f32.mrb[0].mxu0
        %v2968 = vpop.f32.mrb[0].mxu0
        %v2969 = vadd.f32 0.0, %v2968
        %v2970 = vpop.f32.mrb[0].mxu0
        %2971 = vmatprep.mubr.bf16.mxu0 0
        %2972 = vmatmul.mubr.bf16.gmra.mrb[0].mxu0 %v2823
        %v2973 = vpop.f32.mrb[0].mxu0
        %v2974 = vadd.f32 0.0, %v2973
        %v2975 = vpop.f32.mrb[0].mxu0
        %v2976 = vpop.f32.mrb[0].mxu0
        %v2977 = vadd.f32 0.0, %v2976
        %v2978 = vpop.f32.mrb[0].mxu0
        %2979 = vmatprep.mubr.bf16.mxu0 0
        %2980 = vmatmul.mubr.bf16.gmra.mrb[0].mxu0 %v2824
        %v2981 = vpop.f32.mrb[0].mxu0
        %v2982 = vadd.f32 0.0, %v2981
        %v2983 = vpop.f32.mrb[0].mxu0
        %v2984 = vpop.f32.mrb[0].mxu0
        %v2985 = vadd.f32 0.0, %v2984
        %v2986 = vpop.f32.mrb[0].mxu0
        %2987 = vmatprep.mubr.bf16.mxu0 0
        %2988 = vmatmul.mubr.bf16.gmra.mrb[0].mxu0 %v2825
        %v2989 = vpop.f32.mrb[0].mxu0
        %v2990 = vadd.f32 0.0, %v2989
        %v2991 = vpop.f32.mrb[0].mxu0
        %v2992 = vpop.f32.mrb[0].mxu0
        %v2993 = vadd.f32 0.0, %v2992
        %v2994 = vpop.f32.mrb[0].mxu0
        %2995 = vmatprep.mubr.bf16.mxu0 0
        %2996 = vmatmul.mubr.bf16.gmra.mrb[0].mxu0 %v2826
        %v2997 = vpop.f32.mrb[0].mxu0
        %v2998 = vadd.f32 0.0, %v2997
        %v2999 = vpop.f32.mrb[0].mxu0
        %v3000 = vpop.f32.mrb[0].mxu0
        %v3001 = vadd.f32 0.0, %v3000
        %v3002 = vpop.f32.mrb[0].mxu0
        %3003 = vmatprep.mubr.bf16.mxu0 0
        %3004 = vmatmul.mubr.bf16.gmra.mrb[0].mxu0 %v2827
        %v3005 = vpop.f32.mrb[0].mxu0
        %v3006 = vadd.f32 0.0, %v3005
        %v3007 = vpop.f32.mrb[0].mxu0
        %v3008 = vpop.f32.mrb[0].mxu0
        %v3009 = vadd.f32 0.0, %v3008
        %v3010 = vpop.f32.mrb[0].mxu0
        %3011 = vmatprep.mubr.bf16.mxu0 0
        %3012 = vmatmul.mubr.bf16.gmra.mrb[0].mxu0 %v2828
        %v3013 = vpop.f32.mrb[0].mxu0
        %v3014 = vadd.f32 0.0, %v3013
        %v3015 = vpop.f32.mrb[0].mxu0
        %v3016 = vpop.f32.mrb[0].mxu0
        %v3017 = vadd.f32 0.0, %v3016
        %v3018 = vpop.f32.mrb[0].mxu0
        %3019 = vmatprep.mubr.bf16.mxu0 0
        %3020 = vmatmul.mubr.bf16.gmra.mrb[0].mxu0 %v2829
        %v3021 = vpop.f32.mrb[0].mxu0
        %v3022 = vadd.f32 0.0, %v3021
        %v3023 = vpop.f32.mrb[0].mxu0
        %v3024 = vpop.f32.mrb[0].mxu0
        %v3025 = vadd.f32 0.0, %v3024
        %v3026 = vpop.f32.mrb[0].mxu0
        %3027 = vmatprep.mubr.bf16.mxu0 0
        %3028 = vmatmul.mubr.bf16.gmra.mrb[0].mxu0 %v2830
        %v3029 = vpop.f32.mrb[0].mxu0
        %v3030 = vadd.f32 0.0, %v3029
        %v3031 = vpop.f32.mrb[0].mxu0
        %v3032 = vpop.f32.mrb[0].mxu0
        %v3033 = vadd.f32 0.0, %v3032
        %v3034 = vpop.f32.mrb[0].mxu0
        %3035 = vmatprep.mubr.bf16.mxu0 0
        %3036 = vmatmul.mubr.bf16.gmra.mrb[0].mxu0 %v2831
        %v3037 = vpop.f32.mrb[0].mxu0
        %v3038 = vadd.f32 0.0, %v3037
        %v3039 = vpop.f32.mrb[0].mxu0
        %v3040 = vpop.f32.mrb[0].mxu0
        %v3041 = vadd.f32 0.0, %v3040
        %v3042 = vpop.f32.mrb[0].mxu0
        %3043 = vmatprep.mubr.bf16.mxu0 0
        %3044 = vmatmul.mubr.bf16.gmra.mrb[0].mxu0 %v2832
        %v3045 = vpop.f32.mrb[0].mxu0
        %v3046 = vadd.f32 0.0, %v3045
        %v3047 = vpop.f32.mrb[0].mxu0
        %v3048 = vpop.f32.mrb[0].mxu0
        %v3049 = vadd.f32 0.0, %v3048
        %v3050 = vpop.f32.mrb[0].mxu0
        %3051 = vmatprep.mubr.bf16.mxu0 0
        %3052 = vmatmul.mubr.bf16.gmra.mrb[0].mxu0 %v2833
        %v3053 = vpop.f32.mrb[0].mxu0
        %v3054 = vadd.f32 0.0, %v3053
        %v3055 = vpop.f32.mrb[0].mxu0
        %v3056 = vpop.f32.mrb[0].mxu0
        %v3057 = vadd.f32 0.0, %v3056
        %v3058 = vpop.f32.mrb[0].mxu0
        %3059 = vdwg.mxu0
        %v3060 = vadd.f32 %v2754, %v2934
        %v3061 = vadd.f32 %v2755, %v2937
        %v3062 = vadd.f32 %v2756, %v2942
        %v3063 = vadd.f32 %v2757, %v2945
        %v3064 = vadd.f32 %v2758, %v2950
        %v3065 = vadd.f32 %v2759, %v2953
        %v3066 = vadd.f32 %v2760, %v2958
        %v3067 = vadd.f32 %v2761, %v2961
        %v3068 = vadd.f32 %v2762, %v2966
        %v3069 = vadd.f32 %v2763, %v2969
        %v3070 = vadd.f32 %v2764, %v2974
        %v3071 = vadd.f32 %v2765, %v2977
        %v3072 = vadd.f32 %v2766, %v2982
        %v3073 = vadd.f32 %v2767, %v2985
        %v3074 = vadd.f32 %v2768, %v2990
        %v3075 = vadd.f32 %v2769, %v2993
        %v3076 = vadd.f32 %v2770, %v2998
        %v3077 = vadd.f32 %v2771, %v3001
        %v3078 = vadd.f32 %v2772, %v3006
        %v3079 = vadd.f32 %v2773, %v3009
        %v3080 = vadd.f32 %v2774, %v3014
        %v3081 = vadd.f32 %v2775, %v3017
        %v3082 = vadd.f32 %v2776, %v3022
        %v3083 = vadd.f32 %v2777, %v3025
        %v3084 = vadd.f32 %v2778, %v3030
        %v3085 = vadd.f32 %v2779, %v3033
        %v3086 = vadd.f32 %v2780, %v3038
        %v3087 = vadd.f32 %v2781, %v3041
        %v3088 = vadd.f32 %v2782, %v3046
        %v3089 = vadd.f32 %v2783, %v3049
        %v3090 = vadd.f32 %v2784, %v3054
        %v3091 = vadd.f32 %v2785, %v3057
        %v3092 = vld [vmem:[%s2] sm:$0x1]
        %v3094 = vlaneseq
        %v3095 = vshrl.u32 %v3094, 7
        %v3096 = vsub.s32 0, %v3095
        %v3097 = vrot.slane %v3092, %v3096
        %v3099 = vadd.f32 %v3060, %v3097
        %v3100 = vadd.f32 %v3061, %v3097
        %v3101 = vadd.f32 %v3062, %v3097
        %v3102 = vadd.f32 %v3063, %v3097
        %v3103 = vadd.f32 %v3064, %v3097
        %v3104 = vadd.f32 %v3065, %v3097
        %v3105 = vadd.f32 %v3066, %v3097
        %v3106 = vadd.f32 %v3067, %v3097
        %v3107 = vadd.f32 %v3068, %v3097
        %v3108 = vadd.f32 %v3069, %v3097
        %v3109 = vadd.f32 %v3070, %v3097
        %v3110 = vadd.f32 %v3071, %v3097
        %v3111 = vadd.f32 %v3072, %v3097
        %v3112 = vadd.f32 %v3073, %v3097
        %v3113 = vadd.f32 %v3074, %v3097
        %v3114 = vadd.f32 %v3075, %v3097
        %v3115 = vadd.f32 %v3076, %v3097
        %v3116 = vadd.f32 %v3077, %v3097
        %v3117 = vadd.f32 %v3078, %v3097
        %v3118 = vadd.f32 %v3079, %v3097
        %v3119 = vadd.f32 %v3080, %v3097
        %v3120 = vadd.f32 %v3081, %v3097
        %v3121 = vadd.f32 %v3082, %v3097
        %v3122 = vadd.f32 %v3083, %v3097
        %v3123 = vadd.f32 %v3084, %v3097
        %v3124 = vadd.f32 %v3085, %v3097
        %v3125 = vadd.f32 %v3086, %v3097
        %v3126 = vadd.f32 %v3087, %v3097
        %v3127 = vadd.f32 %v3088, %v3097
        %v3128 = vadd.f32 %v3089, %v3097
        %v3129 = vadd.f32 %v3090, %v3097
        %v3130 = vadd.f32 %v3091, %v3097
        %vm3131 = vcmp.ge.f32.partialorder %v3099, 0.0
        %vm3132 = vcmp.ge.f32.partialorder %v3100, 0.0
        %vm3133 = vcmp.ge.f32.partialorder %v3101, 0.0
        %vm3134 = vcmp.ge.f32.partialorder %v3102, 0.0
        %vm3135 = vcmp.ge.f32.partialorder %v3103, 0.0
        %vm3136 = vcmp.ge.f32.partialorder %v3104, 0.0
        %vm3137 = vcmp.ge.f32.partialorder %v3105, 0.0
        %vm3138 = vcmp.ge.f32.partialorder %v3106, 0.0
        %vm3139 = vcmp.ge.f32.partialorder %v3107, 0.0
        %vm3140 = vcmp.ge.f32.partialorder %v3108, 0.0
        %vm3141 = vcmp.ge.f32.partialorder %v3109, 0.0
        %vm3142 = vcmp.ge.f32.partialorder %v3110, 0.0
        %vm3143 = vcmp.ge.f32.partialorder %v3111, 0.0
        %vm3144 = vcmp.ge.f32.partialorder %v3112, 0.0
        %vm3145 = vcmp.ge.f32.partialorder %v3113, 0.0
        %vm3146 = vcmp.ge.f32.partialorder %v3114, 0.0
        %vm3147 = vcmp.ge.f32.partialorder %v3115, 0.0
        %vm3148 = vcmp.ge.f32.partialorder %v3116, 0.0
        %vm3149 = vcmp.ge.f32.partialorder %v3117, 0.0
        %vm3150 = vcmp.ge.f32.partialorder %v3118, 0.0
        %vm3151 = vcmp.ge.f32.partialorder %v3119, 0.0
        %vm3152 = vcmp.ge.f32.partialorder %v3120, 0.0
        %vm3153 = vcmp.ge.f32.partialorder %v3121, 0.0
        %vm3154 = vcmp.ge.f32.partialorder %v3122, 0.0
        %vm3155 = vcmp.ge.f32.partialorder %v3123, 0.0
        %vm3156 = vcmp.ge.f32.partialorder %v3124, 0.0
        %vm3157 = vcmp.ge.f32.partialorder %v3125, 0.0
        %vm3158 = vcmp.ge.f32.partialorder %v3126, 0.0
        %vm3159 = vcmp.ge.f32.partialorder %v3127, 0.0
        %vm3160 = vcmp.ge.f32.partialorder %v3128, 0.0
        %vm3161 = vcmp.ge.f32.partialorder %v3129, 0.0
        %vm3162 = vcmp.ge.f32.partialorder %v3130, 0.0
        %v3163 = vld [vmem:[%s3] sm:$0x1]
        %v3165 = vlaneseq
        %v3166 = vshrl.u32 %v3165, 7
        %v3167 = vsub.s32 0, %v3166
        %v3168 = vrot.slane %v3163, %v3167
        %v3170 = vmul.f32 %v3168, %v3099
        %v3171 = vmul.f32 %v3168, %v3100
        %v3172 = vmul.f32 %v3168, %v3101
        %v3173 = vmul.f32 %v3168, %v3102
        %v3174 = vmul.f32 %v3168, %v3103
        %v3175 = vmul.f32 %v3168, %v3104
        %v3176 = vmul.f32 %v3168, %v3105
        %v3177 = vmul.f32 %v3168, %v3106
        %v3178 = vmul.f32 %v3168, %v3107
        %v3179 = vmul.f32 %v3168, %v3108
        %v3180 = vmul.f32 %v3168, %v3109
        %v3181 = vmul.f32 %v3168, %v3110
        %v3182 = vmul.f32 %v3168, %v3111
        %v3183 = vmul.f32 %v3168, %v3112
        %v3184 = vmul.f32 %v3168, %v3113
        %v3185 = vmul.f32 %v3168, %v3114
        %v3186 = vmul.f32 %v3168, %v3115
        %v3187 = vmul.f32 %v3168, %v3116
        %v3188 = vmul.f32 %v3168, %v3117
        %v3189 = vmul.f32 %v3168, %v3118
        %v3190 = vmul.f32 %v3168, %v3119
        %v3191 = vmul.f32 %v3168, %v3120
        %v3192 = vmul.f32 %v3168, %v3121
        %v3193 = vmul.f32 %v3168, %v3122
        %v3194 = vmul.f32 %v3168, %v3123
        %v3195 = vmul.f32 %v3168, %v3124
        %v3196 = vmul.f32 %v3168, %v3125
        %v3197 = vmul.f32 %v3168, %v3126
        %v3198 = vmul.f32 %v3168, %v3127
        %v3199 = vmul.f32 %v3168, %v3128
        %v3200 = vmul.f32 %v3168, %v3129
        %v3201 = vmul.f32 %v3168, %v3130
        %v3202 = vsel %vm3131, %v3099, %v3170
        %v3203 = vsel %vm3132, %v3100, %v3171
        %v3204 = vsel %vm3133, %v3101, %v3172
        %v3205 = vsel %vm3134, %v3102, %v3173
        %v3206 = vsel %vm3135, %v3103, %v3174
        %v3207 = vsel %vm3136, %v3104, %v3175
        %v3208 = vsel %vm3137, %v3105, %v3176
        %v3209 = vsel %vm3138, %v3106, %v3177
        %v3210 = vsel %vm3139, %v3107, %v3178
        %v3211 = vsel %vm3140, %v3108, %v3179
        %v3212 = vsel %vm3141, %v3109, %v3180
        %v3213 = vsel %vm3142, %v3110, %v3181
        %v3214 = vsel %vm3143, %v3111, %v3182
        %v3215 = vsel %vm3144, %v3112, %v3183
        %v3216 = vsel %vm3145, %v3113, %v3184
        %v3217 = vsel %vm3146, %v3114, %v3185
        %v3218 = vsel %vm3147, %v3115, %v3186
        %v3219 = vsel %vm3148, %v3116, %v3187
        %v3220 = vsel %vm3149, %v3117, %v3188
        %v3221 = vsel %vm3150, %v3118, %v3189
        %v3222 = vsel %vm3151, %v3119, %v3190
        %v3223 = vsel %vm3152, %v3120, %v3191
        %v3224 = vsel %vm3153, %v3121, %v3192
        %v3225 = vsel %vm3154, %v3122, %v3193
        %v3226 = vsel %vm3155, %v3123, %v3194
        %v3227 = vsel %vm3156, %v3124, %v3195
        %v3228 = vsel %vm3157, %v3125, %v3196
        %v3229 = vsel %vm3158, %v3126, %v3197
        %v3230 = vsel %vm3159, %v3127, %v3198
        %v3231 = vsel %vm3160, %v3128, %v3199
        %v3232 = vsel %vm3161, %v3129, %v3200
        %v3233 = vsel %vm3162, %v3130, %v3201
        %v3234 = vld [vmem:[#allocation3] sm:$0xff]
        %v3235 = vld [vmem:[#allocation3 + $0x8] sm:$0xff]
        %v3236 = vld [vmem:[#allocation3 + $0x10] sm:$0xff]
        %v3237 = vld [vmem:[#allocation3 + $0x18] sm:$0xff]
        %v3238 = vld [vmem:[#allocation3 + $0x20] sm:$0xff]
        %v3239 = vld [vmem:[#allocation3 + $0x28] sm:$0xff]
        %v3240 = vld [vmem:[#allocation3 + $0x30] sm:$0xff]
        %v3241 = vld [vmem:[#allocation3 + $0x38] sm:$0xff]
        %v3242 = vld [vmem:[#allocation3 + $0x40] sm:$0xff]
        %v3243 = vld [vmem:[#allocation3 + $0x48] sm:$0xff]
        %v3244 = vld [vmem:[#allocation3 + $0x50] sm:$0xff]
        %v3245 = vld [vmem:[#allocation3 + $0x58] sm:$0xff]
        %v3246 = vld [vmem:[#allocation3 + $0x60] sm:$0xff]
        %v3247 = vld [vmem:[#allocation3 + $0x68] sm:$0xff]
        %v3248 = vld [vmem:[#allocation3 + $0x70] sm:$0xff]
        %v3249 = vld [vmem:[#allocation3 + $0x78] sm:$0xff]
        %3250 = vmatprep.subr.mxu0 0.0
        %3251 = vmatpush1.msra.mxu0 %v3202
        %3252 = vmatprep.subr.mxu0 0.0
        %3253 = vmatpush1.msra.mxu0 %v3203
        %3254 = vmatprep.subr.mxu0 0.0
        %3255 = vmatpush1.msra.mxu0 %v3204
        %3256 = vmatprep.subr.mxu0 0.0
        %3257 = vmatpush1.msra.mxu0 %v3205
        %3258 = vmatprep.subr.mxu0 0.0
        %3259 = vmatpush1.msra.mxu0 %v3206
        %3260 = vmatprep.subr.mxu0 0.0
        %3261 = vmatpush1.msra.mxu0 %v3207
        %3262 = vmatprep.subr.mxu0 0.0
        %3263 = vmatpush1.msra.mxu0 %v3208
        %3264 = vmatprep.subr.mxu0 0.0
        %3265 = vmatpush1.msra.mxu0 %v3209
        %3266 = vmatprep.subr.mxu0 0.0
        %3267 = vmatpush1.msra.mxu0 %v3210
        %3268 = vmatprep.subr.mxu0 0.0
        %3269 = vmatpush1.msra.mxu0 %v3211
        %3270 = vmatprep.subr.mxu0 0.0
        %3271 = vmatpush1.msra.mxu0 %v3212
        %3272 = vmatprep.subr.mxu0 0.0
        %3273 = vmatpush1.msra.mxu0 %v3213
        %3274 = vmatprep.subr.mxu0 0.0
        %3275 = vmatpush1.msra.mxu0 %v3214
        %3276 = vmatprep.subr.mxu0 0.0
        %3277 = vmatpush1.msra.mxu0 %v3215
        %3278 = vmatprep.subr.mxu0 0.0
        %3279 = vmatpush1.msra.mxu0 %v3216
        %3280 = vmatprep.subr.mxu0 0.0
        %3281 = vmatpush1.msra.mxu0 %v3217
        %3282 = vmatprep.subr.mxu0 0.0
        %3283 = vmatpush1.msra.mxu0 %v3218
        %3284 = vmatprep.subr.mxu0 0.0
        %3285 = vmatpush1.msra.mxu0 %v3219
        %3286 = vmatprep.subr.mxu0 0.0
        %3287 = vmatpush1.msra.mxu0 %v3220
        %3288 = vmatprep.subr.mxu0 0.0
        %3289 = vmatpush1.msra.mxu0 %v3221
        %3290 = vmatprep.subr.mxu0 0.0
        %3291 = vmatpush1.msra.mxu0 %v3222
        %3292 = vmatprep.subr.mxu0 0.0
        %3293 = vmatpush1.msra.mxu0 %v3223
        %3294 = vmatprep.subr.mxu0 0.0
        %3295 = vmatpush1.msra.mxu0 %v3224
        %3296 = vmatprep.subr.mxu0 0.0
        %3297 = vmatpush1.msra.mxu0 %v3225
        %3298 = vmatprep.subr.mxu0 0.0
        %3299 = vmatpush1.msra.mxu0 %v3226
        %3300 = vmatprep.subr.mxu0 0.0
        %3301 = vmatpush1.msra.mxu0 %v3227
        %3302 = vmatprep.subr.mxu0 0.0
        %3303 = vmatpush1.msra.mxu0 %v3228
        %3304 = vmatprep.subr.mxu0 0.0
        %3305 = vmatpush1.msra.mxu0 %v3229
        %3306 = vmatprep.subr.mxu0 0.0
        %3307 = vmatpush1.msra.mxu0 %v3230
        %3308 = vmatprep.subr.mxu0 0.0
        %3309 = vmatpush1.msra.mxu0 %v3231
        %3310 = vmatprep.subr.mxu0 0.0
        %3311 = vmatpush1.msra.mxu0 %v3232
        %3312 = vmatprep.subr.mxu0 0.0
        %3313 = vmatpush1.msra.mxu0 %v3233
        %3314 = vmatprep.mubr.f32.mxu0 %v3235
        %3315 = vmatmul.mubr.f32.gmra.mrb[0].mxu0 %v3234
        %v3316 = vpop.f32.mrb[0].mxu0
        %v3317 = vadd.f32 0.0, %v3316
        %v3318 = vpop.f32.mrb[0].mxu0
        %3319 = vmatprep.mubr.f32.mxu0 %v3237
        %3320 = vmatmul.mubr.f32.gmra.mrb[0].mxu0 %v3236
        %v3321 = vpop.f32.mrb[0].mxu0
        %v3322 = vadd.f32 0.0, %v3321
        %v3323 = vpop.f32.mrb[0].mxu0
        %3324 = vmatprep.mubr.f32.mxu0 %v3239
        %3325 = vmatmul.mubr.f32.gmra.mrb[0].mxu0 %v3238
        %v3326 = vpop.f32.mrb[0].mxu0
        %v3327 = vadd.f32 0.0, %v3326
        %v3328 = vpop.f32.mrb[0].mxu0
        %3329 = vmatprep.mubr.f32.mxu0 %v3241
        %3330 = vmatmul.mubr.f32.gmra.mrb[0].mxu0 %v3240
        %v3331 = vpop.f32.mrb[0].mxu0
        %v3332 = vadd.f32 0.0, %v3331
        %v3333 = vpop.f32.mrb[0].mxu0
        %3334 = vmatprep.mubr.f32.mxu0 %v3243
        %3335 = vmatmul.mubr.f32.gmra.mrb[0].mxu0 %v3242
        %v3336 = vpop.f32.mrb[0].mxu0
        %v3337 = vadd.f32 0.0, %v3336
        %v3338 = vpop.f32.mrb[0].mxu0
        %3339 = vmatprep.mubr.f32.mxu0 %v3245
        %3340 = vmatmul.mubr.f32.gmra.mrb[0].mxu0 %v3244
        %v3341 = vpop.f32.mrb[0].mxu0
        %v3342 = vadd.f32 0.0, %v3341
        %v3343 = vpop.f32.mrb[0].mxu0
        %3344 = vmatprep.mubr.f32.mxu0 %v3247
        %3345 = vmatmul.mubr.f32.gmra.mrb[0].mxu0 %v3246
        %v3346 = vpop.f32.mrb[0].mxu0
        %v3347 = vadd.f32 0.0, %v3346
        %v3348 = vpop.f32.mrb[0].mxu0
        %3349 = vmatprep.mubr.f32.mxu0 %v3249
        %3350 = vmatmul.mubr.f32.gmra.mrb[0].mxu0 %v3248
        %v3351 = vpop.f32.mrb[0].mxu0
        %v3352 = vadd.f32 0.0, %v3351
        %v3353 = vpop.f32.mrb[0].mxu0
        %3354 = vdwg.mxu0
        %3355 = vst [vmem:[#allocation2] sm:$0xff] 0.0
        %3356 = vst [vmem:[#allocation2 + $0x8] sm:$0xff] 0.0
        %3357 = vst [vmem:[#allocation2 + $0x10] sm:$0xff] 0.0
        %3358 = vst [vmem:[#allocation2 + $0x18] sm:$0xff] 0.0
        %3359 = vst [vmem:[#allocation2 + $0x20] sm:$0xff] 0.0
        %3360 = vst [vmem:[#allocation2 + $0x28] sm:$0xff] 0.0
        %3361 = vst [vmem:[#allocation2 + $0x30] sm:$0xff] 0.0
        %3362 = vst [vmem:[#allocation2 + $0x38] sm:$0xff] 0.0
        %3363 = vst [vmem:[#allocation2 + $0x40] sm:$0xff] 0.0
        %3364 = vst [vmem:[#allocation2 + $0x48] sm:$0xff] 0.0
        %3365 = vst [vmem:[#allocation2 + $0x50] sm:$0xff] 0.0
        %3366 = vst [vmem:[#allocation2 + $0x58] sm:$0xff] 0.0
        %3367 = vst [vmem:[#allocation2 + $0x60] sm:$0xff] 0.0
        %3368 = vst [vmem:[#allocation2 + $0x68] sm:$0xff] 0.0
        %3369 = vst [vmem:[#allocation2 + $0x70] sm:$0xff] 0.0
        %3370 = vst [vmem:[#allocation2 + $0x78] sm:$0xff] 0.0
        %3371 = vst [vmem:[#allocation2 + $0x80] sm:$0xff] 0.0
        %3372 = vst [vmem:[#allocation2 + $0x88] sm:$0xff] 0.0
        %3373 = vst [vmem:[#allocation2 + $0x90] sm:$0xff] 0.0
        %3374 = vst [vmem:[#allocation2 + $0x98] sm:$0xff] 0.0
        %3375 = vst [vmem:[#allocation2 + $0xa0] sm:$0xff] 0.0
        %3376 = vst [vmem:[#allocation2 + $0xa8] sm:$0xff] 0.0
        %3377 = vst [vmem:[#allocation2 + $0xb0] sm:$0xff] 0.0
        %3378 = vst [vmem:[#allocation2 + $0xb8] sm:$0xff] 0.0
        %3379 = vst [vmem:[#allocation2 + $0xc0] sm:$0xff] 0.0
        %3380 = vst [vmem:[#allocation2 + $0xc8] sm:$0xff] 0.0
        %3381 = vst [vmem:[#allocation2 + $0xd0] sm:$0xff] 0.0
        %3382 = vst [vmem:[#allocation2 + $0xd8] sm:$0xff] 0.0
        %3383 = vst [vmem:[#allocation2 + $0xe0] sm:$0xff] 0.0
        %3384 = vst [vmem:[#allocation2 + $0xe8] sm:$0xff] 0.0
        %3385 = vst [vmem:[#allocation2 + $0xf0] sm:$0xff] 0.0
        %3386 = vst [vmem:[#allocation2 + $0xf8] sm:$0xff] 0.0
        %s3387 = scalar_lea.vmem [#allocation2], 16
        %3388 = vst [vmem:[%s3387 + $0x1] sm:$0xff] %v3317
        %3389 = vst [vmem:[%s3387 + $0x11] sm:$0xff] %v3322
        %3390 = vst [vmem:[%s3387 + $0x21] sm:$0xff] %v3327
        %3391 = vst [vmem:[%s3387 + $0x31] sm:$0xff] %v3332
        %3392 = vst [vmem:[%s3387 + $0x41] sm:$0xff] %v3337
        %3393 = vst [vmem:[%s3387 + $0x51] sm:$0xff] %v3342
        %3394 = vst [vmem:[%s3387 + $0x61] sm:$0xff] %v3347
        %3395 = vst [vmem:[%s3387 + $0x71] sm:$0xff] %v3352
        %v3396 = vld [vmem:[#allocation2] sm:$0xff]
        %v3397 = vld [vmem:[#allocation2 + $0x10] sm:$0xff]
        %v3398 = vld [vmem:[#allocation2 + $0x20] sm:$0xff]
        %v3399 = vld [vmem:[#allocation2 + $0x30] sm:$0xff]
        %v3400 = vld [vmem:[#allocation2 + $0x40] sm:$0xff]
        %v3401 = vld [vmem:[#allocation2 + $0x50] sm:$0xff]
        %v3402 = vld [vmem:[#allocation2 + $0x60] sm:$0xff]
        %v3403 = vld [vmem:[#allocation2 + $0x70] sm:$0xff]
        %v3404 = vpack.c.bf16 %v3397, %v3396
        %v3405 = vpack.c.bf16 %v3399, %v3398
        %v3406 = vpack.c.bf16 %v3401, %v3400
        %v3407 = vpack.c.bf16 %v3403, %v3402
        %v3408 = vld [vmem:[%s4] sm:$0xf]
        %v3409 = vld [vmem:[%s4 + $0x4] sm:$0xf]
        %v3410 = vld [vmem:[%s4 + $0x8] sm:$0xf]
        %v3411 = vld [vmem:[%s4 + $0xc] sm:$0xf]
        %v3412 = vld [vmem:[%s4 + $0x10] sm:$0xf]
        %v3413 = vld [vmem:[%s4 + $0x14] sm:$0xf]
        %v3414 = vld [vmem:[%s4 + $0x18] sm:$0xf]
        %v3415 = vld [vmem:[%s4 + $0x1c] sm:$0xf]
        %v3416 = vld [vmem:[%s4 + $0x20] sm:$0xf]
        %v3417 = vld [vmem:[%s4 + $0x24] sm:$0xf]
        %v3418 = vld [vmem:[%s4 + $0x28] sm:$0xf]
        %v3419 = vld [vmem:[%s4 + $0x2c] sm:$0xf]
        %v3420 = vld [vmem:[%s4 + $0x30] sm:$0xf]
        %v3421 = vld [vmem:[%s4 + $0x34] sm:$0xf]
        %v3422 = vld [vmem:[%s4 + $0x38] sm:$0xf]
        %v3423 = vld [vmem:[%s4 + $0x3c] sm:$0xf]
        %v3424 = vld [vmem:[#allocation2 + $0x1] sm:$0xff]
        %v3425 = vld [vmem:[#allocation2 + $0x11] sm:$0xff]
        %v3426 = vld [vmem:[#allocation2 + $0x21] sm:$0xff]
        %v3427 = vld [vmem:[#allocation2 + $0x31] sm:$0xff]
        %v3428 = vld [vmem:[#allocation2 + $0x41] sm:$0xff]
        %v3429 = vld [vmem:[#allocation2 + $0x51] sm:$0xff]
        %v3430 = vld [vmem:[#allocation2 + $0x61] sm:$0xff]
        %v3431 = vld [vmem:[#allocation2 + $0x71] sm:$0xff]
        %v3432 = vpack.c.bf16 %v3425, %v3424
        %v3433 = vpack.c.bf16 %v3427, %v3426
        %v3434 = vpack.c.bf16 %v3429, %v3428
        %v3435 = vpack.c.bf16 %v3431, %v3430
        %s3436 = scalar_lea.vmem %s4, 64
        %v3437 = vld [vmem:[%s3436] sm:$0xf]
        %v3438 = vld [vmem:[%s3436 + $0x4] sm:$0xf]
        %v3439 = vld [vmem:[%s3436 + $0x8] sm:$0xf]
        %v3440 = vld [vmem:[%s3436 + $0xc] sm:$0xf]
        %v3441 = vld [vmem:[%s3436 + $0x10] sm:$0xf]
        %v3442 = vld [vmem:[%s3436 + $0x14] sm:$0xf]
        %v3443 = vld [vmem:[%s3436 + $0x18] sm:$0xf]
        %v3444 = vld [vmem:[%s3436 + $0x1c] sm:$0xf]
        %v3445 = vld [vmem:[%s3436 + $0x20] sm:$0xf]
        %v3446 = vld [vmem:[%s3436 + $0x24] sm:$0xf]
        %v3447 = vld [vmem:[%s3436 + $0x28] sm:$0xf]
        %v3448 = vld [vmem:[%s3436 + $0x2c] sm:$0xf]
        %v3449 = vld [vmem:[%s3436 + $0x30] sm:$0xf]
        %v3450 = vld [vmem:[%s3436 + $0x34] sm:$0xf]
        %v3451 = vld [vmem:[%s3436 + $0x38] sm:$0xf]
        %v3452 = vld [vmem:[%s3436 + $0x3c] sm:$0xf]
        %v3469 = vunpack.c.l.b16 %v3437
        %v3470 = vunpack.c.l.b16 %v3438
        %v3471 = vunpack.c.l.b16 %v3439
        %v3472 = vunpack.c.l.b16 %v3440
        %v3473 = vunpack.c.l.b16 %v3441
        %v3474 = vunpack.c.l.b16 %v3442
        %v3475 = vunpack.c.l.b16 %v3443
        %v3476 = vunpack.c.l.b16 %v3444
        %v3477 = vunpack.c.l.b16 %v3445
        %v3478 = vunpack.c.l.b16 %v3446
        %v3479 = vunpack.c.l.b16 %v3447
        %v3480 = vunpack.c.l.b16 %v3448
        %v3481 = vunpack.c.l.b16 %v3449
        %v3482 = vunpack.c.l.b16 %v3450
        %v3483 = vunpack.c.l.b16 %v3451
        %v3484 = vunpack.c.l.b16 %v3452
        %v3485 = vpack.c.b16 %v3470, %v3469
        %v3486 = vpack.c.b16 %v3472, %v3471
        %v3487 = vpack.c.b16 %v3474, %v3473
        %v3488 = vpack.c.b16 %v3476, %v3475
        %v3489 = vpack.c.b16 %v3478, %v3477
        %v3490 = vpack.c.b16 %v3480, %v3479
        %v3491 = vpack.c.b16 %v3482, %v3481
        %v3492 = vpack.c.b16 %v3484, %v3483
        %3501 = vmatprep.subr.bf16.mxu0 0
        %3502 = vmatpush1.bf16.msra.mxu0 %v3485
        %3503 = vmatprep.subr.bf16.mxu0 0
        %3504 = vmatpush1.bf16.msra.mxu0 %v3486
        %3505 = vmatprep.subr.bf16.mxu0 0
        %3506 = vmatpush1.bf16.msra.mxu0 %v3487
        %3507 = vmatprep.subr.bf16.mxu0 0
        %3508 = vmatpush1.bf16.msra.mxu0 %v3488
        %3509 = vmatprep.subr.bf16.mxu0 0
        %3510 = vmatpush1.bf16.msra.mxu0 %v3489
        %3511 = vmatprep.subr.bf16.mxu0 0
        %3512 = vmatpush1.bf16.msra.mxu0 %v3490
        %3513 = vmatprep.subr.bf16.mxu0 0
        %3514 = vmatpush1.bf16.msra.mxu0 %v3491
        %3515 = vmatprep.subr.bf16.mxu0 0
        %3516 = vmatpush1.bf16.msra.mxu0 %v3492
        %3517 = vmatprep.subr.bf16.mxu0 0
        %3518 = vmatpush1.bf16.msra.mxu0 0
        %3519 = vmatprep.subr.bf16.mxu0 0
        %3520 = vmatpush1.bf16.msra.mxu0 0
        %3521 = vmatprep.subr.bf16.mxu0 0
        %3522 = vmatpush1.bf16.msra.mxu0 0
        %3523 = vmatprep.subr.bf16.mxu0 0
        %3524 = vmatpush1.bf16.msra.mxu0 0
        %3525 = vmatprep.subr.bf16.mxu0 0
        %3526 = vmatpush1.bf16.msra.mxu0 0
        %3527 = vmatprep.subr.bf16.mxu0 0
        %3528 = vmatpush1.bf16.msra.mxu0 0
        %3529 = vmatprep.subr.bf16.mxu0 0
        %3530 = vmatpush1.bf16.msra.mxu0 0
        %3531 = vmatprep.subr.bf16.mxu0 0
        %3532 = vmatpush1.bf16.msra.mxu0 0
        %3533 = vmatprep.mubr.bf16.mxu0 0
        %3534 = vmatmul.mubr.bf16.gmra.mrb[0].mxu0 %v3432
        %v3535 = vpop.f32.mrb[0].mxu0
        %v3536 = vadd.f32 0.0, %v3535
        %v3537 = vpop.f32.mrb[0].mxu0
        %v3538 = vpop.f32.mrb[0].mxu0
        %v3539 = vadd.f32 0.0, %v3538
        %v3540 = vpop.f32.mrb[0].mxu0
        %3541 = vmatprep.mubr.bf16.mxu0 0
        %3542 = vmatmul.mubr.bf16.gmra.mrb[0].mxu0 %v3433
        %v3543 = vpop.f32.mrb[0].mxu0
        %v3544 = vadd.f32 0.0, %v3543
        %v3545 = vpop.f32.mrb[0].mxu0
        %v3546 = vpop.f32.mrb[0].mxu0
        %v3547 = vadd.f32 0.0, %v3546
        %v3548 = vpop.f32.mrb[0].mxu0
        %3549 = vmatprep.mubr.bf16.mxu0 0
        %3550 = vmatmul.mubr.bf16.gmra.mrb[0].mxu0 %v3434
        %v3551 = vpop.f32.mrb[0].mxu0
        %v3552 = vadd.f32 0.0, %v3551
        %v3553 = vpop.f32.mrb[0].mxu0
        %v3554 = vpop.f32.mrb[0].mxu0
        %v3555 = vadd.f32 0.0, %v3554
        %v3556 = vpop.f32.mrb[0].mxu0
        %3557 = vmatprep.mubr.bf16.mxu0 0
        %3558 = vmatmul.mubr.bf16.gmra.mrb[0].mxu0 %v3435
        %v3559 = vpop.f32.mrb[0].mxu0
        %v3560 = vadd.f32 0.0, %v3559
        %v3561 = vpop.f32.mrb[0].mxu0
        %v3562 = vpop.f32.mrb[0].mxu0
        %v3563 = vadd.f32 0.0, %v3562
        %v3564 = vpop.f32.mrb[0].mxu0
        %3565 = vdwg.mxu0
        %v3582 = vunpack.c.l.b16 %v3408
        %v3583 = vunpack.c.l.b16 %v3409
        %v3584 = vunpack.c.l.b16 %v3410
        %v3585 = vunpack.c.l.b16 %v3411
        %v3586 = vunpack.c.l.b16 %v3412
        %v3587 = vunpack.c.l.b16 %v3413
        %v3588 = vunpack.c.l.b16 %v3414
        %v3589 = vunpack.c.l.b16 %v3415
        %v3590 = vunpack.c.l.b16 %v3416
        %v3591 = vunpack.c.l.b16 %v3417
        %v3592 = vunpack.c.l.b16 %v3418
        %v3593 = vunpack.c.l.b16 %v3419
        %v3594 = vunpack.c.l.b16 %v3420
        %v3595 = vunpack.c.l.b16 %v3421
        %v3596 = vunpack.c.l.b16 %v3422
        %v3597 = vunpack.c.l.b16 %v3423
        %v3598 = vpack.c.b16 %v3583, %v3582
        %v3599 = vpack.c.b16 %v3585, %v3584
        %v3600 = vpack.c.b16 %v3587, %v3586
        %v3601 = vpack.c.b16 %v3589, %v3588
        %v3602 = vpack.c.b16 %v3591, %v3590
        %v3603 = vpack.c.b16 %v3593, %v3592
        %v3604 = vpack.c.b16 %v3595, %v3594
        %v3605 = vpack.c.b16 %v3597, %v3596
        %3614 = vmatprep.subr.bf16.mxu0 0
        %3615 = vmatpush1.bf16.msra.mxu0 %v3598
        %3616 = vmatprep.subr.bf16.mxu0 0
        %3617 = vmatpush1.bf16.msra.mxu0 %v3599
        %3618 = vmatprep.subr.bf16.mxu0 0
        %3619 = vmatpush1.bf16.msra.mxu0 %v3600
        %3620 = vmatprep.subr.bf16.mxu0 0
        %3621 = vmatpush1.bf16.msra.mxu0 %v3601
        %3622 = vmatprep.subr.bf16.mxu0 0
        %3623 = vmatpush1.bf16.msra.mxu0 %v3602
        %3624 = vmatprep.subr.bf16.mxu0 0
        %3625 = vmatpush1.bf16.msra.mxu0 %v3603
        %3626 = vmatprep.subr.bf16.mxu0 0
        %3627 = vmatpush1.bf16.msra.mxu0 %v3604
        %3628 = vmatprep.subr.bf16.mxu0 0
        %3629 = vmatpush1.bf16.msra.mxu0 %v3605
        %3630 = vmatprep.subr.bf16.mxu0 0
        %3631 = vmatpush1.bf16.msra.mxu0 0
        %3632 = vmatprep.subr.bf16.mxu0 0
        %3633 = vmatpush1.bf16.msra.mxu0 0
        %3634 = vmatprep.subr.bf16.mxu0 0
        %3635 = vmatpush1.bf16.msra.mxu0 0
        %3636 = vmatprep.subr.bf16.mxu0 0
        %3637 = vmatpush1.bf16.msra.mxu0 0
        %3638 = vmatprep.subr.bf16.mxu0 0
        %3639 = vmatpush1.bf16.msra.mxu0 0
        %3640 = vmatprep.subr.bf16.mxu0 0
        %3641 = vmatpush1.bf16.msra.mxu0 0
        %3642 = vmatprep.subr.bf16.mxu0 0
        %3643 = vmatpush1.bf16.msra.mxu0 0
        %3644 = vmatprep.subr.bf16.mxu0 0
        %3645 = vmatpush1.bf16.msra.mxu0 0
        %3646 = vmatprep.mubr.bf16.mxu0 0
        %3647 = vmatmul.mubr.bf16.gmra.mrb[0].mxu0 %v3404
        %v3648 = vpop.f32.mrb[0].mxu0
        %v3649 = vadd.f32 %v3536, %v3648
        %v3650 = vpop.f32.mrb[0].mxu0
        %v3651 = vpop.f32.mrb[0].mxu0
        %v3652 = vadd.f32 %v3539, %v3651
        %v3653 = vpop.f32.mrb[0].mxu0
        %3654 = vmatprep.mubr.bf16.mxu0 0
        %3655 = vmatmul.mubr.bf16.gmra.mrb[0].mxu0 %v3405
        %v3656 = vpop.f32.mrb[0].mxu0
        %v3657 = vadd.f32 %v3544, %v3656
        %v3658 = vpop.f32.mrb[0].mxu0
        %v3659 = vpop.f32.mrb[0].mxu0
        %v3660 = vadd.f32 %v3547, %v3659
        %v3661 = vpop.f32.mrb[0].mxu0
        %3662 = vmatprep.mubr.bf16.mxu0 0
        %3663 = vmatmul.mubr.bf16.gmra.mrb[0].mxu0 %v3406
        %v3664 = vpop.f32.mrb[0].mxu0
        %v3665 = vadd.f32 %v3552, %v3664
        %v3666 = vpop.f32.mrb[0].mxu0
        %v3667 = vpop.f32.mrb[0].mxu0
        %v3668 = vadd.f32 %v3555, %v3667
        %v3669 = vpop.f32.mrb[0].mxu0
        %3670 = vmatprep.mubr.bf16.mxu0 0
        %3671 = vmatmul.mubr.bf16.gmra.mrb[0].mxu0 %v3407
        %v3672 = vpop.f32.mrb[0].mxu0
        %v3673 = vadd.f32 %v3560, %v3672
        %v3674 = vpop.f32.mrb[0].mxu0
        %v3675 = vpop.f32.mrb[0].mxu0
        %v3676 = vadd.f32 %v3563, %v3675
        %v3677 = vpop.f32.mrb[0].mxu0
        %3678 = vdwg.mxu0
        %v3679 = vld [vmem:[#allocation2 + $0x2] sm:$0xff]
        %v3680 = vld [vmem:[#allocation2 + $0x12] sm:$0xff]
        %v3681 = vld [vmem:[#allocation2 + $0x22] sm:$0xff]
        %v3682 = vld [vmem:[#allocation2 + $0x32] sm:$0xff]
        %v3683 = vld [vmem:[#allocation2 + $0x42] sm:$0xff]
        %v3684 = vld [vmem:[#allocation2 + $0x52] sm:$0xff]
        %v3685 = vld [vmem:[#allocation2 + $0x62] sm:$0xff]
        %v3686 = vld [vmem:[#allocation2 + $0x72] sm:$0xff]
        %v3687 = vpack.c.bf16 %v3680, %v3679
        %v3688 = vpack.c.bf16 %v3682, %v3681
        %v3689 = vpack.c.bf16 %v3684, %v3683
        %v3690 = vpack.c.bf16 %v3686, %v3685
        %s3691 = scalar_lea.vmem %s4, 128
        %v3692 = vld [vmem:[%s3691] sm:$0xf]
        %v3693 = vld [vmem:[%s3691 + $0x4] sm:$0xf]
        %v3694 = vld [vmem:[%s3691 + $0x8] sm:$0xf]
        %v3695 = vld [vmem:[%s3691 + $0xc] sm:$0xf]
        %v3696 = vld [vmem:[%s3691 + $0x10] sm:$0xf]
        %v3697 = vld [vmem:[%s3691 + $0x14] sm:$0xf]
        %v3698 = vld [vmem:[%s3691 + $0x18] sm:$0xf]
        %v3699 = vld [vmem:[%s3691 + $0x1c] sm:$0xf]
        %v3700 = vld [vmem:[%s3691 + $0x20] sm:$0xf]
        %v3701 = vld [vmem:[%s3691 + $0x24] sm:$0xf]
        %v3702 = vld [vmem:[%s3691 + $0x28] sm:$0xf]
        %v3703 = vld [vmem:[%s3691 + $0x2c] sm:$0xf]
        %v3704 = vld [vmem:[%s3691 + $0x30] sm:$0xf]
        %v3705 = vld [vmem:[%s3691 + $0x34] sm:$0xf]
        %v3706 = vld [vmem:[%s3691 + $0x38] sm:$0xf]
        %v3707 = vld [vmem:[%s3691 + $0x3c] sm:$0xf]
        %v3724 = vunpack.c.l.b16 %v3692
        %v3725 = vunpack.c.l.b16 %v3693
        %v3726 = vunpack.c.l.b16 %v3694
        %v3727 = vunpack.c.l.b16 %v3695
        %v3728 = vunpack.c.l.b16 %v3696
        %v3729 = vunpack.c.l.b16 %v3697
        %v3730 = vunpack.c.l.b16 %v3698
        %v3731 = vunpack.c.l.b16 %v3699
        %v3732 = vunpack.c.l.b16 %v3700
        %v3733 = vunpack.c.l.b16 %v3701
        %v3734 = vunpack.c.l.b16 %v3702
        %v3735 = vunpack.c.l.b16 %v3703
        %v3736 = vunpack.c.l.b16 %v3704
        %v3737 = vunpack.c.l.b16 %v3705
        %v3738 = vunpack.c.l.b16 %v3706
        %v3739 = vunpack.c.l.b16 %v3707
        %v3740 = vpack.c.b16 %v3725, %v3724
        %v3741 = vpack.c.b16 %v3727, %v3726
        %v3742 = vpack.c.b16 %v3729, %v3728
        %v3743 = vpack.c.b16 %v3731, %v3730
        %v3744 = vpack.c.b16 %v3733, %v3732
        %v3745 = vpack.c.b16 %v3735, %v3734
        %v3746 = vpack.c.b16 %v3737, %v3736
        %v3747 = vpack.c.b16 %v3739, %v3738
        %3756 = vmatprep.subr.bf16.mxu0 0
        %3757 = vmatpush1.bf16.msra.mxu0 %v3740
        %3758 = vmatprep.subr.bf16.mxu0 0
        %3759 = vmatpush1.bf16.msra.mxu0 %v3741
        %3760 = vmatprep.subr.bf16.mxu0 0
        %3761 = vmatpush1.bf16.msra.mxu0 %v3742
        %3762 = vmatprep.subr.bf16.mxu0 0
        %3763 = vmatpush1.bf16.msra.mxu0 %v3743
        %3764 = vmatprep.subr.bf16.mxu0 0
        %3765 = vmatpush1.bf16.msra.mxu0 %v3744
        %3766 = vmatprep.subr.bf16.mxu0 0
        %3767 = vmatpush1.bf16.msra.mxu0 %v3745
        %3768 = vmatprep.subr.bf16.mxu0 0
        %3769 = vmatpush1.bf16.msra.mxu0 %v3746
        %3770 = vmatprep.subr.bf16.mxu0 0
        %3771 = vmatpush1.bf16.msra.mxu0 %v3747
        %3772 = vmatprep.subr.bf16.mxu0 0
        %3773 = vmatpush1.bf16.msra.mxu0 0
        %3774 = vmatprep.subr.bf16.mxu0 0
        %3775 = vmatpush1.bf16.msra.mxu0 0
        %3776 = vmatprep.subr.bf16.mxu0 0
        %3777 = vmatpush1.bf16.msra.mxu0 0
        %3778 = vmatprep.subr.bf16.mxu0 0
        %3779 = vmatpush1.bf16.msra.mxu0 0
        %3780 = vmatprep.subr.bf16.mxu0 0
        %3781 = vmatpush1.bf16.msra.mxu0 0
        %3782 = vmatprep.subr.bf16.mxu0 0
        %3783 = vmatpush1.bf16.msra.mxu0 0
        %3784 = vmatprep.subr.bf16.mxu0 0
        %3785 = vmatpush1.bf16.msra.mxu0 0
        %3786 = vmatprep.subr.bf16.mxu0 0
        %3787 = vmatpush1.bf16.msra.mxu0 0
        %3788 = vmatprep.mubr.bf16.mxu0 0
        %3789 = vmatmul.mubr.bf16.gmra.mrb[0].mxu0 %v3687
        %v3790 = vpop.f32.mrb[0].mxu0
        %v3791 = vadd.f32 0.0, %v3790
        %v3792 = vpop.f32.mrb[0].mxu0
        %v3793 = vpop.f32.mrb[0].mxu0
        %v3794 = vadd.f32 0.0, %v3793
        %v3795 = vpop.f32.mrb[0].mxu0
        %3796 = vmatprep.mubr.bf16.mxu0 0
        %3797 = vmatmul.mubr.bf16.gmra.mrb[0].mxu0 %v3688
        %v3798 = vpop.f32.mrb[0].mxu0
        %v3799 = vadd.f32 0.0, %v3798
        %v3800 = vpop.f32.mrb[0].mxu0
        %v3801 = vpop.f32.mrb[0].mxu0
        %v3802 = vadd.f32 0.0, %v3801
        %v3803 = vpop.f32.mrb[0].mxu0
        %3804 = vmatprep.mubr.bf16.mxu0 0
        %3805 = vmatmul.mubr.bf16.gmra.mrb[0].mxu0 %v3689
        %v3806 = vpop.f32.mrb[0].mxu0
        %v3807 = vadd.f32 0.0, %v3806
        %v3808 = vpop.f32.mrb[0].mxu0
        %v3809 = vpop.f32.mrb[0].mxu0
        %v3810 = vadd.f32 0.0, %v3809
        %v3811 = vpop.f32.mrb[0].mxu0
        %3812 = vmatprep.mubr.bf16.mxu0 0
        %3813 = vmatmul.mubr.bf16.gmra.mrb[0].mxu0 %v3690
        %v3814 = vpop.f32.mrb[0].mxu0
        %v3815 = vadd.f32 0.0, %v3814
        %v3816 = vpop.f32.mrb[0].mxu0
        %v3817 = vpop.f32.mrb[0].mxu0
        %v3818 = vadd.f32 0.0, %v3817
        %v3819 = vpop.f32.mrb[0].mxu0
        %3820 = vdwg.mxu0
        %v3821 = vadd.f32 %v3649, %v3791
        %v3822 = vadd.f32 %v3652, %v3794
        %v3823 = vadd.f32 %v3657, %v3799
        %v3824 = vadd.f32 %v3660, %v3802
        %v3825 = vadd.f32 %v3665, %v3807
        %v3826 = vadd.f32 %v3668, %v3810
        %v3827 = vadd.f32 %v3673, %v3815
        %v3828 = vadd.f32 %v3676, %v3818
        %v3829 = vld [vmem:[%s3387] sm:$0xff]
        %v3830 = vld [vmem:[%s3387 + $0x10] sm:$0xff]
        %v3831 = vld [vmem:[%s3387 + $0x20] sm:$0xff]
        %v3832 = vld [vmem:[%s3387 + $0x30] sm:$0xff]
        %v3833 = vld [vmem:[%s3387 + $0x40] sm:$0xff]
        %v3834 = vld [vmem:[%s3387 + $0x50] sm:$0xff]
        %v3835 = vld [vmem:[%s3387 + $0x60] sm:$0xff]
        %v3836 = vld [vmem:[%s3387 + $0x70] sm:$0xff]
        %v3837 = vpack.c.bf16 %v3830, %v3829
        %v3838 = vpack.c.bf16 %v3832, %v3831
        %v3839 = vpack.c.bf16 %v3834, %v3833
        %v3840 = vpack.c.bf16 %v3836, %v3835
        %s3841 = scalar_lea.vmem %s4, 192
        %v3842 = vld [vmem:[%s3841] sm:$0xf]
        %v3843 = vld [vmem:[%s3841 + $0x4] sm:$0xf]
        %v3844 = vld [vmem:[%s3841 + $0x8] sm:$0xf]
        %v3845 = vld [vmem:[%s3841 + $0xc] sm:$0xf]
        %v3846 = vld [vmem:[%s3841 + $0x10] sm:$0xf]
        %v3847 = vld [vmem:[%s3841 + $0x14] sm:$0xf]
        %v3848 = vld [vmem:[%s3841 + $0x18] sm:$0xf]
        %v3849 = vld [vmem:[%s3841 + $0x1c] sm:$0xf]
        %v3850 = vld [vmem:[%s3841 + $0x20] sm:$0xf]
        %v3851 = vld [vmem:[%s3841 + $0x24] sm:$0xf]
        %v3852 = vld [vmem:[%s3841 + $0x28] sm:$0xf]
        %v3853 = vld [vmem:[%s3841 + $0x2c] sm:$0xf]
        %v3854 = vld [vmem:[%s3841 + $0x30] sm:$0xf]
        %v3855 = vld [vmem:[%s3841 + $0x34] sm:$0xf]
        %v3856 = vld [vmem:[%s3841 + $0x38] sm:$0xf]
        %v3857 = vld [vmem:[%s3841 + $0x3c] sm:$0xf]
        %v3874 = vunpack.c.l.b16 %v3842
        %v3875 = vunpack.c.l.b16 %v3843
        %v3876 = vunpack.c.l.b16 %v3844
        %v3877 = vunpack.c.l.b16 %v3845
        %v3878 = vunpack.c.l.b16 %v3846
        %v3879 = vunpack.c.l.b16 %v3847
        %v3880 = vunpack.c.l.b16 %v3848
        %v3881 = vunpack.c.l.b16 %v3849
        %v3882 = vunpack.c.l.b16 %v3850
        %v3883 = vunpack.c.l.b16 %v3851
        %v3884 = vunpack.c.l.b16 %v3852
        %v3885 = vunpack.c.l.b16 %v3853
        %v3886 = vunpack.c.l.b16 %v3854
        %v3887 = vunpack.c.l.b16 %v3855
        %v3888 = vunpack.c.l.b16 %v3856
        %v3889 = vunpack.c.l.b16 %v3857
        %v3890 = vpack.c.b16 %v3875, %v3874
        %v3891 = vpack.c.b16 %v3877, %v3876
        %v3892 = vpack.c.b16 %v3879, %v3878
        %v3893 = vpack.c.b16 %v3881, %v3880
        %v3894 = vpack.c.b16 %v3883, %v3882
        %v3895 = vpack.c.b16 %v3885, %v3884
        %v3896 = vpack.c.b16 %v3887, %v3886
        %v3897 = vpack.c.b16 %v3889, %v3888
        %3906 = vmatprep.subr.bf16.mxu0 0
        %3907 = vmatpush1.bf16.msra.mxu0 %v3890
        %3908 = vmatprep.subr.bf16.mxu0 0
        %3909 = vmatpush1.bf16.msra.mxu0 %v3891
        %3910 = vmatprep.subr.bf16.mxu0 0
        %3911 = vmatpush1.bf16.msra.mxu0 %v3892
        %3912 = vmatprep.subr.bf16.mxu0 0
        %3913 = vmatpush1.bf16.msra.mxu0 %v3893
        %3914 = vmatprep.subr.bf16.mxu0 0
        %3915 = vmatpush1.bf16.msra.mxu0 %v3894
        %3916 = vmatprep.subr.bf16.mxu0 0
        %3917 = vmatpush1.bf16.msra.mxu0 %v3895
        %3918 = vmatprep.subr.bf16.mxu0 0
        %3919 = vmatpush1.bf16.msra.mxu0 %v3896
        %3920 = vmatprep.subr.bf16.mxu0 0
        %3921 = vmatpush1.bf16.msra.mxu0 %v3897
        %3922 = vmatprep.subr.bf16.mxu0 0
        %3923 = vmatpush1.bf16.msra.mxu0 0
        %3924 = vmatprep.subr.bf16.mxu0 0
        %3925 = vmatpush1.bf16.msra.mxu0 0
        %3926 = vmatprep.subr.bf16.mxu0 0
        %3927 = vmatpush1.bf16.msra.mxu0 0
        %3928 = vmatprep.subr.bf16.mxu0 0
        %3929 = vmatpush1.bf16.msra.mxu0 0
        %3930 = vmatprep.subr.bf16.mxu0 0
        %3931 = vmatpush1.bf16.msra.mxu0 0
        %3932 = vmatprep.subr.bf16.mxu0 0
        %3933 = vmatpush1.bf16.msra.mxu0 0
        %3934 = vmatprep.subr.bf16.mxu0 0
        %3935 = vmatpush1.bf16.msra.mxu0 0
        %3936 = vmatprep.subr.bf16.mxu0 0
        %3937 = vmatpush1.bf16.msra.mxu0 0
        %3938 = vmatprep.mubr.bf16.mxu0 0
        %3939 = vmatmul.mubr.bf16.gmra.mrb[0].mxu0 %v3837
        %v3940 = vpop.f32.mrb[0].mxu0
        %v3941 = vadd.f32 0.0, %v3940
        %v3942 = vpop.f32.mrb[0].mxu0
        %v3943 = vpop.f32.mrb[0].mxu0
        %v3944 = vadd.f32 0.0, %v3943
        %v3945 = vpop.f32.mrb[0].mxu0
        %3946 = vmatprep.mubr.bf16.mxu0 0
        %3947 = vmatmul.mubr.bf16.gmra.mrb[0].mxu0 %v3838
        %v3948 = vpop.f32.mrb[0].mxu0
        %v3949 = vadd.f32 0.0, %v3948
        %v3950 = vpop.f32.mrb[0].mxu0
        %v3951 = vpop.f32.mrb[0].mxu0
        %v3952 = vadd.f32 0.0, %v3951
        %v3953 = vpop.f32.mrb[0].mxu0
        %3954 = vmatprep.mubr.bf16.mxu0 0
        %3955 = vmatmul.mubr.bf16.gmra.mrb[0].mxu0 %v3839
        %v3956 = vpop.f32.mrb[0].mxu0
        %v3957 = vadd.f32 0.0, %v3956
        %v3958 = vpop.f32.mrb[0].mxu0
        %v3959 = vpop.f32.mrb[0].mxu0
        %v3960 = vadd.f32 0.0, %v3959
        %v3961 = vpop.f32.mrb[0].mxu0
        %3962 = vmatprep.mubr.bf16.mxu0 0
        %3963 = vmatmul.mubr.bf16.gmra.mrb[0].mxu0 %v3840
        %v3964 = vpop.f32.mrb[0].mxu0
        %v3965 = vadd.f32 0.0, %v3964
        %v3966 = vpop.f32.mrb[0].mxu0
        %v3967 = vpop.f32.mrb[0].mxu0
        %v3968 = vadd.f32 0.0, %v3967
        %v3969 = vpop.f32.mrb[0].mxu0
        %3970 = vdwg.mxu0
        %v3971 = vadd.f32 %v3821, %v3941
        %v3972 = vadd.f32 %v3822, %v3944
        %v3973 = vadd.f32 %v3823, %v3949
        %v3974 = vadd.f32 %v3824, %v3952
        %v3975 = vadd.f32 %v3825, %v3957
        %v3976 = vadd.f32 %v3826, %v3960
        %v3977 = vadd.f32 %v3827, %v3965
        %v3978 = vadd.f32 %v3828, %v3968
        %v3979 = vld [vmem:[%s3387 + $0x1] sm:$0xff]
        %v3980 = vld [vmem:[%s3387 + $0x11] sm:$0xff]
        %v3981 = vld [vmem:[%s3387 + $0x21] sm:$0xff]
        %v3982 = vld [vmem:[%s3387 + $0x31] sm:$0xff]
        %v3983 = vld [vmem:[%s3387 + $0x41] sm:$0xff]
        %v3984 = vld [vmem:[%s3387 + $0x51] sm:$0xff]
        %v3985 = vld [vmem:[%s3387 + $0x61] sm:$0xff]
        %v3986 = vld [vmem:[%s3387 + $0x71] sm:$0xff]
        %v3987 = vpack.c.bf16 %v3980, %v3979
        %v3988 = vpack.c.bf16 %v3982, %v3981
        %v3989 = vpack.c.bf16 %v3984, %v3983
        %v3990 = vpack.c.bf16 %v3986, %v3985
        %s3991 = scalar_lea.vmem %s4, 256
        %v3992 = vld [vmem:[%s3991] sm:$0xf]
        %v3993 = vld [vmem:[%s3991 + $0x4] sm:$0xf]
        %v3994 = vld [vmem:[%s3991 + $0x8] sm:$0xf]
        %v3995 = vld [vmem:[%s3991 + $0xc] sm:$0xf]
        %v3996 = vld [vmem:[%s3991 + $0x10] sm:$0xf]
        %v3997 = vld [vmem:[%s3991 + $0x14] sm:$0xf]
        %v3998 = vld [vmem:[%s3991 + $0x18] sm:$0xf]
        %v3999 = vld [vmem:[%s3991 + $0x1c] sm:$0xf]
        %v4000 = vld [vmem:[%s3991 + $0x20] sm:$0xf]
        %v4001 = vld [vmem:[%s3991 + $0x24] sm:$0xf]
        %v4002 = vld [vmem:[%s3991 + $0x28] sm:$0xf]
        %v4003 = vld [vmem:[%s3991 + $0x2c] sm:$0xf]
        %v4004 = vld [vmem:[%s3991 + $0x30] sm:$0xf]
        %v4005 = vld [vmem:[%s3991 + $0x34] sm:$0xf]
        %v4006 = vld [vmem:[%s3991 + $0x38] sm:$0xf]
        %v4007 = vld [vmem:[%s3991 + $0x3c] sm:$0xf]
        %v4024 = vunpack.c.l.b16 %v3992
        %v4025 = vunpack.c.l.b16 %v3993
        %v4026 = vunpack.c.l.b16 %v3994
        %v4027 = vunpack.c.l.b16 %v3995
        %v4028 = vunpack.c.l.b16 %v3996
        %v4029 = vunpack.c.l.b16 %v3997
        %v4030 = vunpack.c.l.b16 %v3998
        %v4031 = vunpack.c.l.b16 %v3999
        %v4032 = vunpack.c.l.b16 %v4000
        %v4033 = vunpack.c.l.b16 %v4001
        %v4034 = vunpack.c.l.b16 %v4002
        %v4035 = vunpack.c.l.b16 %v4003
        %v4036 = vunpack.c.l.b16 %v4004
        %v4037 = vunpack.c.l.b16 %v4005
        %v4038 = vunpack.c.l.b16 %v4006
        %v4039 = vunpack.c.l.b16 %v4007
        %v4040 = vpack.c.b16 %v4025, %v4024
        %v4041 = vpack.c.b16 %v4027, %v4026
        %v4042 = vpack.c.b16 %v4029, %v4028
        %v4043 = vpack.c.b16 %v4031, %v4030
        %v4044 = vpack.c.b16 %v4033, %v4032
        %v4045 = vpack.c.b16 %v4035, %v4034
        %v4046 = vpack.c.b16 %v4037, %v4036
        %v4047 = vpack.c.b16 %v4039, %v4038
        %4056 = vmatprep.subr.bf16.mxu0 0
        %4057 = vmatpush1.bf16.msra.mxu0 %v4040
        %4058 = vmatprep.subr.bf16.mxu0 0
        %4059 = vmatpush1.bf16.msra.mxu0 %v4041
        %4060 = vmatprep.subr.bf16.mxu0 0
        %4061 = vmatpush1.bf16.msra.mxu0 %v4042
        %4062 = vmatprep.subr.bf16.mxu0 0
        %4063 = vmatpush1.bf16.msra.mxu0 %v4043
        %4064 = vmatprep.subr.bf16.mxu0 0
        %4065 = vmatpush1.bf16.msra.mxu0 %v4044
        %4066 = vmatprep.subr.bf16.mxu0 0
        %4067 = vmatpush1.bf16.msra.mxu0 %v4045
        %4068 = vmatprep.subr.bf16.mxu0 0
        %4069 = vmatpush1.bf16.msra.mxu0 %v4046
        %4070 = vmatprep.subr.bf16.mxu0 0
        %4071 = vmatpush1.bf16.msra.mxu0 %v4047
        %4072 = vmatprep.subr.bf16.mxu0 0
        %4073 = vmatpush1.bf16.msra.mxu0 0
        %4074 = vmatprep.subr.bf16.mxu0 0
        %4075 = vmatpush1.bf16.msra.mxu0 0
        %4076 = vmatprep.subr.bf16.mxu0 0
        %4077 = vmatpush1.bf16.msra.mxu0 0
        %4078 = vmatprep.subr.bf16.mxu0 0
        %4079 = vmatpush1.bf16.msra.mxu0 0
        %4080 = vmatprep.subr.bf16.mxu0 0
        %4081 = vmatpush1.bf16.msra.mxu0 0
        %4082 = vmatprep.subr.bf16.mxu0 0
        %4083 = vmatpush1.bf16.msra.mxu0 0
        %4084 = vmatprep.subr.bf16.mxu0 0
        %4085 = vmatpush1.bf16.msra.mxu0 0
        %4086 = vmatprep.subr.bf16.mxu0 0
        %4087 = vmatpush1.bf16.msra.mxu0 0
        %4088 = vmatprep.mubr.bf16.mxu0 0
        %4089 = vmatmul.mubr.bf16.gmra.mrb[0].mxu0 %v3987
        %v4090 = vpop.f32.mrb[0].mxu0
        %v4091 = vadd.f32 0.0, %v4090
        %v4092 = vpop.f32.mrb[0].mxu0
        %v4093 = vpop.f32.mrb[0].mxu0
        %v4094 = vadd.f32 0.0, %v4093
        %v4095 = vpop.f32.mrb[0].mxu0
        %4096 = vmatprep.mubr.bf16.mxu0 0
        %4097 = vmatmul.mubr.bf16.gmra.mrb[0].mxu0 %v3988
        %v4098 = vpop.f32.mrb[0].mxu0
        %v4099 = vadd.f32 0.0, %v4098
        %v4100 = vpop.f32.mrb[0].mxu0
        %v4101 = vpop.f32.mrb[0].mxu0
        %v4102 = vadd.f32 0.0, %v4101
        %v4103 = vpop.f32.mrb[0].mxu0
        %4104 = vmatprep.mubr.bf16.mxu0 0
        %4105 = vmatmul.mubr.bf16.gmra.mrb[0].mxu0 %v3989
        %v4106 = vpop.f32.mrb[0].mxu0
        %v4107 = vadd.f32 0.0, %v4106
        %v4108 = vpop.f32.mrb[0].mxu0
        %v4109 = vpop.f32.mrb[0].mxu0
        %v4110 = vadd.f32 0.0, %v4109
        %v4111 = vpop.f32.mrb[0].mxu0
        %4112 = vmatprep.mubr.bf16.mxu0 0
        %4113 = vmatmul.mubr.bf16.gmra.mrb[0].mxu0 %v3990
        %v4114 = vpop.f32.mrb[0].mxu0
        %v4115 = vadd.f32 0.0, %v4114
        %v4116 = vpop.f32.mrb[0].mxu0
        %v4117 = vpop.f32.mrb[0].mxu0
        %v4118 = vadd.f32 0.0, %v4117
        %v4119 = vpop.f32.mrb[0].mxu0
        %4120 = vdwg.mxu0
        %v4121 = vadd.f32 %v3971, %v4091
        %v4122 = vadd.f32 %v3972, %v4094
        %v4123 = vadd.f32 %v3973, %v4099
        %v4124 = vadd.f32 %v3974, %v4102
        %v4125 = vadd.f32 %v3975, %v4107
        %v4126 = vadd.f32 %v3976, %v4110
        %v4127 = vadd.f32 %v3977, %v4115
        %v4128 = vadd.f32 %v3978, %v4118
        %v4129 = vld [vmem:[%s3387 + $0x2] sm:$0xff]
        %v4130 = vld [vmem:[%s3387 + $0x12] sm:$0xff]
        %v4131 = vld [vmem:[%s3387 + $0x22] sm:$0xff]
        %v4132 = vld [vmem:[%s3387 + $0x32] sm:$0xff]
        %v4133 = vld [vmem:[%s3387 + $0x42] sm:$0xff]
        %v4134 = vld [vmem:[%s3387 + $0x52] sm:$0xff]
        %v4135 = vld [vmem:[%s3387 + $0x62] sm:$0xff]
        %v4136 = vld [vmem:[%s3387 + $0x72] sm:$0xff]
        %v4137 = vpack.c.bf16 %v4130, %v4129
        %v4138 = vpack.c.bf16 %v4132, %v4131
        %v4139 = vpack.c.bf16 %v4134, %v4133
        %v4140 = vpack.c.bf16 %v4136, %v4135
        %s4141 = scalar_lea.vmem %s4, 320
        %v4142 = vld [vmem:[%s4141] sm:$0xf]
        %v4143 = vld [vmem:[%s4141 + $0x4] sm:$0xf]
        %v4144 = vld [vmem:[%s4141 + $0x8] sm:$0xf]
        %v4145 = vld [vmem:[%s4141 + $0xc] sm:$0xf]
        %v4146 = vld [vmem:[%s4141 + $0x10] sm:$0xf]
        %v4147 = vld [vmem:[%s4141 + $0x14] sm:$0xf]
        %v4148 = vld [vmem:[%s4141 + $0x18] sm:$0xf]
        %v4149 = vld [vmem:[%s4141 + $0x1c] sm:$0xf]
        %v4150 = vld [vmem:[%s4141 + $0x20] sm:$0xf]
        %v4151 = vld [vmem:[%s4141 + $0x24] sm:$0xf]
        %v4152 = vld [vmem:[%s4141 + $0x28] sm:$0xf]
        %v4153 = vld [vmem:[%s4141 + $0x2c] sm:$0xf]
        %v4154 = vld [vmem:[%s4141 + $0x30] sm:$0xf]
        %v4155 = vld [vmem:[%s4141 + $0x34] sm:$0xf]
        %v4156 = vld [vmem:[%s4141 + $0x38] sm:$0xf]
        %v4157 = vld [vmem:[%s4141 + $0x3c] sm:$0xf]
        %v4174 = vunpack.c.l.b16 %v4142
        %v4175 = vunpack.c.l.b16 %v4143
        %v4176 = vunpack.c.l.b16 %v4144
        %v4177 = vunpack.c.l.b16 %v4145
        %v4178 = vunpack.c.l.b16 %v4146
        %v4179 = vunpack.c.l.b16 %v4147
        %v4180 = vunpack.c.l.b16 %v4148
        %v4181 = vunpack.c.l.b16 %v4149
        %v4182 = vunpack.c.l.b16 %v4150
        %v4183 = vunpack.c.l.b16 %v4151
        %v4184 = vunpack.c.l.b16 %v4152
        %v4185 = vunpack.c.l.b16 %v4153
        %v4186 = vunpack.c.l.b16 %v4154
        %v4187 = vunpack.c.l.b16 %v4155
        %v4188 = vunpack.c.l.b16 %v4156
        %v4189 = vunpack.c.l.b16 %v4157
        %v4190 = vpack.c.b16 %v4175, %v4174
        %v4191 = vpack.c.b16 %v4177, %v4176
        %v4192 = vpack.c.b16 %v4179, %v4178
        %v4193 = vpack.c.b16 %v4181, %v4180
        %v4194 = vpack.c.b16 %v4183, %v4182
        %v4195 = vpack.c.b16 %v4185, %v4184
        %v4196 = vpack.c.b16 %v4187, %v4186
        %v4197 = vpack.c.b16 %v4189, %v4188
        %4206 = vmatprep.subr.bf16.mxu0 0
        %4207 = vmatpush1.bf16.msra.mxu0 %v4190
        %4208 = vmatprep.subr.bf16.mxu0 0
        %4209 = vmatpush1.bf16.msra.mxu0 %v4191
        %4210 = vmatprep.subr.bf16.mxu0 0
        %4211 = vmatpush1.bf16.msra.mxu0 %v4192
        %4212 = vmatprep.subr.bf16.mxu0 0
        %4213 = vmatpush1.bf16.msra.mxu0 %v4193
        %4214 = vmatprep.subr.bf16.mxu0 0
        %4215 = vmatpush1.bf16.msra.mxu0 %v4194
        %4216 = vmatprep.subr.bf16.mxu0 0
        %4217 = vmatpush1.bf16.msra.mxu0 %v4195
        %4218 = vmatprep.subr.bf16.mxu0 0
        %4219 = vmatpush1.bf16.msra.mxu0 %v4196
        %4220 = vmatprep.subr.bf16.mxu0 0
        %4221 = vmatpush1.bf16.msra.mxu0 %v4197
        %4222 = vmatprep.subr.bf16.mxu0 0
        %4223 = vmatpush1.bf16.msra.mxu0 0
        %4224 = vmatprep.subr.bf16.mxu0 0
        %4225 = vmatpush1.bf16.msra.mxu0 0
        %4226 = vmatprep.subr.bf16.mxu0 0
        %4227 = vmatpush1.bf16.msra.mxu0 0
        %4228 = vmatprep.subr.bf16.mxu0 0
        %4229 = vmatpush1.bf16.msra.mxu0 0
        %4230 = vmatprep.subr.bf16.mxu0 0
        %4231 = vmatpush1.bf16.msra.mxu0 0
        %4232 = vmatprep.subr.bf16.mxu0 0
        %4233 = vmatpush1.bf16.msra.mxu0 0
        %4234 = vmatprep.subr.bf16.mxu0 0
        %4235 = vmatpush1.bf16.msra.mxu0 0
        %4236 = vmatprep.subr.bf16.mxu0 0
        %4237 = vmatpush1.bf16.msra.mxu0 0
        %4238 = vmatprep.mubr.bf16.mxu0 0
        %4239 = vmatmul.mubr.bf16.gmra.mrb[0].mxu0 %v4137
        %v4240 = vpop.f32.mrb[0].mxu0
        %v4241 = vadd.f32 0.0, %v4240
        %v4242 = vpop.f32.mrb[0].mxu0
        %v4243 = vpop.f32.mrb[0].mxu0
        %v4244 = vadd.f32 0.0, %v4243
        %v4245 = vpop.f32.mrb[0].mxu0
        %4246 = vmatprep.mubr.bf16.mxu0 0
        %4247 = vmatmul.mubr.bf16.gmra.mrb[0].mxu0 %v4138
        %v4248 = vpop.f32.mrb[0].mxu0
        %v4249 = vadd.f32 0.0, %v4248
        %v4250 = vpop.f32.mrb[0].mxu0
        %v4251 = vpop.f32.mrb[0].mxu0
        %v4252 = vadd.f32 0.0, %v4251
        %v4253 = vpop.f32.mrb[0].mxu0
        %4254 = vmatprep.mubr.bf16.mxu0 0
        %4255 = vmatmul.mubr.bf16.gmra.mrb[0].mxu0 %v4139
        %v4256 = vpop.f32.mrb[0].mxu0
        %v4257 = vadd.f32 0.0, %v4256
        %v4258 = vpop.f32.mrb[0].mxu0
        %v4259 = vpop.f32.mrb[0].mxu0
        %v4260 = vadd.f32 0.0, %v4259
        %v4261 = vpop.f32.mrb[0].mxu0
        %4262 = vmatprep.mubr.bf16.mxu0 0
        %4263 = vmatmul.mubr.bf16.gmra.mrb[0].mxu0 %v4140
        %v4264 = vpop.f32.mrb[0].mxu0
        %v4265 = vadd.f32 0.0, %v4264
        %v4266 = vpop.f32.mrb[0].mxu0
        %v4267 = vpop.f32.mrb[0].mxu0
        %v4268 = vadd.f32 0.0, %v4267
        %v4269 = vpop.f32.mrb[0].mxu0
        %4270 = vdwg.mxu0
        %v4271 = vadd.f32 %v4121, %v4241
        %v4272 = vadd.f32 %v4122, %v4244
        %v4273 = vadd.f32 %v4123, %v4249
        %v4274 = vadd.f32 %v4124, %v4252
        %v4275 = vadd.f32 %v4125, %v4257
        %v4276 = vadd.f32 %v4126, %v4260
        %v4277 = vadd.f32 %v4127, %v4265
        %v4278 = vadd.f32 %v4128, %v4268
        %s4279 = scalar_lea.vmem [#allocation2], 32
        %v4280 = vld [vmem:[%s4279] sm:$0xff]
        %v4281 = vld [vmem:[%s4279 + $0x10] sm:$0xff]
        %v4282 = vld [vmem:[%s4279 + $0x20] sm:$0xff]
        %v4283 = vld [vmem:[%s4279 + $0x30] sm:$0xff]
        %v4284 = vld [vmem:[%s4279 + $0x40] sm:$0xff]
        %v4285 = vld [vmem:[%s4279 + $0x50] sm:$0xff]
        %v4286 = vld [vmem:[%s4279 + $0x60] sm:$0xff]
        %v4287 = vld [vmem:[%s4279 + $0x70] sm:$0xff]
        %v4288 = vpack.c.bf16 %v4281, %v4280
        %v4289 = vpack.c.bf16 %v4283, %v4282
        %v4290 = vpack.c.bf16 %v4285, %v4284
        %v4291 = vpack.c.bf16 %v4287, %v4286
        %s4292 = scalar_lea.vmem %s4, 384
        %v4293 = vld [vmem:[%s4292] sm:$0xf]
        %v4294 = vld [vmem:[%s4292 + $0x4] sm:$0xf]
        %v4295 = vld [vmem:[%s4292 + $0x8] sm:$0xf]
        %v4296 = vld [vmem:[%s4292 + $0xc] sm:$0xf]
        %v4297 = vld [vmem:[%s4292 + $0x10] sm:$0xf]
        %v4298 = vld [vmem:[%s4292 + $0x14] sm:$0xf]
        %v4299 = vld [vmem:[%s4292 + $0x18] sm:$0xf]
        %v4300 = vld [vmem:[%s4292 + $0x1c] sm:$0xf]
        %v4301 = vld [vmem:[%s4292 + $0x20] sm:$0xf]
        %v4302 = vld [vmem:[%s4292 + $0x24] sm:$0xf]
        %v4303 = vld [vmem:[%s4292 + $0x28] sm:$0xf]
        %v4304 = vld [vmem:[%s4292 + $0x2c] sm:$0xf]
        %v4305 = vld [vmem:[%s4292 + $0x30] sm:$0xf]
        %v4306 = vld [vmem:[%s4292 + $0x34] sm:$0xf]
        %v4307 = vld [vmem:[%s4292 + $0x38] sm:$0xf]
        %v4308 = vld [vmem:[%s4292 + $0x3c] sm:$0xf]
        %v4325 = vunpack.c.l.b16 %v4293
        %v4326 = vunpack.c.l.b16 %v4294
        %v4327 = vunpack.c.l.b16 %v4295
        %v4328 = vunpack.c.l.b16 %v4296
        %v4329 = vunpack.c.l.b16 %v4297
        %v4330 = vunpack.c.l.b16 %v4298
        %v4331 = vunpack.c.l.b16 %v4299
        %v4332 = vunpack.c.l.b16 %v4300
        %v4333 = vunpack.c.l.b16 %v4301
        %v4334 = vunpack.c.l.b16 %v4302
        %v4335 = vunpack.c.l.b16 %v4303
        %v4336 = vunpack.c.l.b16 %v4304
        %v4337 = vunpack.c.l.b16 %v4305
        %v4338 = vunpack.c.l.b16 %v4306
        %v4339 = vunpack.c.l.b16 %v4307
        %v4340 = vunpack.c.l.b16 %v4308
        %v4341 = vpack.c.b16 %v4326, %v4325
        %v4342 = vpack.c.b16 %v4328, %v4327
        %v4343 = vpack.c.b16 %v4330, %v4329
        %v4344 = vpack.c.b16 %v4332, %v4331
        %v4345 = vpack.c.b16 %v4334, %v4333
        %v4346 = vpack.c.b16 %v4336, %v4335
        %v4347 = vpack.c.b16 %v4338, %v4337
        %v4348 = vpack.c.b16 %v4340, %v4339
        %4357 = vmatprep.subr.bf16.mxu0 0
        %4358 = vmatpush1.bf16.msra.mxu0 %v4341
        %4359 = vmatprep.subr.bf16.mxu0 0
        %4360 = vmatpush1.bf16.msra.mxu0 %v4342
        %4361 = vmatprep.subr.bf16.mxu0 0
        %4362 = vmatpush1.bf16.msra.mxu0 %v4343
        %4363 = vmatprep.subr.bf16.mxu0 0
        %4364 = vmatpush1.bf16.msra.mxu0 %v4344
        %4365 = vmatprep.subr.bf16.mxu0 0
        %4366 = vmatpush1.bf16.msra.mxu0 %v4345
        %4367 = vmatprep.subr.bf16.mxu0 0
        %4368 = vmatpush1.bf16.msra.mxu0 %v4346
        %4369 = vmatprep.subr.bf16.mxu0 0
        %4370 = vmatpush1.bf16.msra.mxu0 %v4347
        %4371 = vmatprep.subr.bf16.mxu0 0
        %4372 = vmatpush1.bf16.msra.mxu0 %v4348
        %4373 = vmatprep.subr.bf16.mxu0 0
        %4374 = vmatpush1.bf16.msra.mxu0 0
        %4375 = vmatprep.subr.bf16.mxu0 0
        %4376 = vmatpush1.bf16.msra.mxu0 0
        %4377 = vmatprep.subr.bf16.mxu0 0
        %4378 = vmatpush1.bf16.msra.mxu0 0
        %4379 = vmatprep.subr.bf16.mxu0 0
        %4380 = vmatpush1.bf16.msra.mxu0 0
        %4381 = vmatprep.subr.bf16.mxu0 0
        %4382 = vmatpush1.bf16.msra.mxu0 0
        %4383 = vmatprep.subr.bf16.mxu0 0
        %4384 = vmatpush1.bf16.msra.mxu0 0
        %4385 = vmatprep.subr.bf16.mxu0 0
        %4386 = vmatpush1.bf16.msra.mxu0 0
        %4387 = vmatprep.subr.bf16.mxu0 0
        %4388 = vmatpush1.bf16.msra.mxu0 0
        %4389 = vmatprep.mubr.bf16.mxu0 0
        %4390 = vmatmul.mubr.bf16.gmra.mrb[0].mxu0 %v4288
        %v4391 = vpop.f32.mrb[0].mxu0
        %v4392 = vadd.f32 0.0, %v4391
        %v4393 = vpop.f32.mrb[0].mxu0
        %v4394 = vpop.f32.mrb[0].mxu0
        %v4395 = vadd.f32 0.0, %v4394
        %v4396 = vpop.f32.mrb[0].mxu0
        %4397 = vmatprep.mubr.bf16.mxu0 0
        %4398 = vmatmul.mubr.bf16.gmra.mrb[0].mxu0 %v4289
        %v4399 = vpop.f32.mrb[0].mxu0
        %v4400 = vadd.f32 0.0, %v4399
        %v4401 = vpop.f32.mrb[0].mxu0
        %v4402 = vpop.f32.mrb[0].mxu0
        %v4403 = vadd.f32 0.0, %v4402
        %v4404 = vpop.f32.mrb[0].mxu0
        %4405 = vmatprep.mubr.bf16.mxu0 0
        %4406 = vmatmul.mubr.bf16.gmra.mrb[0].mxu0 %v4290
        %v4407 = vpop.f32.mrb[0].mxu0
        %v4408 = vadd.f32 0.0, %v4407
        %v4409 = vpop.f32.mrb[0].mxu0
        %v4410 = vpop.f32.mrb[0].mxu0
        %v4411 = vadd.f32 0.0, %v4410
        %v4412 = vpop.f32.mrb[0].mxu0
        %4413 = vmatprep.mubr.bf16.mxu0 0
        %4414 = vmatmul.mubr.bf16.gmra.mrb[0].mxu0 %v4291
        %v4415 = vpop.f32.mrb[0].mxu0
        %v4416 = vadd.f32 0.0, %v4415
        %v4417 = vpop.f32.mrb[0].mxu0
        %v4418 = vpop.f32.mrb[0].mxu0
        %v4419 = vadd.f32 0.0, %v4418
        %v4420 = vpop.f32.mrb[0].mxu0
        %4421 = vdwg.mxu0
        %v4422 = vadd.f32 %v4271, %v4392
        %v4423 = vadd.f32 %v4272, %v4395
        %v4424 = vadd.f32 %v4273, %v4400
        %v4425 = vadd.f32 %v4274, %v4403
        %v4426 = vadd.f32 %v4275, %v4408
        %v4427 = vadd.f32 %v4276, %v4411
        %v4428 = vadd.f32 %v4277, %v4416
        %v4429 = vadd.f32 %v4278, %v4419
        %v4430 = vld [vmem:[%s4279 + $0x1] sm:$0xff]
        %v4431 = vld [vmem:[%s4279 + $0x11] sm:$0xff]
        %v4432 = vld [vmem:[%s4279 + $0x21] sm:$0xff]
        %v4433 = vld [vmem:[%s4279 + $0x31] sm:$0xff]
        %v4434 = vld [vmem:[%s4279 + $0x41] sm:$0xff]
        %v4435 = vld [vmem:[%s4279 + $0x51] sm:$0xff]
        %v4436 = vld [vmem:[%s4279 + $0x61] sm:$0xff]
        %v4437 = vld [vmem:[%s4279 + $0x71] sm:$0xff]
        %v4438 = vpack.c.bf16 %v4431, %v4430
        %v4439 = vpack.c.bf16 %v4433, %v4432
        %v4440 = vpack.c.bf16 %v4435, %v4434
        %v4441 = vpack.c.bf16 %v4437, %v4436
        %s4442 = scalar_lea.vmem %s4, 448
        %v4443 = vld [vmem:[%s4442] sm:$0xf]
        %v4444 = vld [vmem:[%s4442 + $0x4] sm:$0xf]
        %v4445 = vld [vmem:[%s4442 + $0x8] sm:$0xf]
        %v4446 = vld [vmem:[%s4442 + $0xc] sm:$0xf]
        %v4447 = vld [vmem:[%s4442 + $0x10] sm:$0xf]
        %v4448 = vld [vmem:[%s4442 + $0x14] sm:$0xf]
        %v4449 = vld [vmem:[%s4442 + $0x18] sm:$0xf]
        %v4450 = vld [vmem:[%s4442 + $0x1c] sm:$0xf]
        %v4451 = vld [vmem:[%s4442 + $0x20] sm:$0xf]
        %v4452 = vld [vmem:[%s4442 + $0x24] sm:$0xf]
        %v4453 = vld [vmem:[%s4442 + $0x28] sm:$0xf]
        %v4454 = vld [vmem:[%s4442 + $0x2c] sm:$0xf]
        %v4455 = vld [vmem:[%s4442 + $0x30] sm:$0xf]
        %v4456 = vld [vmem:[%s4442 + $0x34] sm:$0xf]
        %v4457 = vld [vmem:[%s4442 + $0x38] sm:$0xf]
        %v4458 = vld [vmem:[%s4442 + $0x3c] sm:$0xf]
        %v4475 = vunpack.c.l.b16 %v4443
        %v4476 = vunpack.c.l.b16 %v4444
        %v4477 = vunpack.c.l.b16 %v4445
        %v4478 = vunpack.c.l.b16 %v4446
        %v4479 = vunpack.c.l.b16 %v4447
        %v4480 = vunpack.c.l.b16 %v4448
        %v4481 = vunpack.c.l.b16 %v4449
        %v4482 = vunpack.c.l.b16 %v4450
        %v4483 = vunpack.c.l.b16 %v4451
        %v4484 = vunpack.c.l.b16 %v4452
        %v4485 = vunpack.c.l.b16 %v4453
        %v4486 = vunpack.c.l.b16 %v4454
        %v4487 = vunpack.c.l.b16 %v4455
        %v4488 = vunpack.c.l.b16 %v4456
        %v4489 = vunpack.c.l.b16 %v4457
        %v4490 = vunpack.c.l.b16 %v4458
        %v4491 = vpack.c.b16 %v4476, %v4475
        %v4492 = vpack.c.b16 %v4478, %v4477
        %v4493 = vpack.c.b16 %v4480, %v4479
        %v4494 = vpack.c.b16 %v4482, %v4481
        %v4495 = vpack.c.b16 %v4484, %v4483
        %v4496 = vpack.c.b16 %v4486, %v4485
        %v4497 = vpack.c.b16 %v4488, %v4487
        %v4498 = vpack.c.b16 %v4490, %v4489
        %4507 = vmatprep.subr.bf16.mxu0 0
        %4508 = vmatpush1.bf16.msra.mxu0 %v4491
        %4509 = vmatprep.subr.bf16.mxu0 0
        %4510 = vmatpush1.bf16.msra.mxu0 %v4492
        %4511 = vmatprep.subr.bf16.mxu0 0
        %4512 = vmatpush1.bf16.msra.mxu0 %v4493
        %4513 = vmatprep.subr.bf16.mxu0 0
        %4514 = vmatpush1.bf16.msra.mxu0 %v4494
        %4515 = vmatprep.subr.bf16.mxu0 0
        %4516 = vmatpush1.bf16.msra.mxu0 %v4495
        %4517 = vmatprep.subr.bf16.mxu0 0
        %4518 = vmatpush1.bf16.msra.mxu0 %v4496
        %4519 = vmatprep.subr.bf16.mxu0 0
        %4520 = vmatpush1.bf16.msra.mxu0 %v4497
        %4521 = vmatprep.subr.bf16.mxu0 0
        %4522 = vmatpush1.bf16.msra.mxu0 %v4498
        %4523 = vmatprep.subr.bf16.mxu0 0
        %4524 = vmatpush1.bf16.msra.mxu0 0
        %4525 = vmatprep.subr.bf16.mxu0 0
        %4526 = vmatpush1.bf16.msra.mxu0 0
        %4527 = vmatprep.subr.bf16.mxu0 0
        %4528 = vmatpush1.bf16.msra.mxu0 0
        %4529 = vmatprep.subr.bf16.mxu0 0
        %4530 = vmatpush1.bf16.msra.mxu0 0
        %4531 = vmatprep.subr.bf16.mxu0 0
        %4532 = vmatpush1.bf16.msra.mxu0 0
        %4533 = vmatprep.subr.bf16.mxu0 0
        %4534 = vmatpush1.bf16.msra.mxu0 0
        %4535 = vmatprep.subr.bf16.mxu0 0
        %4536 = vmatpush1.bf16.msra.mxu0 0
        %4537 = vmatprep.subr.bf16.mxu0 0
        %4538 = vmatpush1.bf16.msra.mxu0 0
        %4539 = vmatprep.mubr.bf16.mxu0 0
        %4540 = vmatmul.mubr.bf16.gmra.mrb[0].mxu0 %v4438
        %v4541 = vpop.f32.mrb[0].mxu0
        %v4542 = vadd.f32 0.0, %v4541
        %v4543 = vpop.f32.mrb[0].mxu0
        %v4544 = vpop.f32.mrb[0].mxu0
        %v4545 = vadd.f32 0.0, %v4544
        %v4546 = vpop.f32.mrb[0].mxu0
        %4547 = vmatprep.mubr.bf16.mxu0 0
        %4548 = vmatmul.mubr.bf16.gmra.mrb[0].mxu0 %v4439
        %v4549 = vpop.f32.mrb[0].mxu0
        %v4550 = vadd.f32 0.0, %v4549
        %v4551 = vpop.f32.mrb[0].mxu0
        %v4552 = vpop.f32.mrb[0].mxu0
        %v4553 = vadd.f32 0.0, %v4552
        %v4554 = vpop.f32.mrb[0].mxu0
        %4555 = vmatprep.mubr.bf16.mxu0 0
        %4556 = vmatmul.mubr.bf16.gmra.mrb[0].mxu0 %v4440
        %v4557 = vpop.f32.mrb[0].mxu0
        %v4558 = vadd.f32 0.0, %v4557
        %v4559 = vpop.f32.mrb[0].mxu0
        %v4560 = vpop.f32.mrb[0].mxu0
        %v4561 = vadd.f32 0.0, %v4560
        %v4562 = vpop.f32.mrb[0].mxu0
        %4563 = vmatprep.mubr.bf16.mxu0 0
        %4564 = vmatmul.mubr.bf16.gmra.mrb[0].mxu0 %v4441
        %v4565 = vpop.f32.mrb[0].mxu0
        %v4566 = vadd.f32 0.0, %v4565
        %v4567 = vpop.f32.mrb[0].mxu0
        %v4568 = vpop.f32.mrb[0].mxu0
        %v4569 = vadd.f32 0.0, %v4568
        %v4570 = vpop.f32.mrb[0].mxu0
        %4571 = vdwg.mxu0
        %v4572 = vadd.f32 %v4422, %v4542
        %v4573 = vadd.f32 %v4423, %v4545
        %v4574 = vadd.f32 %v4424, %v4550
        %v4575 = vadd.f32 %v4425, %v4553
        %v4576 = vadd.f32 %v4426, %v4558
        %v4577 = vadd.f32 %v4427, %v4561
        %v4578 = vadd.f32 %v4428, %v4566
        %v4579 = vadd.f32 %v4429, %v4569
        %v4580 = vld [vmem:[%s4279 + $0x2] sm:$0xff]
        %v4581 = vld [vmem:[%s4279 + $0x12] sm:$0xff]
        %v4582 = vld [vmem:[%s4279 + $0x22] sm:$0xff]
        %v4583 = vld [vmem:[%s4279 + $0x32] sm:$0xff]
        %v4584 = vld [vmem:[%s4279 + $0x42] sm:$0xff]
        %v4585 = vld [vmem:[%s4279 + $0x52] sm:$0xff]
        %v4586 = vld [vmem:[%s4279 + $0x62] sm:$0xff]
        %v4587 = vld [vmem:[%s4279 + $0x72] sm:$0xff]
        %v4588 = vpack.c.bf16 %v4581, %v4580
        %v4589 = vpack.c.bf16 %v4583, %v4582
        %v4590 = vpack.c.bf16 %v4585, %v4584
        %v4591 = vpack.c.bf16 %v4587, %v4586
        %s4592 = scalar_lea.vmem %s4, 512
        %v4593 = vld [vmem:[%s4592] sm:$0xf]
        %v4594 = vld [vmem:[%s4592 + $0x4] sm:$0xf]
        %v4595 = vld [vmem:[%s4592 + $0x8] sm:$0xf]
        %v4596 = vld [vmem:[%s4592 + $0xc] sm:$0xf]
        %v4597 = vld [vmem:[%s4592 + $0x10] sm:$0xf]
        %v4598 = vld [vmem:[%s4592 + $0x14] sm:$0xf]
        %v4599 = vld [vmem:[%s4592 + $0x18] sm:$0xf]
        %v4600 = vld [vmem:[%s4592 + $0x1c] sm:$0xf]
        %v4601 = vld [vmem:[%s4592 + $0x20] sm:$0xf]
        %v4602 = vld [vmem:[%s4592 + $0x24] sm:$0xf]
        %v4603 = vld [vmem:[%s4592 + $0x28] sm:$0xf]
        %v4604 = vld [vmem:[%s4592 + $0x2c] sm:$0xf]
        %v4605 = vld [vmem:[%s4592 + $0x30] sm:$0xf]
        %v4606 = vld [vmem:[%s4592 + $0x34] sm:$0xf]
        %v4607 = vld [vmem:[%s4592 + $0x38] sm:$0xf]
        %v4608 = vld [vmem:[%s4592 + $0x3c] sm:$0xf]
        %v4625 = vunpack.c.l.b16 %v4593
        %v4626 = vunpack.c.l.b16 %v4594
        %v4627 = vunpack.c.l.b16 %v4595
        %v4628 = vunpack.c.l.b16 %v4596
        %v4629 = vunpack.c.l.b16 %v4597
        %v4630 = vunpack.c.l.b16 %v4598
        %v4631 = vunpack.c.l.b16 %v4599
        %v4632 = vunpack.c.l.b16 %v4600
        %v4633 = vunpack.c.l.b16 %v4601
        %v4634 = vunpack.c.l.b16 %v4602
        %v4635 = vunpack.c.l.b16 %v4603
        %v4636 = vunpack.c.l.b16 %v4604
        %v4637 = vunpack.c.l.b16 %v4605
        %v4638 = vunpack.c.l.b16 %v4606
        %v4639 = vunpack.c.l.b16 %v4607
        %v4640 = vunpack.c.l.b16 %v4608
        %v4641 = vpack.c.b16 %v4626, %v4625
        %v4642 = vpack.c.b16 %v4628, %v4627
        %v4643 = vpack.c.b16 %v4630, %v4629
        %v4644 = vpack.c.b16 %v4632, %v4631
        %v4645 = vpack.c.b16 %v4634, %v4633
        %v4646 = vpack.c.b16 %v4636, %v4635
        %v4647 = vpack.c.b16 %v4638, %v4637
        %v4648 = vpack.c.b16 %v4640, %v4639
        %4657 = vmatprep.subr.bf16.mxu0 0
        %4658 = vmatpush1.bf16.msra.mxu0 %v4641
        %4659 = vmatprep.subr.bf16.mxu0 0
        %4660 = vmatpush1.bf16.msra.mxu0 %v4642
        %4661 = vmatprep.subr.bf16.mxu0 0
        %4662 = vmatpush1.bf16.msra.mxu0 %v4643
        %4663 = vmatprep.subr.bf16.mxu0 0
        %4664 = vmatpush1.bf16.msra.mxu0 %v4644
        %4665 = vmatprep.subr.bf16.mxu0 0
        %4666 = vmatpush1.bf16.msra.mxu0 %v4645
        %4667 = vmatprep.subr.bf16.mxu0 0
        %4668 = vmatpush1.bf16.msra.mxu0 %v4646
        %4669 = vmatprep.subr.bf16.mxu0 0
        %4670 = vmatpush1.bf16.msra.mxu0 %v4647
        %4671 = vmatprep.subr.bf16.mxu0 0
        %4672 = vmatpush1.bf16.msra.mxu0 %v4648
        %4673 = vmatprep.subr.bf16.mxu0 0
        %4674 = vmatpush1.bf16.msra.mxu0 0
        %4675 = vmatprep.subr.bf16.mxu0 0
        %4676 = vmatpush1.bf16.msra.mxu0 0
        %4677 = vmatprep.subr.bf16.mxu0 0
        %4678 = vmatpush1.bf16.msra.mxu0 0
        %4679 = vmatprep.subr.bf16.mxu0 0
        %4680 = vmatpush1.bf16.msra.mxu0 0
        %4681 = vmatprep.subr.bf16.mxu0 0
        %4682 = vmatpush1.bf16.msra.mxu0 0
        %4683 = vmatprep.subr.bf16.mxu0 0
        %4684 = vmatpush1.bf16.msra.mxu0 0
        %4685 = vmatprep.subr.bf16.mxu0 0
        %4686 = vmatpush1.bf16.msra.mxu0 0
        %4687 = vmatprep.subr.bf16.mxu0 0
        %4688 = vmatpush1.bf16.msra.mxu0 0
        %4689 = vmatprep.mubr.bf16.mxu0 0
        %4690 = vmatmul.mubr.bf16.gmra.mrb[0].mxu0 %v4588
        %v4691 = vpop.f32.mrb[0].mxu0
        %v4692 = vadd.f32 0.0, %v4691
        %v4693 = vpop.f32.mrb[0].mxu0
        %v4694 = vpop.f32.mrb[0].mxu0
        %v4695 = vadd.f32 0.0, %v4694
        %v4696 = vpop.f32.mrb[0].mxu0
        %4697 = vmatprep.mubr.bf16.mxu0 0
        %4698 = vmatmul.mubr.bf16.gmra.mrb[0].mxu0 %v4589
        %v4699 = vpop.f32.mrb[0].mxu0
        %v4700 = vadd.f32 0.0, %v4699
        %v4701 = vpop.f32.mrb[0].mxu0
        %v4702 = vpop.f32.mrb[0].mxu0
        %v4703 = vadd.f32 0.0, %v4702
        %v4704 = vpop.f32.mrb[0].mxu0
        %4705 = vmatprep.mubr.bf16.mxu0 0
        %4706 = vmatmul.mubr.bf16.gmra.mrb[0].mxu0 %v4590
        %v4707 = vpop.f32.mrb[0].mxu0
        %v4708 = vadd.f32 0.0, %v4707
        %v4709 = vpop.f32.mrb[0].mxu0
        %v4710 = vpop.f32.mrb[0].mxu0
        %v4711 = vadd.f32 0.0, %v4710
        %v4712 = vpop.f32.mrb[0].mxu0
        %4713 = vmatprep.mubr.bf16.mxu0 0
        %4714 = vmatmul.mubr.bf16.gmra.mrb[0].mxu0 %v4591
        %v4715 = vpop.f32.mrb[0].mxu0
        %v4716 = vadd.f32 0.0, %v4715
        %v4717 = vpop.f32.mrb[0].mxu0
        %v4718 = vpop.f32.mrb[0].mxu0
        %v4719 = vadd.f32 0.0, %v4718
        %v4720 = vpop.f32.mrb[0].mxu0
        %4721 = vdwg.mxu0
        %v4722 = vadd.f32 %v4572, %v4692
        %v4723 = vadd.f32 %v4573, %v4695
        %v4724 = vadd.f32 %v4574, %v4700
        %v4725 = vadd.f32 %v4575, %v4703
        %v4726 = vadd.f32 %v4576, %v4708
        %v4727 = vadd.f32 %v4577, %v4711
        %v4728 = vadd.f32 %v4578, %v4716
        %v4729 = vadd.f32 %v4579, %v4719
        %v4730 = vld [vmem:[%s5] sm:$0x1]
        %v4732 = vlaneseq
        %v4733 = vshrl.u32 %v4732, 7
        %v4734 = vsub.s32 0, %v4733
        %v4735 = vrot.slane %v4730, %v4734
        %v4737 = vadd.f32 %v4722, %v4735
        %v4738 = vadd.f32 %v4723, %v4735
        %v4739 = vadd.f32 %v4724, %v4735
        %v4740 = vadd.f32 %v4725, %v4735
        %v4741 = vadd.f32 %v4726, %v4735
        %v4742 = vadd.f32 %v4727, %v4735
        %v4743 = vadd.f32 %v4728, %v4735
        %v4744 = vadd.f32 %v4729, %v4735
        %vm4745 = vcmp.ge.f32.partialorder %v4737, 0.0
        %vm4746 = vcmp.ge.f32.partialorder %v4738, 0.0
        %vm4747 = vcmp.ge.f32.partialorder %v4739, 0.0
        %vm4748 = vcmp.ge.f32.partialorder %v4740, 0.0
        %vm4749 = vcmp.ge.f32.partialorder %v4741, 0.0
        %vm4750 = vcmp.ge.f32.partialorder %v4742, 0.0
        %vm4751 = vcmp.ge.f32.partialorder %v4743, 0.0
        %vm4752 = vcmp.ge.f32.partialorder %v4744, 0.0
        %v4753 = vld [vmem:[%s6] sm:$0x1]
        %v4755 = vlaneseq
        %v4756 = vshrl.u32 %v4755, 7
        %v4757 = vsub.s32 0, %v4756
        %v4758 = vrot.slane %v4753, %v4757
        %v4760 = vmul.f32 %v4758, %v4737
        %v4761 = vmul.f32 %v4758, %v4738
        %v4762 = vmul.f32 %v4758, %v4739
        %v4763 = vmul.f32 %v4758, %v4740
        %v4764 = vmul.f32 %v4758, %v4741
        %v4765 = vmul.f32 %v4758, %v4742
        %v4766 = vmul.f32 %v4758, %v4743
        %v4767 = vmul.f32 %v4758, %v4744
        %v4768 = vsel %vm4745, %v4737, %v4760
        %v4769 = vsel %vm4746, %v4738, %v4761
        %v4770 = vsel %vm4747, %v4739, %v4762
        %v4771 = vsel %vm4748, %v4740, %v4763
        %v4772 = vsel %vm4749, %v4741, %v4764
        %v4773 = vsel %vm4750, %v4742, %v4765
        %v4774 = vsel %vm4751, %v4743, %v4766
        %v4775 = vsel %vm4752, %v4744, %v4767
        %v4776 = vadd.f32 %v4768, %v4769
        %v4777 = vadd.f32 %v4776, %v4770
        %v4778 = vadd.f32 %v4777, %v4771
        %v4779 = vadd.f32 %v4778, %v4772
        %v4780 = vadd.f32 %v4779, %v4773
        %v4781 = vadd.f32 %v4780, %v4774
        %v4782 = vadd.f32 %v4781, %v4775
        %v4783 = vrot.slane %v4782, 4
        %v4784 = vadd.f32 %v4782, %v4783
        %v4785 = vrot.slane %v4784, 2
        %v4786 = vadd.f32 %v4784, %v4785
        %v4787 = vrot.slane %v4786, 1
        %v4788 = vadd.f32 %v4786, %v4787
        %v4789 = vrcp.pop 64.0
        %v4790 = vmul.f32 %v4788, %v4789
        %v4791 = vpack.c.bf16 %v4790, %v4790
        %v4792 = vld [vmem:[%s8] sm:$0xff]
        %v4793 = vld [vmem:[%s8 + $0x8] sm:$0xff]
        %v4794 = vld [vmem:[%s8 + $0x10] sm:$0xff]
        %v4795 = vld [vmem:[%s8 + $0x18] sm:$0xff]
        %v4796 = vld [vmem:[%s8 + $0x20] sm:$0xff]
        %v4797 = vld [vmem:[%s8 + $0x28] sm:$0xff]
        %v4798 = vld [vmem:[%s8 + $0x30] sm:$0xff]
        %v4799 = vld [vmem:[%s8 + $0x38] sm:$0xff]
        %v4800 = vld [vmem:[%s8 + $0x40] sm:$0xff]
        %v4801 = vld [vmem:[%s8 + $0x48] sm:$0xff]
        %v4802 = vld [vmem:[%s8 + $0x50] sm:$0xff]
        %v4803 = vld [vmem:[%s8 + $0x58] sm:$0xff]
        %v4804 = vld [vmem:[%s8 + $0x60] sm:$0xff]
        %v4805 = vld [vmem:[%s8 + $0x68] sm:$0xff]
        %v4806 = vld [vmem:[%s8 + $0x70] sm:$0xff]
        %v4807 = vld [vmem:[%s8 + $0x78] sm:$0xff]
        %v4808 = vld [vmem:[%s8 + $0x80] sm:$0xff]
        %v4809 = vld [vmem:[%s8 + $0x88] sm:$0xff]
        %v4810 = vld [vmem:[%s8 + $0x90] sm:$0xff]
        %v4811 = vld [vmem:[%s8 + $0x98] sm:$0xff]
        %v4812 = vld [vmem:[%s8 + $0xa0] sm:$0xff]
        %v4813 = vld [vmem:[%s8 + $0xa8] sm:$0xff]
        %v4814 = vld [vmem:[%s8 + $0xb0] sm:$0xff]
        %v4815 = vld [vmem:[%s8 + $0xb8] sm:$0xff]
        %v4816 = vld [vmem:[%s8 + $0xc0] sm:$0xff]
        %v4817 = vld [vmem:[%s8 + $0xc8] sm:$0xff]
        %v4818 = vld [vmem:[%s8 + $0xd0] sm:$0xff]
        %v4819 = vld [vmem:[%s8 + $0xd8] sm:$0xff]
        %v4820 = vld [vmem:[%s8 + $0xe0] sm:$0xff]
        %v4821 = vld [vmem:[%s8 + $0xe8] sm:$0xff]
        %v4822 = vld [vmem:[%s8 + $0xf0] sm:$0xff]
        %v4823 = vld [vmem:[%s8 + $0xf8] sm:$0xff]
        %v4824 = vld [vmem:[%s9] sm:$0xf]
        %v4857 = vunpack.c.l.b16 %v4792
        %v4858 = vunpack.c.h.b16 %v4792
        %v4859 = vunpack.c.l.b16 %v4793
        %v4860 = vunpack.c.h.b16 %v4793
        %v4861 = vunpack.c.l.b16 %v4794
        %v4862 = vunpack.c.h.b16 %v4794
        %v4863 = vunpack.c.l.b16 %v4795
        %v4864 = vunpack.c.h.b16 %v4795
        %v4865 = vunpack.c.l.b16 %v4796
        %v4866 = vunpack.c.h.b16 %v4796
        %v4867 = vunpack.c.l.b16 %v4797
        %v4868 = vunpack.c.h.b16 %v4797
        %v4869 = vunpack.c.l.b16 %v4798
        %v4870 = vunpack.c.h.b16 %v4798
        %v4871 = vunpack.c.l.b16 %v4799
        %v4872 = vunpack.c.h.b16 %v4799
        %v4873 = vunpack.c.l.b16 %v4800
        %v4874 = vunpack.c.h.b16 %v4800
        %v4875 = vunpack.c.l.b16 %v4801
        %v4876 = vunpack.c.h.b16 %v4801
        %v4877 = vunpack.c.l.b16 %v4802
        %v4878 = vunpack.c.h.b16 %v4802
        %v4879 = vunpack.c.l.b16 %v4803
        %v4880 = vunpack.c.h.b16 %v4803
        %v4881 = vunpack.c.l.b16 %v4804
        %v4882 = vunpack.c.h.b16 %v4804
        %v4883 = vunpack.c.l.b16 %v4805
        %v4884 = vunpack.c.h.b16 %v4805
        %v4885 = vunpack.c.l.b16 %v4806
        %v4886 = vunpack.c.h.b16 %v4806
        %v4887 = vunpack.c.l.b16 %v4807
        %v4888 = vunpack.c.h.b16 %v4807
        %v4889 = vunpack.c.l.b16 %v4808
        %v4890 = vunpack.c.h.b16 %v4808
        %v4891 = vunpack.c.l.b16 %v4809
        %v4892 = vunpack.c.h.b16 %v4809
        %v4893 = vunpack.c.l.b16 %v4810
        %v4894 = vunpack.c.h.b16 %v4810
        %v4895 = vunpack.c.l.b16 %v4811
        %v4896 = vunpack.c.h.b16 %v4811
        %v4897 = vunpack.c.l.b16 %v4812
        %v4898 = vunpack.c.h.b16 %v4812
        %v4899 = vunpack.c.l.b16 %v4813
        %v4900 = vunpack.c.h.b16 %v4813
        %v4901 = vunpack.c.l.b16 %v4814
        %v4902 = vunpack.c.h.b16 %v4814
        %v4903 = vunpack.c.l.b16 %v4815
        %v4904 = vunpack.c.h.b16 %v4815
        %v4905 = vunpack.c.l.b16 %v4816
        %v4906 = vunpack.c.h.b16 %v4816
        %v4907 = vunpack.c.l.b16 %v4817
        %v4908 = vunpack.c.h.b16 %v4817
        %v4909 = vunpack.c.l.b16 %v4818
        %v4910 = vunpack.c.h.b16 %v4818
        %v4911 = vunpack.c.l.b16 %v4819
        %v4912 = vunpack.c.h.b16 %v4819
        %v4913 = vunpack.c.l.b16 %v4820
        %v4914 = vunpack.c.h.b16 %v4820
        %v4915 = vunpack.c.l.b16 %v4821
        %v4916 = vunpack.c.h.b16 %v4821
        %v4917 = vunpack.c.l.b16 %v4822
        %v4918 = vunpack.c.h.b16 %v4822
        %v4919 = vunpack.c.l.b16 %v4823
        %v4920 = vunpack.c.h.b16 %v4823
        %v4921 = vpack.c.b16 %v4861, %v4857
        %v4922 = vpack.c.b16 %v4862, %v4858
        %v4923 = vpack.c.b16 %v4863, %v4859
        %v4924 = vpack.c.b16 %v4864, %v4860
        %v4925 = vpack.c.b16 %v4869, %v4865
        %v4926 = vpack.c.b16 %v4870, %v4866
        %v4927 = vpack.c.b16 %v4871, %v4867
        %v4928 = vpack.c.b16 %v4872, %v4868
        %v4929 = vpack.c.b16 %v4877, %v4873
        %v4930 = vpack.c.b16 %v4878, %v4874
        %v4931 = vpack.c.b16 %v4879, %v4875
        %v4932 = vpack.c.b16 %v4880, %v4876
        %v4933 = vpack.c.b16 %v4885, %v4881
        %v4934 = vpack.c.b16 %v4886, %v4882
        %v4935 = vpack.c.b16 %v4887, %v4883
        %v4936 = vpack.c.b16 %v4888, %v4884
        %v4937 = vpack.c.b16 %v4893, %v4889
        %v4938 = vpack.c.b16 %v4894, %v4890
        %v4939 = vpack.c.b16 %v4895, %v4891
        %v4940 = vpack.c.b16 %v4896, %v4892
        %v4941 = vpack.c.b16 %v4901, %v4897
        %v4942 = vpack.c.b16 %v4902, %v4898
        %v4943 = vpack.c.b16 %v4903, %v4899
        %v4944 = vpack.c.b16 %v4904, %v4900
        %v4945 = vpack.c.b16 %v4909, %v4905
        %v4946 = vpack.c.b16 %v4910, %v4906
        %v4947 = vpack.c.b16 %v4911, %v4907
        %v4948 = vpack.c.b16 %v4912, %v4908
        %v4949 = vpack.c.b16 %v4917, %v4913
        %v4950 = vpack.c.b16 %v4918, %v4914
        %v4951 = vpack.c.b16 %v4919, %v4915
        %v4952 = vpack.c.b16 %v4920, %v4916
        %v4986 = vlaneseq
        %v4987 = vshrl.u32 %v4986, 7
        %v4988 = vsub.s32 0, %v4987
        %v4989 = vrot.slane %v4824, %v4988
        %v4990 = vlaneseq
        %v4991 = vshrl.u32 %v4990, 7
        %v4992 = vsub.s32 1, %v4991
        %v4993 = vrot.slane %v4824, %v4992
        %v4994 = vlaneseq
        %v4995 = vshrl.u32 %v4994, 7
        %v4996 = vsub.s32 2, %v4995
        %v4997 = vrot.slane %v4824, %v4996
        %v4998 = vlaneseq
        %v4999 = vshrl.u32 %v4998, 7
        %v5000 = vsub.s32 3, %v4999
        %v5001 = vrot.slane %v4824, %v5000
        %5006 = vmatprep.subr.bf16.mxu0 %v4922
        %5007 = vmatpush1.bf16.msra.mxu0 %v4921
        %5008 = vmatprep.subr.bf16.mxu0 %v4926
        %5009 = vmatpush1.bf16.msra.mxu0 %v4925
        %5010 = vmatprep.subr.bf16.mxu0 %v4930
        %5011 = vmatpush1.bf16.msra.mxu0 %v4929
        %5012 = vmatprep.subr.bf16.mxu0 %v4934
        %5013 = vmatpush1.bf16.msra.mxu0 %v4933
        %5014 = vmatprep.subr.bf16.mxu0 %v4938
        %5015 = vmatpush1.bf16.msra.mxu0 %v4937
        %5016 = vmatprep.subr.bf16.mxu0 %v4942
        %5017 = vmatpush1.bf16.msra.mxu0 %v4941
        %5018 = vmatprep.subr.bf16.mxu0 %v4946
        %5019 = vmatpush1.bf16.msra.mxu0 %v4945
        %5020 = vmatprep.subr.bf16.mxu0 %v4950
        %5021 = vmatpush1.bf16.msra.mxu0 %v4949
        %5022 = vmatprep.subr.bf16.mxu0 0
        %5023 = vmatpush1.bf16.msra.mxu0 0
        %5024 = vmatprep.subr.bf16.mxu0 0
        %5025 = vmatpush1.bf16.msra.mxu0 0
        %5026 = vmatprep.subr.bf16.mxu0 0
        %5027 = vmatpush1.bf16.msra.mxu0 0
        %5028 = vmatprep.subr.bf16.mxu0 0
        %5029 = vmatpush1.bf16.msra.mxu0 0
        %5030 = vmatprep.subr.bf16.mxu0 0
        %5031 = vmatpush1.bf16.msra.mxu0 0
        %5032 = vmatprep.subr.bf16.mxu0 0
        %5033 = vmatpush1.bf16.msra.mxu0 0
        %5034 = vmatprep.subr.bf16.mxu0 0
        %5035 = vmatpush1.bf16.msra.mxu0 0
        %5036 = vmatprep.subr.bf16.mxu0 0
        %5037 = vmatpush1.bf16.msra.mxu0 0
        %5038 = vmatprep.mubr.bf16.mxu0 0
        %5039 = vmatmul.mubr.bf16.gmra.mrb[0].mxu0 %v4791
        %v5040 = vpop.f32.mrb[0].mxu0
        %v5041 = vadd.f32 %v4989, %v5040
        %v5042 = vpop.f32.mrb[0].mxu0
        %v5043 = vadd.f32 %v4993, %v5042
        %v5044 = vpop.f32.mrb[0].mxu0
        %v5045 = vpop.f32.mrb[0].mxu0
        %5046 = vdwg.mxu0
        %5047 = vmatprep.subr.bf16.mxu0 %v4924
        %5048 = vmatpush1.bf16.msra.mxu0 %v4923
        %5049 = vmatprep.subr.bf16.mxu0 %v4928
        %5050 = vmatpush1.bf16.msra.mxu0 %v4927
        %5051 = vmatprep.subr.bf16.mxu0 %v4932
        %5052 = vmatpush1.bf16.msra.mxu0 %v4931
        %5053 = vmatprep.subr.bf16.mxu0 %v4936
        %5054 = vmatpush1.bf16.msra.mxu0 %v4935
        %5055 = vmatprep.subr.bf16.mxu0 %v4940
        %5056 = vmatpush1.bf16.msra.mxu0 %v4939
        %5057 = vmatprep.subr.bf16.mxu0 %v4944
        %5058 = vmatpush1.bf16.msra.mxu0 %v4943
        %5059 = vmatprep.subr.bf16.mxu0 %v4948
        %5060 = vmatpush1.bf16.msra.mxu0 %v4947
        %5061 = vmatprep.subr.bf16.mxu0 %v4952
        %5062 = vmatpush1.bf16.msra.mxu0 %v4951
        %5063 = vmatprep.subr.bf16.mxu0 0
        %5064 = vmatpush1.bf16.msra.mxu0 0
        %5065 = vmatprep.subr.bf16.mxu0 0
        %5066 = vmatpush1.bf16.msra.mxu0 0
        %5067 = vmatprep.subr.bf16.mxu0 0
        %5068 = vmatpush1.bf16.msra.mxu0 0
        %5069 = vmatprep.subr.bf16.mxu0 0
        %5070 = vmatpush1.bf16.msra.mxu0 0
        %5071 = vmatprep.subr.bf16.mxu0 0
        %5072 = vmatpush1.bf16.msra.mxu0 0
        %5073 = vmatprep.subr.bf16.mxu0 0
        %5074 = vmatpush1.bf16.msra.mxu0 0
        %5075 = vmatprep.subr.bf16.mxu0 0
        %5076 = vmatpush1.bf16.msra.mxu0 0
        %5077 = vmatprep.subr.bf16.mxu0 0
        %5078 = vmatpush1.bf16.msra.mxu0 0
        %5079 = vmatprep.mubr.bf16.mxu0 0
        %5080 = vmatmul.mubr.bf16.gmra.mrb[0].mxu0 %v4791
        %v5081 = vpop.f32.mrb[0].mxu0
        %v5082 = vadd.f32 %v4997, %v5081
        %v5083 = vpop.f32.mrb[0].mxu0
        %v5084 = vadd.f32 %v5001, %v5083
        %v5085 = vpop.f32.mrb[0].mxu0
        %v5086 = vpop.f32.mrb[0].mxu0
        %5087 = vdwg.mxu0
        %v5088 = vld [vmem:[%s10] sm:$0xf]
        %v5090 = vlaneseq
        %v5091 = vshrl.u32 %v5090, 7
        %v5092 = vsub.s32 0, %v5091
        %v5093 = vrot.slane %v5088, %v5092
        %v5094 = vlaneseq
        %v5095 = vshrl.u32 %v5094, 7
        %v5096 = vsub.s32 1, %v5095
        %v5097 = vrot.slane %v5088, %v5096
        %v5098 = vlaneseq
        %v5099 = vshrl.u32 %v5098, 7
        %v5100 = vsub.s32 2, %v5099
        %v5101 = vrot.slane %v5088, %v5100
        %v5102 = vlaneseq
        %v5103 = vshrl.u32 %v5102, 7
        %v5104 = vsub.s32 3, %v5103
        %v5105 = vrot.slane %v5088, %v5104
        %v5110 = vadd.f32 %v5041, %v5093
        %v5111 = vadd.f32 %v5043, %v5097
        %v5112 = vadd.f32 %v5082, %v5101
        %v5113 = vadd.f32 %v5084, %v5105
        %v5118 = vcombine.low %v5110, %v5111
        %v5119 = vcombine.low %v5112, %v5113
        %v5121 = vunpack.c.l.s4 1966171168
        %v5122 = vunpack.c.0.s8 %v5121
        %v5123 = vlaneseq
        %v5124 = vshrl.u32 %v5123, 7
        %v5125 = vsub.s32 %v5122, %v5124
        %v5126 = vrot.slane %v5118, %v5125
        %v5128 = vunpack.c.l.s4 1966171168
        %v5129 = vunpack.c.0.s8 %v5128
        %v5130 = vlaneseq
        %v5131 = vshrl.u32 %v5130, 7
        %v5132 = vsub.s32 %v5129, %v5131
        %v5133 = vrot.slane %v5119, %v5132
        %v5134 = vcombine.low %v5126, %v5133
        %v5136 = vunpack.c.l.s4 1966171168
        %v5137 = vunpack.c.0.s8 %v5136
        %v5138 = vlaneseq
        %v5139 = vshrl.u32 %v5138, 7
        %v5140 = vsub.s32 %v5137, %v5139
        %v5141 = vrot.slane %v5134, %v5140
        %v5143 = vlaneseq
        %vm5144 = vcmp.ge.s32.totalorder %v5143, 0
        %vm5145 = vcmp.lt.s32.totalorder %v5143, 512
        %vm5146 = vmand %vm5144, %vm5145
        %5147 = vst.msk [vmem:[%s394] sm:$0xf] %vm5146, %v5141
        %s5148 = sand.u32 %s270, 1
        %s5149 = scalar_lea.sflag [#allocation5], %s5148
        %s5150 = sand.u32 %s270, 1
        %s5151 = smul.addr %s5150, 4
        %s5152 = scalar_lea.vmem [#allocation6], %s5151
        // Predicated region
        $region69: #{tpu_custom_call.1} parent=63 // pred_check
          %p5153 = pneg %p280
        $region70: #{tpu_custom_call.1} parent=63 // pred_check_branch
          %5155 = sbr.rel (%p5153) target = $region72
        $region71: #{tpu_custom_call.1} parent=63 // pred_region
          %s5157 = ssub.s32 64, 64
          %5158 = vsyncadd %s5149, %s5157
          %s5159 = smul.addr %s26, 4
          %s5160 = smul.addr %s5159, 16
          %s5161 = scalar_lea.hbm %s11, %s5160
          %s5163 = sshll.u32 %s5152, 4
          %s5164 = int_to_ptr.vmem [resolvable:$true] %s5163
          %5166 = dma.vmem_to_hbm [thread:$0]  %s5164, 64, %s5161, %s5149
        $region72: #{tpu_custom_call.1} parent=63 // pred_fallthru
          _
      $region64: #{tpu_custom_call.1} parent=5 // pred_fallthru
        _
      %p5167 = scmp.le.s32.totalorder 2, %s21
      // Predicated region
      $region73: #{tpu_custom_call.1} parent=5 // pred_check
        %p5168 = pneg %p5167
      $region74: #{tpu_custom_call.1} parent=5 // pred_check_branch
        %5170 = sbr.rel (%p5168) target = $region76
      $region75: #{tpu_custom_call.1} parent=5 // pred_region
        %s5171 = ssub.s32 %s21, 2
        // Predicated region
        $region77: #{tpu_custom_call.1} parent=75 // pred_check
          %p5172 = pneg %p286
        $region78: #{tpu_custom_call.1} parent=75 // pred_check_branch
          %5174 = sbr.rel (%p5172) target = $region80
        $region79: #{tpu_custom_call.1} parent=75 // pred_region
          %s5175 = sand.u32 %s271, 1
          %s5176 = scalar_lea.sflag [#allocation5], %s5175
          %s5177 = sand.u32 %s271, 1
          %s5178 = smul.addr %s5177, 4
          %s5179 = scalar_lea.vmem [#allocation6], %s5178
          %5180 = dma.done %s5176, 64
        $region80: #{tpu_custom_call.1} parent=75 // pred_fallthru
          _
      $region76: #{tpu_custom_call.1} parent=5 // pred_fallthru
        _
    $region6: #{tpu_custom_call.1} parent=1 // loop_footer
      %s25 = sadd.s32 1, %s21
    $region7: #{tpu_custom_call.1} parent=1 // loop_footer_branch
      %20 = sbr.rel target = $region3
    $region8: #{tpu_custom_call.1} parent=1 // loop_exit
      _
    %5181 = vsyncpa [#allocation4], 1
    %s5182 = scalar_lea.sflag [#allocation4], 1
    %5183 = vsyncpa %s5182, 1
    %5184 = vsyncpa [#allocation5], 1
    %s5185 = scalar_lea.sflag [#allocation5], 1
    %5186 = vsyncpa %s5185, 1

</llo_original>
